<compile_context>
chip_gen: v7x
topology: tpu7x:2x2x1
jax: 0.10.0
libtpu: 0.0.40
codegen_flags: <defaults>
</compile_context>

<pallas_src>
import functools
import math

import jax
import jax.numpy as jnp
from jax.experimental import pallas as pl
from jax.experimental.pallas import tpu as pltpu

# ------------------------- config (small, synthetic) -------------------------
HIDDEN     = 32          # stands in for hidden_size = 768
N_LAYERS   = 2
N_HEADS    = 2
HEAD_DIM   = HIDDEN // N_HEADS
FFN        = 64
VOCAB      = 100
TYPE_VOCAB = 2
MAX_POS    = 16
CLASS_NUM  = 5
PAD_N      = 128         # lane-dense padded classifier output width
LN_EPS     = 1e-12
DROP_P     = 0.3         # nn.Dropout(0.3) -> identity in eval mode

# packed per-layer vector tile rows (each row = one bias/LN vector, lane-padded to 128)
_ROW_BQKV, _ROW_BO, _ROW_LN1G, _ROW_LN1B, _ROW_B1, _ROW_B2, _ROW_LN2G, _ROW_LN2B = range(8)
# packed global vector tile rows
_ROW_EMB_G, _ROW_EMB_B, _ROW_POOL_B, _ROW_CLS_B = range(4)


# ------------------------------ fused Pallas kernel -------------------------------

def _bert_fused_kernel(emb_ref, mask_ref, lvec_ref, misc_ref,
                       wqkv_ref, wo3_ref, w1_ref, w2_ref,
                       poolw_ref, clsw_ref, out_ref, *, B, S):
    """Embedding-LN + all encoder layers + pooler + classifier, fully VMEM-resident."""

    def layernorm(x, g, b):
        mu = jnp.mean(x, axis=-1, keepdims=True)
        xc = x - mu
        var = jnp.mean(xc * xc, axis=-1, keepdims=True)
        return xc * jax.lax.rsqrt(var + LN_EPS) * g + b

    # --- unpack the packed global-vector tile ---
    mv = misc_ref[...]                                   # [8, 128]
    emb_g  = mv[_ROW_EMB_G:_ROW_EMB_G + 1, :HIDDEN]
    emb_b  = mv[_ROW_EMB_B:_ROW_EMB_B + 1, :HIDDEN]
    pool_b = mv[_ROW_POOL_B:_ROW_POOL_B + 1, :HIDDEN]
    cls_b  = mv[_ROW_CLS_B:_ROW_CLS_B + 1, :PAD_N]

    # --- embedding LayerNorm ---
    x = layernorm(emb_ref[...], emb_g, emb_b)            # [B*S, H]

    # --- attention mask: broadcast ONCE for all heads and all layers ---
    # mask_ref is the additive mask [B, S] (0 for keep, -1e9 for pad).
    add = mask_ref[...]                                  # [B, S]
    mask_bss  = jnp.broadcast_to(add.reshape(B, 1, S), (B, S, S))
    mask_full = jnp.concatenate([mask_bss] * N_HEADS, axis=0)   # [NH*B, S, S]

    # --- transformer encoder layers (statically unrolled, weights indexed per layer) ---
    # TODO(synk): at real BERT depth/width, switch to a grid axis over layers with
    # Buffered(2) weight streaming instead of a full static unroll with resident weights.
    for l in range(N_LAYERS):
        lv = lvec_ref[l]                                 # [8, 128] packed per-layer vectors
        bqkv = lv[_ROW_BQKV:_ROW_BQKV + 1, :3 * HIDDEN]
        bo   = lv[_ROW_BO:_ROW_BO + 1, :HIDDEN]
        ln1g = lv[_ROW_LN1G:_ROW_LN1G + 1, :HIDDEN]
        ln1b = lv[_ROW_LN1B:_ROW_LN1B + 1, :HIDDEN]
        b1   = lv[_ROW_B1:_ROW_B1 + 1, :FFN]
        b2   = lv[_ROW_B2:_ROW_B2 + 1, :HIDDEN]
        ln2g = lv[_ROW_LN2G:_ROW_LN2G + 1, :HIDDEN]
        ln2b = lv[_ROW_LN2B:_ROW_LN2B + 1, :HIDDEN]

        # fused QKV projection: single [B*S, 3H] MXU pass.
        # (1/sqrt(head_dim) is pre-folded into the Q columns of wqkv/bqkv at init.)
        qkv = jnp.dot(x, wqkv_ref[l], preferred_element_type=jnp.float32) + bqkv
        q3 = qkv[:, 0 * HIDDEN:1 * HIDDEN].reshape(B, S, HIDDEN)
        k3 = qkv[:, 1 * HIDDEN:2 * HIDDEN].reshape(B, S, HIDDEN)
        v3 = qkv[:, 2 * HIDDEN:3 * HIDDEN].reshape(B, S, HIDDEN)

        # stack heads into the leading batch dim: [B,S,H] -> [NH*B, S, HD]
        def split_heads(t3):
            return jnp.concatenate(
                [t3[:, :, h * HEAD_DIM:(h + 1) * HEAD_DIM] for h in range(N_HEADS)],
                axis=0)
        qh, kh, vh = split_heads(q3), split_heads(k3), split_heads(v3)

        # one batched contraction for scores and one for context (all heads together)
        sc = jnp.einsum('nqd,nkd->nqk', qh, kh,
                        preferred_element_type=jnp.float32)          # [NH*B, S, S]
        sc = sc + mask_full
        sc = sc - jnp.max(sc, axis=-1, keepdims=True)
        p = jnp.exp(sc)
        p = p * pl.reciprocal(jnp.sum(p, axis=-1, keepdims=True), approx=True)
        ctx = jnp.einsum('nqk,nkd->nqd', p, vh,
                         preferred_element_type=jnp.float32)         # [NH*B, S, HD]

        # output projection: head-major weights [NH, HD, H], one batched einsum + head-sum
        # (no zeros-initialized accumulator, no minor-dim concatenation).
        ctx = ctx.reshape(N_HEADS, B * S, HEAD_DIM)                  # leading reshape, free
        y = jnp.einsum('hmd,hdo->hmo', ctx, wo3_ref[l],
                       preferred_element_type=jnp.float32)           # [NH, B*S, H]
        attn_out = jnp.sum(y, axis=0) + bo                           # [B*S, H]
        x = layernorm(attn_out + x, ln1g, ln1b)                      # residual + LN

        # feed-forward
        hdn = jnp.dot(x, w1_ref[l], preferred_element_type=jnp.float32) + b1
        # TODO(synk): PyTorch/HF BERT default is exact erf GELU; tanh approx differs ~1e-3.
        hdn = jax.nn.gelu(hdn, approximate=True)
        ffn = jnp.dot(hdn, w2_ref[l], preferred_element_type=jnp.float32) + b2
        x = layernorm(ffn + x, ln2g, ln2b)                           # residual + LN

    # --- pooler: tanh(Linear(CLS)) == output[1] of BertModel ---
    cls = x.reshape(B, S, HIDDEN)[:, 0:1, :].reshape(B, HIDDEN)      # [B, H], single slice
    pooled = jnp.tanh(jnp.dot(cls, poolw_ref[...], preferred_element_type=jnp.float32)
                      + pool_b)

    # --- self.dropout(output[1]) : identity in eval mode ---
    # TODO(synk): train-mode dropout (p=0.3) would use pltpu.prng_seed + stateful_bernoulli.

    # --- self.predict: Linear(hidden_size, class_num), lane-padded to 128 ---
    out_ref[...] = (jnp.dot(pooled, clsw_ref[...], preferred_element_type=jnp.float32)
                    + cls_b).astype(out_ref.dtype)


# -------------------------- parameters (deterministic, pre-fused layout) -----------------------

def init_params(key):
    def nrm(k, shape, std=0.02):
        return jax.random.normal(k, shape, dtype=jnp.float32) * std

    ks = jax.random.split(key, 7 + N_LAYERS)
    scale = 1.0 / math.sqrt(HEAD_DIM)

    params = {
        "word_emb": nrm(ks[0], (VOCAB, HIDDEN)),
        "pos_emb":  nrm(ks[1], (MAX_POS, HIDDEN)),
        "type_emb": nrm(ks[2], (TYPE_VOCAB, HIDDEN)),
        "pool_w":   nrm(ks[3], (HIDDEN, HIDDEN)),
    }

    # classifier (self.predict): pad to 128 output lanes for dense stores
    cls_w = nrm(ks[4], (HIDDEN, CLASS_NUM))
    params["cls_w_pad"] = (jnp.zeros((HIDDEN, PAD_N), jnp.float32)
                           .at[:, :CLASS_NUM].set(cls_w))

    # global small vectors packed into one (8, 128) tile
    misc = jnp.zeros((8, PAD_N), jnp.float32)
    misc = misc.at[_ROW_EMB_G, :HIDDEN].set(1.0)                        # emb LN gamma
    #        _ROW_EMB_B  : emb LN beta = 0
    misc = misc.at[_ROW_POOL_B, :HIDDEN].set(nrm(ks[5], (HIDDEN,)))     # pooler bias
    misc = misc.at[_ROW_CLS_B, :CLASS_NUM].set(nrm(ks[6], (CLASS_NUM,)))  # classifier bias
    params["misc_vecs"] = misc

    wqkv, wo3, w1, w2, lvecs = [], [], [], [], []
    for l in range(N_LAYERS):
        lk = jax.random.split(ks[7 + l], 10)
        # fold 1/sqrt(head_dim) into the Q projection (weights AND bias)
        wq = nrm(lk[0], (HIDDEN, HIDDEN)) * scale
        wk = nrm(lk[1], (HIDDEN, HIDDEN))
        wv = nrm(lk[2], (HIDDEN, HIDDEN))
        wqkv.append(jnp.concatenate([wq, wk, wv], axis=1))              # [H, 3H] fused QKV
        wo = nrm(lk[3], (HIDDEN, HIDDEN))
        wo3.append(wo.reshape(N_HEADS, HEAD_DIM, HIDDEN))               # head-major out-proj
        w1.append(nrm(lk[4], (HIDDEN, FFN)))
        w2.append(nrm(lk[5], (FFN, HIDDEN)))

        bqkv = nrm(lk[6], (3 * HIDDEN,))
        bqkv = bqkv.at[:HIDDEN].multiply(scale)                         # scale Q bias too

        lv = jnp.zeros((8, PAD_N), jnp.float32)
        lv = lv.at[_ROW_BQKV, :3 * HIDDEN].set(bqkv)
        lv = lv.at[_ROW_BO,   :HIDDEN].set(nrm(lk[7], (HIDDEN,)))
        lv = lv.at[_ROW_LN1G, :HIDDEN].set(1.0)
        #        _ROW_LN1B : 0
        lv = lv.at[_ROW_B1,   :FFN].set(nrm(lk[8], (FFN,)))
        lv = lv.at[_ROW_B2,   :HIDDEN].set(nrm(lk[9], (HIDDEN,)))
        lv = lv.at[_ROW_LN2G, :HIDDEN].set(1.0)
        #        _ROW_LN2B : 0
        lvecs.append(lv)

    params.update({
        "wqkv":       jnp.stack(wqkv),    # [L, H, 3H]
        "wo3":        jnp.stack(wo3),     # [L, NH, HD, H]
        "w1":         jnp.stack(w1),      # [L, H, FFN]
        "w2":         jnp.stack(w2),      # [L, FFN, H]
        "layer_vecs": jnp.stack(lvecs),   # [L, 8, 128] packed biases / LN vectors
    })
    return params


# ------------------------------- model forward --------------------------------

def model_forward(params, input_ids, attention_mask, token_type_ids):
    B, S = input_ids.shape

    # --- embeddings (gather is plain-JAX glue; everything else runs in the fused kernel) ---
    emb = (params["word_emb"][input_ids]
           + params["pos_emb"][jnp.arange(S)][None, :, :]
           + params["type_emb"][token_type_ids]).reshape(B * S, HIDDEN)   # [B*S, H]

    # additive attention mask [B, S]; broadcast happens ONCE inside the kernel
    add_mask = (1.0 - attention_mask.astype(jnp.float32)) * -1e9

    args = (emb, add_mask,
            params["layer_vecs"], params["misc_vecs"],
            params["wqkv"], params["wo3"], params["w1"], params["w2"],
            params["pool_w"], params["cls_w_pad"])

    # advisory cost estimate so XLA can schedule the surrounding gathers around the call
    ms = B * S
    per_layer_flops = (2 * ms * HIDDEN * 3 * HIDDEN               # fused QKV
                       + 2 * 2 * N_HEADS * B * S * S * HEAD_DIM   # scores + context
                       + 2 * N_HEADS * ms * HEAD_DIM * HIDDEN     # output projection
                       + 2 * 2 * ms * HIDDEN * FFN)               # FFN in + out
    flops = (N_LAYERS * per_layer_flops
             + 2 * B * HIDDEN * HIDDEN + 2 * B * HIDDEN * PAD_N)
    transcendentals = N_LAYERS * (N_HEADS * B * S * S + ms * FFN) + B * HIDDEN
    bytes_accessed = int(sum(int(a.size) * 4 for a in args) + B * PAD_N * 4)

    vmem_spec = pl.BlockSpec(memory_space=pltpu.MemorySpace.VMEM)

    logits_pad = pl.pallas_call(
        functools.partial(_bert_fused_kernel, B=B, S=S),
        out_shape=jax.ShapeDtypeStruct((B, PAD_N), jnp.float32),
        in_specs=[vmem_spec] * len(args),
        out_specs=vmem_spec,
        cost_estimate=pl.CostEstimate(flops=flops,
                                      transcendentals=transcendentals,
                                      bytes_accessed=bytes_accessed),
    )(*args)

    return logits_pad[:, :CLASS_NUM]                                      # [B, class_num]


# ------------------------------------ main ------------------------------------

if __name__ == "__main__":
    key = jax.random.PRNGKey(0)
    k_param, k_ids, k_types = jax.random.split(key, 3)

    B, S = 2, 8
    params = init_params(k_param)

    sentence = jax.random.randint(k_ids, (B, S), 0, VOCAB, dtype=jnp.int32)
    token_type_ids = jax.random.randint(k_types, (B, S), 0, TYPE_VOCAB, dtype=jnp.int32)
    # second sequence has 2 padding positions to exercise the attention mask
    attention_mask = jnp.array([[1, 1, 1, 1, 1, 1, 1, 1],
                                [1, 1, 1, 1, 1, 1, 0, 0]], dtype=jnp.int32)

    fwd = jax.jit(model_forward)
    logits = fwd(params, sentence, attention_mask, token_type_ids)
    logits = jax.block_until_ready(logits)
    assert logits.shape == (B, CLASS_NUM) and logits.dtype == jnp.float32
    assert bool(jnp.all(jnp.isfinite(logits)))
    print("KERNEL_OK")
</pallas_src>

<mosaic_0001>
module attributes {stable_mosaic.version = 11 : i64} {
  func.func @_bert_fused_kernel(%arg0: memref<16x32xf32, #tpu.memory_space<vmem>>, %arg1: memref<2x8xf32, #tpu.memory_space<vmem>>, %arg2: memref<2x8x128xf32, #tpu.memory_space<vmem>>, %arg3: memref<8x128xf32, #tpu.memory_space<vmem>>, %arg4: memref<2x32x96xf32, #tpu.memory_space<vmem>>, %arg5: memref<2x2x16x32xf32, #tpu.memory_space<vmem>>, %arg6: memref<2x32x64xf32, #tpu.memory_space<vmem>>, %arg7: memref<2x64x32xf32, #tpu.memory_space<vmem>>, %arg8: memref<32x32xf32, #tpu.memory_space<vmem>>, %arg9: memref<32x128xf32, #tpu.memory_space<vmem>>, %arg10: memref<2x128xf32, #tpu.memory_space<vmem>>) attributes {dimension_semantics = [], scalar_prefetch = 0 : i64, scratch_operands = 0 : i64, tpu.core_type = #tpu.core_type<tc>} {
    %c0 = arith.constant 0 : index
    %c0_0 = arith.constant 0 : index
    %0 = vector.load %arg3[%c0, %c0_0] : memref<8x128xf32, #tpu.memory_space<vmem>>, vector<8x128xf32>
    %1 = vector.extract_strided_slice %0 {offsets = [0, 0], sizes = [1, 32], strides = [1, 1]} : vector<8x128xf32> to vector<1x32xf32>
    %2 = vector.extract_strided_slice %0 {offsets = [1, 0], sizes = [1, 32], strides = [1, 1]} : vector<8x128xf32> to vector<1x32xf32>
    %3 = vector.extract_strided_slice %0 {offsets = [2, 0], sizes = [1, 32], strides = [1, 1]} : vector<8x128xf32> to vector<1x32xf32>
    %4 = vector.extract_strided_slice %0 {offsets = [3, 0], sizes = [1, 128], strides = [1, 1]} : vector<8x128xf32> to vector<1x128xf32>
    %c0_1 = arith.constant 0 : index
    %c0_2 = arith.constant 0 : index
    %5 = vector.load %arg0[%c0_1, %c0_2] : memref<16x32xf32, #tpu.memory_space<vmem>>, vector<16x32xf32>
    %cst = arith.constant dense<0.000000e+00> : vector<16xf32>
    %6 = vector.multi_reduction <add>, %5, %cst [1] : vector<16x32xf32> to vector<16xf32>
    %7 = vector.shape_cast %6 : vector<16xf32> to vector<16x1xf32>
    %cst_3 = arith.constant 3.200000e+01 : f32
    %8 = vector.broadcast %cst_3 : f32 to vector<16x1xf32>
    %9 = arith.divf %7, %8 : vector<16x1xf32>
    %10 = vector.broadcast %9 : vector<16x1xf32> to vector<16x32xf32>
    %11 = arith.subf %5, %10 : vector<16x32xf32>
    %12 = arith.mulf %11, %11 : vector<16x32xf32>
    %cst_4 = arith.constant dense<0.000000e+00> : vector<16xf32>
    %13 = vector.multi_reduction <add>, %12, %cst_4 [1] : vector<16x32xf32> to vector<16xf32>
    %14 = vector.shape_cast %13 : vector<16xf32> to vector<16x1xf32>
    %cst_5 = arith.constant 3.200000e+01 : f32
    %15 = vector.broadcast %cst_5 : f32 to vector<16x1xf32>
    %16 = arith.divf %14, %15 : vector<16x1xf32>
    %cst_6 = arith.constant 9.99999996E-13 : f32
    %17 = vector.broadcast %cst_6 : f32 to vector<16x1xf32>
    %18 = arith.addf %16, %17 : vector<16x1xf32>
    %19 = math.rsqrt %18 : vector<16x1xf32>
    %20 = vector.broadcast %19 : vector<16x1xf32> to vector<16x32xf32>
    %21 = arith.mulf %11, %20 : vector<16x32xf32>
    %22 = vector.broadcast %1 : vector<1x32xf32> to vector<16x32xf32>
    %23 = arith.mulf %21, %22 : vector<16x32xf32>
    %24 = vector.broadcast %2 : vector<1x32xf32> to vector<16x32xf32>
    %25 = arith.addf %23, %24 : vector<16x32xf32>
    %c0_7 = arith.constant 0 : index
    %c0_8 = arith.constant 0 : index
    %26 = vector.load %arg1[%c0_7, %c0_8] : memref<2x8xf32, #tpu.memory_space<vmem>>, vector<2x8xf32>
    %27 = vector.shape_cast %26 : vector<2x8xf32> to vector<2x1x8xf32>
    %28 = vector.shape_cast %27 : vector<2x1x8xf32> to vector<2x1x8xf32>
    %29 = vector.broadcast %28 : vector<2x1x8xf32> to vector<2x8x8xf32>
    %30 = tpu.concatenate %29, %29 in 0 : vector<2x8x8xf32>, vector<2x8x8xf32> -> vector<4x8x8xf32>
    %c0_9 = arith.constant 0 : index
    %c0_10 = arith.constant 0 : index
    %c0_11 = arith.constant 0 : index
    %31 = vector.load %arg2[%c0_9, %c0_10, %c0_11] : memref<2x8x128xf32, #tpu.memory_space<vmem>>, vector<1x8x128xf32>
    %32 = vector.shape_cast %31 : vector<1x8x128xf32> to vector<8x128xf32>
    %33 = vector.extract_strided_slice %32 {offsets = [0, 0], sizes = [1, 96], strides = [1, 1]} : vector<8x128xf32> to vector<1x96xf32>
    %34 = vector.extract_strided_slice %32 {offsets = [1, 0], sizes = [1, 32], strides = [1, 1]} : vector<8x128xf32> to vector<1x32xf32>
    %35 = vector.extract_strided_slice %32 {offsets = [2, 0], sizes = [1, 32], strides = [1, 1]} : vector<8x128xf32> to vector<1x32xf32>
    %36 = vector.extract_strided_slice %32 {offsets = [3, 0], sizes = [1, 32], strides = [1, 1]} : vector<8x128xf32> to vector<1x32xf32>
    %37 = vector.extract_strided_slice %32 {offsets = [4, 0], sizes = [1, 64], strides = [1, 1]} : vector<8x128xf32> to vector<1x64xf32>
    %38 = vector.extract_strided_slice %32 {offsets = [5, 0], sizes = [1, 32], strides = [1, 1]} : vector<8x128xf32> to vector<1x32xf32>
    %39 = vector.extract_strided_slice %32 {offsets = [6, 0], sizes = [1, 32], strides = [1, 1]} : vector<8x128xf32> to vector<1x32xf32>
    %40 = vector.extract_strided_slice %32 {offsets = [7, 0], sizes = [1, 32], strides = [1, 1]} : vector<8x128xf32> to vector<1x32xf32>
    %c0_12 = arith.constant 0 : index
    %c0_13 = arith.constant 0 : index
    %c0_14 = arith.constant 0 : index
    %41 = vector.load %arg4[%c0_12, %c0_13, %c0_14] : memref<2x32x96xf32, #tpu.memory_space<vmem>>, vector<1x32x96xf32>
    %42 = vector.shape_cast %41 : vector<1x32x96xf32> to vector<32x96xf32>
    %cst_15 = arith.constant dense<0.000000e+00> : vector<16x96xf32>
    %43 = tpu.matmul %25, %42, %cst_15 {dimension_numbers = #tpu.dot_dimension_numbers<[1], [0], [0], [1], [0, 0, 1, 1], [], []>} : vector<16x32xf32>, vector<32x96xf32>, vector<16x96xf32> -> vector<16x96xf32>
    %44 = vector.broadcast %33 : vector<1x96xf32> to vector<16x96xf32>
    %45 = arith.addf %43, %44 : vector<16x96xf32>
    %46 = vector.extract_strided_slice %45 {offsets = [0, 0], sizes = [16, 32], strides = [1, 1]} : vector<16x96xf32> to vector<16x32xf32>
    %47 = vector.shape_cast %46 : vector<16x32xf32> to vector<2x8x32xf32>
    %48 = vector.extract_strided_slice %45 {offsets = [0, 32], sizes = [16, 32], strides = [1, 1]} : vector<16x96xf32> to vector<16x32xf32>
    %49 = vector.shape_cast %48 : vector<16x32xf32> to vector<2x8x32xf32>
    %50 = vector.extract_strided_slice %45 {offsets = [0, 64], sizes = [16, 32], strides = [1, 1]} : vector<16x96xf32> to vector<16x32xf32>
    %51 = vector.shape_cast %50 : vector<16x32xf32> to vector<2x8x32xf32>
    %52 = vector.extract_strided_slice %47 {offsets = [0, 0, 0], sizes = [2, 8, 16], strides = [1, 1, 1]} : vector<2x8x32xf32> to vector<2x8x16xf32>
    %53 = vector.extract_strided_slice %47 {offsets = [0, 0, 16], sizes = [2, 8, 16], strides = [1, 1, 1]} : vector<2x8x32xf32> to vector<2x8x16xf32>
    %54 = tpu.concatenate %52, %53 in 0 : vector<2x8x16xf32>, vector<2x8x16xf32> -> vector<4x8x16xf32>
    %55 = vector.extract_strided_slice %49 {offsets = [0, 0, 0], sizes = [2, 8, 16], strides = [1, 1, 1]} : vector<2x8x32xf32> to vector<2x8x16xf32>
    %56 = vector.extract_strided_slice %49 {offsets = [0, 0, 16], sizes = [2, 8, 16], strides = [1, 1, 1]} : vector<2x8x32xf32> to vector<2x8x16xf32>
    %57 = tpu.concatenate %55, %56 in 0 : vector<2x8x16xf32>, vector<2x8x16xf32> -> vector<4x8x16xf32>
    %58 = vector.extract_strided_slice %51 {offsets = [0, 0, 0], sizes = [2, 8, 16], strides = [1, 1, 1]} : vector<2x8x32xf32> to vector<2x8x16xf32>
    %59 = vector.extract_strided_slice %51 {offsets = [0, 0, 16], sizes = [2, 8, 16], strides = [1, 1, 1]} : vector<2x8x32xf32> to vector<2x8x16xf32>
    %60 = tpu.concatenate %58, %59 in 0 : vector<2x8x16xf32>, vector<2x8x16xf32> -> vector<4x8x16xf32>
    "tpu.trace_start"() <{level = 10 : i32, message = "nqd,nkd->nqk"}> : () -> ()
    %cst_16 = arith.constant dense<0.000000e+00> : vector<4x8x8xf32>
    %61 = tpu.matmul %54, %57, %cst_16 {dimension_numbers = #tpu.dot_dimension_numbers<[2], [2], [1], [1], [0, 0, 0, 1, 1, 1], [0], [0]>} : vector<4x8x16xf32>, vector<4x8x16xf32>, vector<4x8x8xf32> -> vector<4x8x8xf32>
    "tpu.trace_stop"() : () -> ()
    %62 = arith.addf %61, %30 : vector<4x8x8xf32>
    %cst_17 = arith.constant dense<0xFF800000> : vector<4x8xf32>
    %63 = vector.multi_reduction <maximumf>, %62, %cst_17 [2] : vector<4x8x8xf32> to vector<4x8xf32>
    %64 = vector.shape_cast %63 : vector<4x8xf32> to vector<4x8x1xf32>
    %65 = vector.broadcast %64 : vector<4x8x1xf32> to vector<4x8x8xf32>
    %66 = arith.subf %62, %65 : vector<4x8x8xf32>
    %67 = math.exp %66 : vector<4x8x8xf32>
    %cst_18 = arith.constant dense<0.000000e+00> : vector<4x8xf32>
    %68 = vector.multi_reduction <add>, %67, %cst_18 [2] : vector<4x8x8xf32> to vector<4x8xf32>
    %69 = vector.shape_cast %68 : vector<4x8xf32> to vector<4x8x1xf32>
    %70 = tpu.reciprocal %69 {approx = true} : vector<4x8x1xf32> -> vector<4x8x1xf32>
    %71 = vector.broadcast %70 : vector<4x8x1xf32> to vector<4x8x8xf32>
    %72 = arith.mulf %67, %71 : vector<4x8x8xf32>
    "tpu.trace_start"() <{level = 10 : i32, message = "nqk,nkd->nqd"}> : () -> ()
    %cst_19 = arith.constant dense<0.000000e+00> : vector<4x8x16xf32>
    %73 = tpu.matmul %72, %60, %cst_19 {dimension_numbers = #tpu.dot_dimension_numbers<[2], [1], [1], [2], [0, 0, 0, 1, 1, 2], [0], [0]>} : vector<4x8x8xf32>, vector<4x8x16xf32>, vector<4x8x16xf32> -> vector<4x8x16xf32>
    "tpu.trace_stop"() : () -> ()
    %74 = vector.shape_cast %73 : vector<4x8x16xf32> to vector<2x16x16xf32>
    %c0_20 = arith.constant 0 : index
    %c0_21 = arith.constant 0 : index
    %c0_22 = arith.constant 0 : index
    %c0_23 = arith.constant 0 : index
    %75 = vector.load %arg5[%c0_20, %c0_21, %c0_22, %c0_23] : memref<2x2x16x32xf32, #tpu.memory_space<vmem>>, vector<1x2x16x32xf32>
    %76 = vector.shape_cast %75 : vector<1x2x16x32xf32> to vector<2x16x32xf32>
    "tpu.trace_start"() <{level = 10 : i32, message = "hmd,hdo->hmo"}> : () -> ()
    %cst_24 = arith.constant dense<0.000000e+00> : vector<2x16x32xf32>
    %77 = tpu.matmul %74, %76, %cst_24 {dimension_numbers = #tpu.dot_dimension_numbers<[2], [1], [1], [2], [0, 0, 0, 1, 1, 2], [0], [0]>} : vector<2x16x16xf32>, vector<2x16x32xf32>, vector<2x16x32xf32> -> vector<2x16x32xf32>
    "tpu.trace_stop"() : () -> ()
    %cst_25 = arith.constant dense<0.000000e+00> : vector<16x32xf32>
    %78 = vector.multi_reduction <add>, %77, %cst_25 [0] : vector<2x16x32xf32> to vector<16x32xf32>
    %79 = vector.broadcast %34 : vector<1x32xf32> to vector<16x32xf32>
    %80 = arith.addf %78, %79 : vector<16x32xf32>
    %81 = arith.addf %80, %25 : vector<16x32xf32>
    %cst_26 = arith.constant dense<0.000000e+00> : vector<16xf32>
    %82 = vector.multi_reduction <add>, %81, %cst_26 [1] : vector<16x32xf32> to vector<16xf32>
    %83 = vector.shape_cast %82 : vector<16xf32> to vector<16x1xf32>
    %cst_27 = arith.constant 3.200000e+01 : f32
    %84 = vector.broadcast %cst_27 : f32 to vector<16x1xf32>
    %85 = arith.divf %83, %84 : vector<16x1xf32>
    %86 = vector.broadcast %85 : vector<16x1xf32> to vector<16x32xf32>
    %87 = arith.subf %81, %86 : vector<16x32xf32>
    %88 = arith.mulf %87, %87 : vector<16x32xf32>
    %cst_28 = arith.constant dense<0.000000e+00> : vector<16xf32>
    %89 = vector.multi_reduction <add>, %88, %cst_28 [1] : vector<16x32xf32> to vector<16xf32>
    %90 = vector.shape_cast %89 : vector<16xf32> to vector<16x1xf32>
    %cst_29 = arith.constant 3.200000e+01 : f32
    %91 = vector.broadcast %cst_29 : f32 to vector<16x1xf32>
    %92 = arith.divf %90, %91 : vector<16x1xf32>
    %cst_30 = arith.constant 9.99999996E-13 : f32
    %93 = vector.broadcast %cst_30 : f32 to vector<16x1xf32>
    %94 = arith.addf %92, %93 : vector<16x1xf32>
    %95 = math.rsqrt %94 : vector<16x1xf32>
    %96 = vector.broadcast %95 : vector<16x1xf32> to vector<16x32xf32>
    %97 = arith.mulf %87, %96 : vector<16x32xf32>
    %98 = vector.broadcast %35 : vector<1x32xf32> to vector<16x32xf32>
    %99 = arith.mulf %97, %98 : vector<16x32xf32>
    %100 = vector.broadcast %36 : vector<1x32xf32> to vector<16x32xf32>
    %101 = arith.addf %99, %100 : vector<16x32xf32>
    %c0_31 = arith.constant 0 : index
    %c0_32 = arith.constant 0 : index
    %c0_33 = arith.constant 0 : index
    %102 = vector.load %arg6[%c0_31, %c0_32, %c0_33] : memref<2x32x64xf32, #tpu.memory_space<vmem>>, vector<1x32x64xf32>
    %103 = vector.shape_cast %102 : vector<1x32x64xf32> to vector<32x64xf32>
    %cst_34 = arith.constant dense<0.000000e+00> : vector<16x64xf32>
    %104 = tpu.matmul %101, %103, %cst_34 {dimension_numbers = #tpu.dot_dimension_numbers<[1], [0], [0], [1], [0, 0, 1, 1], [], []>} : vector<16x32xf32>, vector<32x64xf32>, vector<16x64xf32> -> vector<16x64xf32>
    %105 = vector.broadcast %37 : vector<1x64xf32> to vector<16x64xf32>
    %106 = arith.addf %104, %105 : vector<16x64xf32>
    %107 = arith.mulf %106, %106 : vector<16x64xf32>
    %108 = arith.mulf %106, %107 : vector<16x64xf32>
    %cst_35 = arith.constant 4.471500e-02 : f32
    %109 = vector.broadcast %cst_35 : f32 to vector<16x64xf32>
    %110 = arith.mulf %109, %108 : vector<16x64xf32>
    %111 = arith.addf %106, %110 : vector<16x64xf32>
    %cst_36 = arith.constant 0.797884583 : f32
    %112 = vector.broadcast %cst_36 : f32 to vector<16x64xf32>
    %113 = arith.mulf %112, %111 : vector<16x64xf32>
    %114 = math.tanh %113 : vector<16x64xf32>
    %cst_37 = arith.constant 1.000000e+00 : f32
    %115 = vector.broadcast %cst_37 : f32 to vector<16x64xf32>
    %116 = arith.addf %115, %114 : vector<16x64xf32>
    %cst_38 = arith.constant 5.000000e-01 : f32
    %117 = vector.broadcast %cst_38 : f32 to vector<16x64xf32>
    %118 = arith.mulf %117, %116 : vector<16x64xf32>
    %119 = arith.mulf %106, %118 : vector<16x64xf32>
    %c0_39 = arith.constant 0 : index
    %c0_40 = arith.constant 0 : index
    %c0_41 = arith.constant 0 : index
    %120 = vector.load %arg7[%c0_39, %c0_40, %c0_41] : memref<2x64x32xf32, #tpu.memory_space<vmem>>, vector<1x64x32xf32>
    %121 = vector.shape_cast %120 : vector<1x64x32xf32> to vector<64x32xf32>
    %cst_42 = arith.constant dense<0.000000e+00> : vector<16x32xf32>
    %122 = tpu.matmul %119, %121, %cst_42 {dimension_numbers = #tpu.dot_dimension_numbers<[1], [0], [0], [1], [0, 0, 1, 1], [], []>} : vector<16x64xf32>, vector<64x32xf32>, vector<16x32xf32> -> vector<16x32xf32>
    %123 = vector.broadcast %38 : vector<1x32xf32> to vector<16x32xf32>
    %124 = arith.addf %122, %123 : vector<16x32xf32>
    %125 = arith.addf %124, %101 : vector<16x32xf32>
    %cst_43 = arith.constant dense<0.000000e+00> : vector<16xf32>
    %126 = vector.multi_reduction <add>, %125, %cst_43 [1] : vector<16x32xf32> to vector<16xf32>
    %127 = vector.shape_cast %126 : vector<16xf32> to vector<16x1xf32>
    %cst_44 = arith.constant 3.200000e+01 : f32
    %128 = vector.broadcast %cst_44 : f32 to vector<16x1xf32>
    %129 = arith.divf %127, %128 : vector<16x1xf32>
    %130 = vector.broadcast %129 : vector<16x1xf32> to vector<16x32xf32>
    %131 = arith.subf %125, %130 : vector<16x32xf32>
    %132 = arith.mulf %131, %131 : vector<16x32xf32>
    %cst_45 = arith.constant dense<0.000000e+00> : vector<16xf32>
    %133 = vector.multi_reduction <add>, %132, %cst_45 [1] : vector<16x32xf32> to vector<16xf32>
    %134 = vector.shape_cast %133 : vector<16xf32> to vector<16x1xf32>
    %cst_46 = arith.constant 3.200000e+01 : f32
    %135 = vector.broadcast %cst_46 : f32 to vector<16x1xf32>
    %136 = arith.divf %134, %135 : vector<16x1xf32>
    %cst_47 = arith.constant 9.99999996E-13 : f32
    %137 = vector.broadcast %cst_47 : f32 to vector<16x1xf32>
    %138 = arith.addf %136, %137 : vector<16x1xf32>
    %139 = math.rsqrt %138 : vector<16x1xf32>
    %140 = vector.broadcast %139 : vector<16x1xf32> to vector<16x32xf32>
    %141 = arith.mulf %131, %140 : vector<16x32xf32>
    %142 = vector.broadcast %39 : vector<1x32xf32> to vector<16x32xf32>
    %143 = arith.mulf %141, %142 : vector<16x32xf32>
    %144 = vector.broadcast %40 : vector<1x32xf32> to vector<16x32xf32>
    %145 = arith.addf %143, %144 : vector<16x32xf32>
    %c1 = arith.constant 1 : index
    %c0_48 = arith.constant 0 : index
    %c0_49 = arith.constant 0 : index
    %146 = vector.load %arg2[%c1, %c0_48, %c0_49] : memref<2x8x128xf32, #tpu.memory_space<vmem>>, vector<1x8x128xf32>
    %147 = vector.shape_cast %146 : vector<1x8x128xf32> to vector<8x128xf32>
    %148 = vector.extract_strided_slice %147 {offsets = [0, 0], sizes = [1, 96], strides = [1, 1]} : vector<8x128xf32> to vector<1x96xf32>
    %149 = vector.extract_strided_slice %147 {offsets = [1, 0], sizes = [1, 32], strides = [1, 1]} : vector<8x128xf32> to vector<1x32xf32>
    %150 = vector.extract_strided_slice %147 {offsets = [2, 0], sizes = [1, 32], strides = [1, 1]} : vector<8x128xf32> to vector<1x32xf32>
    %151 = vector.extract_strided_slice %147 {offsets = [3, 0], sizes = [1, 32], strides = [1, 1]} : vector<8x128xf32> to vector<1x32xf32>
    %152 = vector.extract_strided_slice %147 {offsets = [4, 0], sizes = [1, 64], strides = [1, 1]} : vector<8x128xf32> to vector<1x64xf32>
    %153 = vector.extract_strided_slice %147 {offsets = [5, 0], sizes = [1, 32], strides = [1, 1]} : vector<8x128xf32> to vector<1x32xf32>
    %154 = vector.extract_strided_slice %147 {offsets = [6, 0], sizes = [1, 32], strides = [1, 1]} : vector<8x128xf32> to vector<1x32xf32>
    %155 = vector.extract_strided_slice %147 {offsets = [7, 0], sizes = [1, 32], strides = [1, 1]} : vector<8x128xf32> to vector<1x32xf32>
    %c1_50 = arith.constant 1 : index
    %c0_51 = arith.constant 0 : index
    %c0_52 = arith.constant 0 : index
    %156 = vector.load %arg4[%c1_50, %c0_51, %c0_52] : memref<2x32x96xf32, #tpu.memory_space<vmem>>, vector<1x32x96xf32>
    %157 = vector.shape_cast %156 : vector<1x32x96xf32> to vector<32x96xf32>
    %cst_53 = arith.constant dense<0.000000e+00> : vector<16x96xf32>
    %158 = tpu.matmul %145, %157, %cst_53 {dimension_numbers = #tpu.dot_dimension_numbers<[1], [0], [0], [1], [0, 0, 1, 1], [], []>} : vector<16x32xf32>, vector<32x96xf32>, vector<16x96xf32> -> vector<16x96xf32>
    %159 = vector.broadcast %148 : vector<1x96xf32> to vector<16x96xf32>
    %160 = arith.addf %158, %159 : vector<16x96xf32>
    %161 = vector.extract_strided_slice %160 {offsets = [0, 0], sizes = [16, 32], strides = [1, 1]} : vector<16x96xf32> to vector<16x32xf32>
    %162 = vector.shape_cast %161 : vector<16x32xf32> to vector<2x8x32xf32>
    %163 = vector.extract_strided_slice %160 {offsets = [0, 32], sizes = [16, 32], strides = [1, 1]} : vector<16x96xf32> to vector<16x32xf32>
    %164 = vector.shape_cast %163 : vector<16x32xf32> to vector<2x8x32xf32>
    %165 = vector.extract_strided_slice %160 {offsets = [0, 64], sizes = [16, 32], strides = [1, 1]} : vector<16x96xf32> to vector<16x32xf32>
    %166 = vector.shape_cast %165 : vector<16x32xf32> to vector<2x8x32xf32>
    %167 = vector.extract_strided_slice %162 {offsets = [0, 0, 0], sizes = [2, 8, 16], strides = [1, 1, 1]} : vector<2x8x32xf32> to vector<2x8x16xf32>
    %168 = vector.extract_strided_slice %162 {offsets = [0, 0, 16], sizes = [2, 8, 16], strides = [1, 1, 1]} : vector<2x8x32xf32> to vector<2x8x16xf32>
    %169 = tpu.concatenate %167, %168 in 0 : vector<2x8x16xf32>, vector<2x8x16xf32> -> vector<4x8x16xf32>
    %170 = vector.extract_strided_slice %164 {offsets = [0, 0, 0], sizes = [2, 8, 16], strides = [1, 1, 1]} : vector<2x8x32xf32> to vector<2x8x16xf32>
    %171 = vector.extract_strided_slice %164 {offsets = [0, 0, 16], sizes = [2, 8, 16], strides = [1, 1, 1]} : vector<2x8x32xf32> to vector<2x8x16xf32>
    %172 = tpu.concatenate %170, %171 in 0 : vector<2x8x16xf32>, vector<2x8x16xf32> -> vector<4x8x16xf32>
    %173 = vector.extract_strided_slice %166 {offsets = [0, 0, 0], sizes = [2, 8, 16], strides = [1, 1, 1]} : vector<2x8x32xf32> to vector<2x8x16xf32>
    %174 = vector.extract_strided_slice %166 {offsets = [0, 0, 16], sizes = [2, 8, 16], strides = [1, 1, 1]} : vector<2x8x32xf32> to vector<2x8x16xf32>
    %175 = tpu.concatenate %173, %174 in 0 : vector<2x8x16xf32>, vector<2x8x16xf32> -> vector<4x8x16xf32>
    "tpu.trace_start"() <{level = 10 : i32, message = "nqd,nkd->nqk"}> : () -> ()
    %cst_54 = arith.constant dense<0.000000e+00> : vector<4x8x8xf32>
    %176 = tpu.matmul %169, %172, %cst_54 {dimension_numbers = #tpu.dot_dimension_numbers<[2], [2], [1], [1], [0, 0, 0, 1, 1, 1], [0], [0]>} : vector<4x8x16xf32>, vector<4x8x16xf32>, vector<4x8x8xf32> -> vector<4x8x8xf32>
    "tpu.trace_stop"() : () -> ()
    %177 = arith.addf %176, %30 : vector<4x8x8xf32>
    %cst_55 = arith.constant dense<0xFF800000> : vector<4x8xf32>
    %178 = vector.multi_reduction <maximumf>, %177, %cst_55 [2] : vector<4x8x8xf32> to vector<4x8xf32>
    %179 = vector.shape_cast %178 : vector<4x8xf32> to vector<4x8x1xf32>
    %180 = vector.broadcast %179 : vector<4x8x1xf32> to vector<4x8x8xf32>
    %181 = arith.subf %177, %180 : vector<4x8x8xf32>
    %182 = math.exp %181 : vector<4x8x8xf32>
    %cst_56 = arith.constant dense<0.000000e+00> : vector<4x8xf32>
    %183 = vector.multi_reduction <add>, %182, %cst_56 [2] : vector<4x8x8xf32> to vector<4x8xf32>
    %184 = vector.shape_cast %183 : vector<4x8xf32> to vector<4x8x1xf32>
    %185 = tpu.reciprocal %184 {approx = true} : vector<4x8x1xf32> -> vector<4x8x1xf32>
    %186 = vector.broadcast %185 : vector<4x8x1xf32> to vector<4x8x8xf32>
    %187 = arith.mulf %182, %186 : vector<4x8x8xf32>
    "tpu.trace_start"() <{level = 10 : i32, message = "nqk,nkd->nqd"}> : () -> ()
    %cst_57 = arith.constant dense<0.000000e+00> : vector<4x8x16xf32>
    %188 = tpu.matmul %187, %175, %cst_57 {dimension_numbers = #tpu.dot_dimension_numbers<[2], [1], [1], [2], [0, 0, 0, 1, 1, 2], [0], [0]>} : vector<4x8x8xf32>, vector<4x8x16xf32>, vector<4x8x16xf32> -> vector<4x8x16xf32>
    "tpu.trace_stop"() : () -> ()
    %189 = vector.shape_cast %188 : vector<4x8x16xf32> to vector<2x16x16xf32>
    %c1_58 = arith.constant 1 : index
    %c0_59 = arith.constant 0 : index
    %c0_60 = arith.constant 0 : index
    %c0_61 = arith.constant 0 : index
    %190 = vector.load %arg5[%c1_58, %c0_59, %c0_60, %c0_61] : memref<2x2x16x32xf32, #tpu.memory_space<vmem>>, vector<1x2x16x32xf32>
    %191 = vector.shape_cast %190 : vector<1x2x16x32xf32> to vector<2x16x32xf32>
    "tpu.trace_start"() <{level = 10 : i32, message = "hmd,hdo->hmo"}> : () -> ()
    %cst_62 = arith.constant dense<0.000000e+00> : vector<2x16x32xf32>
    %192 = tpu.matmul %189, %191, %cst_62 {dimension_numbers = #tpu.dot_dimension_numbers<[2], [1], [1], [2], [0, 0, 0, 1, 1, 2], [0], [0]>} : vector<2x16x16xf32>, vector<2x16x32xf32>, vector<2x16x32xf32> -> vector<2x16x32xf32>
    "tpu.trace_stop"() : () -> ()
    %cst_63 = arith.constant dense<0.000000e+00> : vector<16x32xf32>
    %193 = vector.multi_reduction <add>, %192, %cst_63 [0] : vector<2x16x32xf32> to vector<16x32xf32>
    %194 = vector.broadcast %149 : vector<1x32xf32> to vector<16x32xf32>
    %195 = arith.addf %193, %194 : vector<16x32xf32>
    %196 = arith.addf %195, %145 : vector<16x32xf32>
    %cst_64 = arith.constant dense<0.000000e+00> : vector<16xf32>
    %197 = vector.multi_reduction <add>, %196, %cst_64 [1] : vector<16x32xf32> to vector<16xf32>
    %198 = vector.shape_cast %197 : vector<16xf32> to vector<16x1xf32>
    %cst_65 = arith.constant 3.200000e+01 : f32
    %199 = vector.broadcast %cst_65 : f32 to vector<16x1xf32>
    %200 = arith.divf %198, %199 : vector<16x1xf32>
    %201 = vector.broadcast %200 : vector<16x1xf32> to vector<16x32xf32>
    %202 = arith.subf %196, %201 : vector<16x32xf32>
    %203 = arith.mulf %202, %202 : vector<16x32xf32>
    %cst_66 = arith.constant dense<0.000000e+00> : vector<16xf32>
    %204 = vector.multi_reduction <add>, %203, %cst_66 [1] : vector<16x32xf32> to vector<16xf32>
    %205 = vector.shape_cast %204 : vector<16xf32> to vector<16x1xf32>
    %cst_67 = arith.constant 3.200000e+01 : f32
    %206 = vector.broadcast %cst_67 : f32 to vector<16x1xf32>
    %207 = arith.divf %205, %206 : vector<16x1xf32>
    %cst_68 = arith.constant 9.99999996E-13 : f32
    %208 = vector.broadcast %cst_68 : f32 to vector<16x1xf32>
    %209 = arith.addf %207, %208 : vector<16x1xf32>
    %210 = math.rsqrt %209 : vector<16x1xf32>
    %211 = vector.broadcast %210 : vector<16x1xf32> to vector<16x32xf32>
    %212 = arith.mulf %202, %211 : vector<16x32xf32>
    %213 = vector.broadcast %150 : vector<1x32xf32> to vector<16x32xf32>
    %214 = arith.mulf %212, %213 : vector<16x32xf32>
    %215 = vector.broadcast %151 : vector<1x32xf32> to vector<16x32xf32>
    %216 = arith.addf %214, %215 : vector<16x32xf32>
    %c1_69 = arith.constant 1 : index
    %c0_70 = arith.constant 0 : index
    %c0_71 = arith.constant 0 : index
    %217 = vector.load %arg6[%c1_69, %c0_70, %c0_71] : memref<2x32x64xf32, #tpu.memory_space<vmem>>, vector<1x32x64xf32>
    %218 = vector.shape_cast %217 : vector<1x32x64xf32> to vector<32x64xf32>
    %cst_72 = arith.constant dense<0.000000e+00> : vector<16x64xf32>
    %219 = tpu.matmul %216, %218, %cst_72 {dimension_numbers = #tpu.dot_dimension_numbers<[1], [0], [0], [1], [0, 0, 1, 1], [], []>} : vector<16x32xf32>, vector<32x64xf32>, vector<16x64xf32> -> vector<16x64xf32>
    %220 = vector.broadcast %152 : vector<1x64xf32> to vector<16x64xf32>
    %221 = arith.addf %219, %220 : vector<16x64xf32>
    %222 = arith.mulf %221, %221 : vector<16x64xf32>
    %223 = arith.mulf %221, %222 : vector<16x64xf32>
    %cst_73 = arith.constant 4.471500e-02 : f32
    %224 = vector.broadcast %cst_73 : f32 to vector<16x64xf32>
    %225 = arith.mulf %224, %223 : vector<16x64xf32>
    %226 = arith.addf %221, %225 : vector<16x64xf32>
    %cst_74 = arith.constant 0.797884583 : f32
    %227 = vector.broadcast %cst_74 : f32 to vector<16x64xf32>
    %228 = arith.mulf %227, %226 : vector<16x64xf32>
    %229 = math.tanh %228 : vector<16x64xf32>
    %cst_75 = arith.constant 1.000000e+00 : f32
    %230 = vector.broadcast %cst_75 : f32 to vector<16x64xf32>
    %231 = arith.addf %230, %229 : vector<16x64xf32>
    %cst_76 = arith.constant 5.000000e-01 : f32
    %232 = vector.broadcast %cst_76 : f32 to vector<16x64xf32>
    %233 = arith.mulf %232, %231 : vector<16x64xf32>
    %234 = arith.mulf %221, %233 : vector<16x64xf32>
    %c1_77 = arith.constant 1 : index
    %c0_78 = arith.constant 0 : index
    %c0_79 = arith.constant 0 : index
    %235 = vector.load %arg7[%c1_77, %c0_78, %c0_79] : memref<2x64x32xf32, #tpu.memory_space<vmem>>, vector<1x64x32xf32>
    %236 = vector.shape_cast %235 : vector<1x64x32xf32> to vector<64x32xf32>
    %cst_80 = arith.constant dense<0.000000e+00> : vector<16x32xf32>
    %237 = tpu.matmul %234, %236, %cst_80 {dimension_numbers = #tpu.dot_dimension_numbers<[1], [0], [0], [1], [0, 0, 1, 1], [], []>} : vector<16x64xf32>, vector<64x32xf32>, vector<16x32xf32> -> vector<16x32xf32>
    %238 = vector.broadcast %153 : vector<1x32xf32> to vector<16x32xf32>
    %239 = arith.addf %237, %238 : vector<16x32xf32>
    %240 = arith.addf %239, %216 : vector<16x32xf32>
    %cst_81 = arith.constant dense<0.000000e+00> : vector<16xf32>
    %241 = vector.multi_reduction <add>, %240, %cst_81 [1] : vector<16x32xf32> to vector<16xf32>
    %242 = vector.shape_cast %241 : vector<16xf32> to vector<16x1xf32>
    %cst_82 = arith.constant 3.200000e+01 : f32
    %243 = vector.broadcast %cst_82 : f32 to vector<16x1xf32>
    %244 = arith.divf %242, %243 : vector<16x1xf32>
    %245 = vector.broadcast %244 : vector<16x1xf32> to vector<16x32xf32>
    %246 = arith.subf %240, %245 : vector<16x32xf32>
    %247 = arith.mulf %246, %246 : vector<16x32xf32>
    %cst_83 = arith.constant dense<0.000000e+00> : vector<16xf32>
    %248 = vector.multi_reduction <add>, %247, %cst_83 [1] : vector<16x32xf32> to vector<16xf32>
    %249 = vector.shape_cast %248 : vector<16xf32> to vector<16x1xf32>
    %cst_84 = arith.constant 3.200000e+01 : f32
    %250 = vector.broadcast %cst_84 : f32 to vector<16x1xf32>
    %251 = arith.divf %249, %250 : vector<16x1xf32>
    %cst_85 = arith.constant 9.99999996E-13 : f32
    %252 = vector.broadcast %cst_85 : f32 to vector<16x1xf32>
    %253 = arith.addf %251, %252 : vector<16x1xf32>
    %254 = math.rsqrt %253 : vector<16x1xf32>
    %255 = vector.broadcast %254 : vector<16x1xf32> to vector<16x32xf32>
    %256 = arith.mulf %246, %255 : vector<16x32xf32>
    %257 = vector.broadcast %154 : vector<1x32xf32> to vector<16x32xf32>
    %258 = arith.mulf %256, %257 : vector<16x32xf32>
    %259 = vector.broadcast %155 : vector<1x32xf32> to vector<16x32xf32>
    %260 = arith.addf %258, %259 : vector<16x32xf32>
    %261 = vector.shape_cast %260 : vector<16x32xf32> to vector<2x8x32xf32>
    %262 = vector.extract_strided_slice %261 {offsets = [0, 0, 0], sizes = [2, 1, 32], strides = [1, 1, 1]} : vector<2x8x32xf32> to vector<2x1x32xf32>
    %263 = vector.shape_cast %262 : vector<2x1x32xf32> to vector<2x32xf32>
    %c0_86 = arith.constant 0 : index
    %c0_87 = arith.constant 0 : index
    %264 = vector.load %arg8[%c0_86, %c0_87] : memref<32x32xf32, #tpu.memory_space<vmem>>, vector<32x32xf32>
    %cst_88 = arith.constant dense<0.000000e+00> : vector<2x32xf32>
    %265 = tpu.matmul %263, %264, %cst_88 {dimension_numbers = #tpu.dot_dimension_numbers<[1], [0], [0], [1], [0, 0, 1, 1], [], []>} : vector<2x32xf32>, vector<32x32xf32>, vector<2x32xf32> -> vector<2x32xf32>
    %266 = vector.broadcast %3 : vector<1x32xf32> to vector<2x32xf32>
    %267 = arith.addf %265, %266 : vector<2x32xf32>
    %268 = math.tanh %267 : vector<2x32xf32>
    %c0_89 = arith.constant 0 : index
    %c0_90 = arith.constant 0 : index
    %269 = vector.load %arg9[%c0_89, %c0_90] : memref<32x128xf32, #tpu.memory_space<vmem>>, vector<32x128xf32>
    %cst_91 = arith.constant dense<0.000000e+00> : vector<2x128xf32>
    %270 = tpu.matmul %268, %269, %cst_91 {dimension_numbers = #tpu.dot_dimension_numbers<[1], [0], [0], [1], [0, 0, 1, 1], [], []>} : vector<2x32xf32>, vector<32x128xf32>, vector<2x128xf32> -> vector<2x128xf32>
    %271 = vector.broadcast %4 : vector<1x128xf32> to vector<2x128xf32>
    %272 = arith.addf %270, %271 : vector<2x128xf32>
    %c0_92 = arith.constant 0 : index
    %c0_93 = arith.constant 0 : index
    %273 = vector.load %arg10[%c0_92, %c0_93] : memref<2x128xf32, #tpu.memory_space<vmem>>, vector<2x128xf32>
    tpu.vector_store %arg10[%c0_92, %c0_93], %272 {strides = array<i32>} : memref<2x128xf32, #tpu.memory_space<vmem>>, vector<2x128xf32>,
    return
  }
}

</mosaic_0001>

<llo_original>
// kernel: model_forward.1
$region0: #{model_forward.1}
  #allocation0 [shape = 'u32[]', space=smem, size = 0x4, offset = 0x4, fixed_abs, tag = 'smem constant byte address 0x4 - core index']
  #allocation1 [shape = 'u32[144,128]{1,0:T(1,128)}', space=vmem, size = 0x12000, scoped, tag = 'internal scratch']
  %s0 = inlined_call_operand.vmem [shape: f32[16,32], index: 0, kind: input, shape index: {}]
  %s1 = inlined_call_operand.vmem [shape: f32[2,8], index: 1, kind: input, shape index: {}]
  %s2 = inlined_call_operand.vmem [shape: f32[2,8,128], index: 2, kind: input, shape index: {}]
  %s3 = inlined_call_operand.vmem [shape: f32[8,128], index: 3, kind: input, shape index: {}]
  %s4 = inlined_call_operand.vmem [shape: f32[2,32,96], index: 4, kind: input, shape index: {}]
  %s5 = inlined_call_operand.vmem [shape: f32[2,2,16,32], index: 5, kind: input, shape index: {}]
  %s6 = inlined_call_operand.vmem [shape: f32[2,32,64], index: 6, kind: input, shape index: {}]
  %s7 = inlined_call_operand.vmem [shape: f32[2,64,32], index: 7, kind: input, shape index: {}]
  %s8 = inlined_call_operand.vmem [shape: f32[32,32], index: 8, kind: input, shape index: {}]
  %s9 = inlined_call_operand.vmem [shape: f32[32,128], index: 9, kind: input, shape index: {}]
  %s10 = inlined_call_operand.hbm [shape: f32[2,128], index: 10, kind: output, shape index: {}]
  %s11 = sld [smem:[#allocation0]]
  $region50: #{model_forward.1} parent=0
    _
  %s13 = ssub.s32 1, %s11
  %s14 = scalar_select 0, %s13, %s11
  $region1: #{model_forward.1} parent=0
    #allocation2 [shape = 'u8[1024]{0}', space=vmem, size = 0x400, scoped, tag = 'output window, operand 0, single buffered']
    #allocation3 [shape = 's32[1]{0}', space=sflag, size = 0x4, scoped, tag = 'scoped memory for model_forward.1']
    %15 = vsyncpa [#allocation3], 0
    // Predicated region
    $region2: #{model_forward.1} parent=1 // pred_check
      _
    $region3: #{model_forward.1} parent=1 // pred_check_branch
      %17 = sbr.rel (0) target = $region5
    $region4: #{model_forward.1} parent=1 // pred_region
      _
    $region5: #{model_forward.1} parent=1 // pred_fallthru
      _
    // Predicated region
    $region6: #{model_forward.1} parent=1 // pred_check
      _
    $region7: #{model_forward.1} parent=1 // pred_check_branch
      %19 = sbr.rel (0) target = $region9
    $region8: #{model_forward.1} parent=1 // pred_region
      _
    $region9: #{model_forward.1} parent=1 // pred_fallthru
      _
    // Predicated region
    $region10: #{model_forward.1} parent=1 // pred_check
      _
    $region11: #{model_forward.1} parent=1 // pred_check_branch
      %21 = sbr.rel (0) target = $region13
    $region12: #{model_forward.1} parent=1 // pred_region
      _
    $region13: #{model_forward.1} parent=1 // pred_fallthru
      _
    // Predicated region
    $region14: #{model_forward.1} parent=1 // pred_check
      _
    $region15: #{model_forward.1} parent=1 // pred_check_branch
      %23 = sbr.rel (0) target = $region17
    $region16: #{model_forward.1} parent=1 // pred_region
      _
    $region17: #{model_forward.1} parent=1 // pred_fallthru
      _
    // Predicated region
    $region18: #{model_forward.1} parent=1 // pred_check
      _
    $region19: #{model_forward.1} parent=1 // pred_check_branch
      %25 = sbr.rel (0) target = $region21
    $region20: #{model_forward.1} parent=1 // pred_region
      _
    $region21: #{model_forward.1} parent=1 // pred_fallthru
      _
    // Predicated region
    $region22: #{model_forward.1} parent=1 // pred_check
      _
    $region23: #{model_forward.1} parent=1 // pred_check_branch
      %27 = sbr.rel (0) target = $region25
    $region24: #{model_forward.1} parent=1 // pred_region
      _
    $region25: #{model_forward.1} parent=1 // pred_fallthru
      _
    // Predicated region
    $region26: #{model_forward.1} parent=1 // pred_check
      _
    $region27: #{model_forward.1} parent=1 // pred_check_branch
      %29 = sbr.rel (0) target = $region29
    $region28: #{model_forward.1} parent=1 // pred_region
      _
    $region29: #{model_forward.1} parent=1 // pred_fallthru
      _
    // Predicated region
    $region30: #{model_forward.1} parent=1 // pred_check
      _
    $region31: #{model_forward.1} parent=1 // pred_check_branch
      %31 = sbr.rel (0) target = $region33
    $region32: #{model_forward.1} parent=1 // pred_region
      _
    $region33: #{model_forward.1} parent=1 // pred_fallthru
      _
    // Predicated region
    $region34: #{model_forward.1} parent=1 // pred_check
      _
    $region35: #{model_forward.1} parent=1 // pred_check_branch
      %33 = sbr.rel (0) target = $region37
    $region36: #{model_forward.1} parent=1 // pred_region
      _
    $region37: #{model_forward.1} parent=1 // pred_fallthru
      _
    // Predicated region
    $region38: #{model_forward.1} parent=1 // pred_check
      _
    $region39: #{model_forward.1} parent=1 // pred_check_branch
      %35 = sbr.rel (0) target = $region41
    $region40: #{model_forward.1} parent=1 // pred_region
      _
    $region41: #{model_forward.1} parent=1 // pred_fallthru
      _
    %v36 = vld [vmem:[%s3] sm:$0xff]
    %v37 = vld [vmem:[%s0] sm:$0xff]
    %v38 = vld [vmem:[%s0 + $0x8] sm:$0xff]
    %vm39 = vcmask 261120
    %v40 = vsel %vm39, %v37, 0.0
    %41 = vadd.xlane.f32.xlu0 %v40
    %v42 = vpop.xlane.xlu0 %41
    %v43 = vsel %vm39, %v38, 0.0
    %44 = vadd.xlane.f32.xlu0 %v43
    %v45 = vpop.xlane.xlu0 %44
    %v46 = vrcp.pop 32.0
    %v47 = vmul.f32 %v42, %v46
    %v48 = vmul.f32 %v45, %v46
    %v49 = vsub.f32 %v37, %v47
    %v50 = vsub.f32 %v38, %v48
    %v51 = vmul.f32 %v49, %v49
    %v52 = vmul.f32 %v50, %v50
    %v53 = vsel %vm39, %v51, 0.0
    %54 = vadd.xlane.f32.xlu0 %v53
    %v55 = vpop.xlane.xlu0 %54
    %v56 = vsel %vm39, %v52, 0.0
    %57 = vadd.xlane.f32.xlu0 %v56
    %v58 = vpop.xlane.xlu0 %57
    %v59 = vmul.f32 %v55, %v46
    %v60 = vmul.f32 %v58, %v46
    %v61 = vadd.f32 %v59, 1e-12
    %v62 = vadd.f32 %v60, 1e-12
    %v63 = vrsqrt.pop %v61
    %v64 = vrsqrt.pop %v62
    %v65 = vmul.f32 %v49, %v63
    %v66 = vmul.f32 %v50, %v64
    %v67 = vlaneseq
    %v68 = vshrl.u32 %v67, 7
    %v69 = vsub.s32 0, %v68
    %v70 = vrot.slane %v36, %v69
    %v71 = vmul.f32 %v65, %v70
    %v72 = vmul.f32 %v66, %v70
    %v73 = vlaneseq
    %v74 = vshrl.u32 %v73, 7
    %v75 = vsub.s32 1, %v74
    %v76 = vrot.slane %v36, %v75
    %v77 = vadd.f32 %v71, %v76
    %v78 = vadd.f32 %v72, %v76
    %v79 = vld [vmem:[%s1] sm:$0x3]
    %v82 = vunpack.c.l.s4 1966171168
    %v83 = vunpack.c.0.s8 %v82
    %v84 = vlaneseq
    %v85 = vshrl.u32 %v84, 7
    %v86 = vsub.s32 %v83, %v85
    %v87 = vrot.slane %v79, %v86
    %v88 = vcombine.high %v87, %v87
    %v90 = vunpack.c.l.s4 1966171168
    %v91 = vunpack.c.0.s8 %v90
    %v92 = vlaneseq
    %v93 = vshrl.u32 %v92, 7
    %v94 = vsub.s32 %v91, %v93
    %v95 = vrot.slane %v87, %v94
    %v97 = vunpack.c.l.s4 1966171168
    %v98 = vunpack.c.0.s8 %v97
    %v99 = vlaneseq
    %v100 = vshrl.u32 %v99, 7
    %v101 = vsub.s32 %v98, %v100
    %v102 = vrot.slane %v88, %v101
    %v103 = vlaneseq
    %v104 = vshrl.u32 %v103, 7
    %v105 = vsub.s32 0, %v104
    %v106 = vrot.slane %v95, %v105
    %v107 = vlaneseq
    %v108 = vshrl.u32 %v107, 7
    %v109 = vsub.s32 0, %v108
    %v110 = vrot.slane %v102, %v109
    %v113 = vld [vmem:[%s2] sm:$0xff]
    %v114 = vld [vmem:[%s4] sm:$0xff]
    %v115 = vld [vmem:[%s4 + $0x8] sm:$0xff]
    %v116 = vld [vmem:[%s4 + $0x10] sm:$0xff]
    %v117 = vld [vmem:[%s4 + $0x18] sm:$0xff]
    %v118 = vlaneseq
    %v119 = vshrl.u32 %v118, 7
    %v120 = vsub.s32 0, %v119
    %v121 = vrot.slane %v113, %v120
    %v123 = vsel %vm39, %v77, 0
    %v126 = vsel %vm39, %v78, 0
    %128 = vmatprep.subr.mxu0 0.0
    %129 = vmatpush1.msra.mxu0 %v114
    %130 = vmatprep.subr.mxu0 0.0
    %131 = vmatpush1.msra.mxu0 %v115
    %132 = vmatprep.subr.mxu0 0.0
    %133 = vmatpush1.msra.mxu0 %v116
    %134 = vmatprep.subr.mxu0 0.0
    %135 = vmatpush1.msra.mxu0 %v117
    %136 = vmatprep.subr.mxu0 0.0
    %137 = vmatpush1.msra.mxu0 0.0
    %138 = vmatprep.subr.mxu0 0.0
    %139 = vmatpush1.msra.mxu0 0.0
    %140 = vmatprep.subr.mxu0 0.0
    %141 = vmatpush1.msra.mxu0 0.0
    %142 = vmatprep.subr.mxu0 0.0
    %143 = vmatpush1.msra.mxu0 0.0
    %144 = vmatprep.subr.mxu0 0.0
    %145 = vmatpush1.msra.mxu0 0.0
    %146 = vmatprep.subr.mxu0 0.0
    %147 = vmatpush1.msra.mxu0 0.0
    %148 = vmatprep.subr.mxu0 0.0
    %149 = vmatpush1.msra.mxu0 0.0
    %150 = vmatprep.subr.mxu0 0.0
    %151 = vmatpush1.msra.mxu0 0.0
    %152 = vmatprep.subr.mxu0 0.0
    %153 = vmatpush1.msra.mxu0 0.0
    %154 = vmatprep.subr.mxu0 0.0
    %155 = vmatpush1.msra.mxu0 0.0
    %156 = vmatprep.subr.mxu0 0.0
    %157 = vmatpush1.msra.mxu0 0.0
    %158 = vmatprep.subr.mxu0 0.0
    %159 = vmatpush1.msra.mxu0 0.0
    %160 = vmatprep.subr.mxu0 0.0
    %161 = vmatpush1.msra.mxu0 0.0
    %162 = vmatprep.subr.mxu0 0.0
    %163 = vmatpush1.msra.mxu0 0.0
    %164 = vmatprep.subr.mxu0 0.0
    %165 = vmatpush1.msra.mxu0 0.0
    %166 = vmatprep.subr.mxu0 0.0
    %167 = vmatpush1.msra.mxu0 0.0
    %168 = vmatprep.subr.mxu0 0.0
    %169 = vmatpush1.msra.mxu0 0.0
    %170 = vmatprep.subr.mxu0 0.0
    %171 = vmatpush1.msra.mxu0 0.0
    %172 = vmatprep.subr.mxu0 0.0
    %173 = vmatpush1.msra.mxu0 0.0
    %174 = vmatprep.subr.mxu0 0.0
    %175 = vmatpush1.msra.mxu0 0.0
    %176 = vmatprep.subr.mxu0 0.0
    %177 = vmatpush1.msra.mxu0 0.0
    %178 = vmatprep.subr.mxu0 0.0
    %179 = vmatpush1.msra.mxu0 0.0
    %180 = vmatprep.subr.mxu0 0.0
    %181 = vmatpush1.msra.mxu0 0.0
    %182 = vmatprep.subr.mxu0 0.0
    %183 = vmatpush1.msra.mxu0 0.0
    %184 = vmatprep.subr.mxu0 0.0
    %185 = vmatpush1.msra.mxu0 0.0
    %186 = vmatprep.subr.mxu0 0.0
    %187 = vmatpush1.msra.mxu0 0.0
    %188 = vmatprep.subr.mxu0 0.0
    %189 = vmatpush1.msra.mxu0 0.0
    %190 = vmatprep.subr.mxu0 0.0
    %191 = vmatpush1.msra.mxu0 0.0
    %192 = vmatprep.mubr.f32.mxu0 0.0
    %193 = vmatmul.mubr.f32.gmra.mrb[0].mxu0 %v123
    %v194 = vpop.f32.mrb[0].mxu0
    %v195 = vadd.f32 %v121, %v194
    %v196 = vpop.f32.mrb[0].mxu0
    %197 = vmatprep.mubr.f32.mxu0 0.0
    %198 = vmatmul.mubr.f32.gmra.mrb[0].mxu0 %v126
    %v199 = vpop.f32.mrb[0].mxu0
    %v200 = vadd.f32 %v121, %v199
    %v201 = vpop.f32.mrb[0].mxu0
    %202 = vdwg.mxu0
    %205 = vrot.lane.b32.xlu0 %v195, 112
    %v206 = vpop.permute.xlu0 %205
    %207 = vrot.lane.b32.xlu0 %v200, 112
    %v208 = vpop.permute.xlu0 %207
    %209 = vrot.lane.b32.xlu0 %v195, 96
    %v210 = vpop.permute.xlu0 %209
    %vm211 = vcmask 130048
    %v212 = vsel %vm211, %v195, 0
    %v214 = vsel %vm211, %v210, 0
    %216 = vmatprep.subr.mxu0 0.0
    %217 = vmatpush1.xpose.msra.mxu0 %v214
    %218 = vmatprep.subr.mxu0 0.0
    %219 = vmatpush1.xpose.msra.mxu0 0.0
    %220 = vmatprep.subr.mxu0 0.0
    %221 = vmatpush1.xpose.msra.mxu0 0.0
    %222 = vmatprep.subr.mxu0 0.0
    %223 = vmatpush1.xpose.msra.mxu0 0.0
    %224 = vmatprep.subr.mxu0 0.0
    %225 = vmatpush1.xpose.msra.mxu0 0.0
    %226 = vmatprep.subr.mxu0 0.0
    %227 = vmatpush1.xpose.msra.mxu0 0.0
    %228 = vmatprep.subr.mxu0 0.0
    %229 = vmatpush1.xpose.msra.mxu0 0.0
    %230 = vmatprep.subr.mxu0 0.0
    %231 = vmatpush1.xpose.msra.mxu0 0.0
    %232 = vmatprep.subr.mxu0 0.0
    %233 = vmatpush1.xpose.msra.mxu0 0.0
    %234 = vmatprep.subr.mxu0 0.0
    %235 = vmatpush1.xpose.msra.mxu0 0.0
    %236 = vmatprep.subr.mxu0 0.0
    %237 = vmatpush1.xpose.msra.mxu0 0.0
    %238 = vmatprep.subr.mxu0 0.0
    %239 = vmatpush1.xpose.msra.mxu0 0.0
    %240 = vmatprep.subr.mxu0 0.0
    %241 = vmatpush1.xpose.msra.mxu0 0.0
    %242 = vmatprep.subr.mxu0 0.0
    %243 = vmatpush1.xpose.msra.mxu0 0.0
    %244 = vmatprep.subr.mxu0 0.0
    %245 = vmatpush1.xpose.msra.mxu0 0.0
    %246 = vmatprep.subr.mxu0 0.0
    %247 = vmatpush1.xpose.msra.mxu0 0.0
    %248 = vmatprep.subr.mxu0 0.0
    %249 = vmatpush1.xpose.msra.mxu0 0.0
    %250 = vmatprep.subr.mxu0 0.0
    %251 = vmatpush1.xpose.msra.mxu0 0.0
    %252 = vmatprep.subr.mxu0 0.0
    %253 = vmatpush1.xpose.msra.mxu0 0.0
    %254 = vmatprep.subr.mxu0 0.0
    %255 = vmatpush1.xpose.msra.mxu0 0.0
    %256 = vmatprep.subr.mxu0 0.0
    %257 = vmatpush1.xpose.msra.mxu0 0.0
    %258 = vmatprep.subr.mxu0 0.0
    %259 = vmatpush1.xpose.msra.mxu0 0.0
    %260 = vmatprep.subr.mxu0 0.0
    %261 = vmatpush1.xpose.msra.mxu0 0.0
    %262 = vmatprep.subr.mxu0 0.0
    %263 = vmatpush1.xpose.msra.mxu0 0.0
    %264 = vmatprep.subr.mxu0 0.0
    %265 = vmatpush1.xpose.msra.mxu0 0.0
    %266 = vmatprep.subr.mxu0 0.0
    %267 = vmatpush1.xpose.msra.mxu0 0.0
    %268 = vmatprep.subr.mxu0 0.0
    %269 = vmatpush1.xpose.msra.mxu0 0.0
    %270 = vmatprep.subr.mxu0 0.0
    %271 = vmatpush1.xpose.msra.mxu0 0.0
    %272 = vmatprep.subr.mxu0 0.0
    %273 = vmatpush1.xpose.msra.mxu0 0.0
    %274 = vmatprep.subr.mxu0 0.0
    %275 = vmatpush1.xpose.msra.mxu0 0.0
    %276 = vmatprep.subr.mxu0 0.0
    %277 = vmatpush1.xpose.msra.mxu0 0.0
    %278 = vmatprep.subr.mxu0 0.0
    %279 = vmatpush1.xpose.msra.mxu0 0.0
    %280 = vmatprep.mubr.f32.mxu0 0.0
    %281 = vmatmul.mubr.f32.gmra.mrb[0].mxu0 %v212
    %v282 = vpop.f32.mrb[0].mxu0
    %v283 = vadd.f32 %v106, %v282
    %v284 = vpop.f32.mrb[0].mxu0
    %285 = vdwg.mxu0
    %286 = vrot.lane.b32.xlu0 %v200, 96
    %v287 = vpop.permute.xlu0 %286
    %v288 = vsel %vm211, %v200, 0
    %v290 = vsel %vm211, %v287, 0
    %292 = vmatprep.subr.mxu0 0.0
    %293 = vmatpush1.xpose.msra.mxu0 %v290
    %294 = vmatprep.subr.mxu0 0.0
    %295 = vmatpush1.xpose.msra.mxu0 0.0
    %296 = vmatprep.subr.mxu0 0.0
    %297 = vmatpush1.xpose.msra.mxu0 0.0
    %298 = vmatprep.subr.mxu0 0.0
    %299 = vmatpush1.xpose.msra.mxu0 0.0
    %300 = vmatprep.subr.mxu0 0.0
    %301 = vmatpush1.xpose.msra.mxu0 0.0
    %302 = vmatprep.subr.mxu0 0.0
    %303 = vmatpush1.xpose.msra.mxu0 0.0
    %304 = vmatprep.subr.mxu0 0.0
    %305 = vmatpush1.xpose.msra.mxu0 0.0
    %306 = vmatprep.subr.mxu0 0.0
    %307 = vmatpush1.xpose.msra.mxu0 0.0
    %308 = vmatprep.subr.mxu0 0.0
    %309 = vmatpush1.xpose.msra.mxu0 0.0
    %310 = vmatprep.subr.mxu0 0.0
    %311 = vmatpush1.xpose.msra.mxu0 0.0
    %312 = vmatprep.subr.mxu0 0.0
    %313 = vmatpush1.xpose.msra.mxu0 0.0
    %314 = vmatprep.subr.mxu0 0.0
    %315 = vmatpush1.xpose.msra.mxu0 0.0
    %316 = vmatprep.subr.mxu0 0.0
    %317 = vmatpush1.xpose.msra.mxu0 0.0
    %318 = vmatprep.subr.mxu0 0.0
    %319 = vmatpush1.xpose.msra.mxu0 0.0
    %320 = vmatprep.subr.mxu0 0.0
    %321 = vmatpush1.xpose.msra.mxu0 0.0
    %322 = vmatprep.subr.mxu0 0.0
    %323 = vmatpush1.xpose.msra.mxu0 0.0
    %324 = vmatprep.subr.mxu0 0.0
    %325 = vmatpush1.xpose.msra.mxu0 0.0
    %326 = vmatprep.subr.mxu0 0.0
    %327 = vmatpush1.xpose.msra.mxu0 0.0
    %328 = vmatprep.subr.mxu0 0.0
    %329 = vmatpush1.xpose.msra.mxu0 0.0
    %330 = vmatprep.subr.mxu0 0.0
    %331 = vmatpush1.xpose.msra.mxu0 0.0
    %332 = vmatprep.subr.mxu0 0.0
    %333 = vmatpush1.xpose.msra.mxu0 0.0
    %334 = vmatprep.subr.mxu0 0.0
    %335 = vmatpush1.xpose.msra.mxu0 0.0
    %336 = vmatprep.subr.mxu0 0.0
    %337 = vmatpush1.xpose.msra.mxu0 0.0
    %338 = vmatprep.subr.mxu0 0.0
    %339 = vmatpush1.xpose.msra.mxu0 0.0
    %340 = vmatprep.subr.mxu0 0.0
    %341 = vmatpush1.xpose.msra.mxu0 0.0
    %342 = vmatprep.subr.mxu0 0.0
    %343 = vmatpush1.xpose.msra.mxu0 0.0
    %344 = vmatprep.subr.mxu0 0.0
    %345 = vmatpush1.xpose.msra.mxu0 0.0
    %346 = vmatprep.subr.mxu0 0.0
    %347 = vmatpush1.xpose.msra.mxu0 0.0
    %348 = vmatprep.subr.mxu0 0.0
    %349 = vmatpush1.xpose.msra.mxu0 0.0
    %350 = vmatprep.subr.mxu0 0.0
    %351 = vmatpush1.xpose.msra.mxu0 0.0
    %352 = vmatprep.subr.mxu0 0.0
    %353 = vmatpush1.xpose.msra.mxu0 0.0
    %354 = vmatprep.subr.mxu0 0.0
    %355 = vmatpush1.xpose.msra.mxu0 0.0
    %356 = vmatprep.mubr.f32.mxu0 0.0
    %357 = vmatmul.mubr.f32.gmra.mrb[0].mxu0 %v288
    %v358 = vpop.f32.mrb[0].mxu0
    %v359 = vadd.f32 %v110, %v358
    %v360 = vpop.f32.mrb[0].mxu0
    %361 = vdwg.mxu0
    %362 = vrot.lane.b32.xlu0 %v206, 96
    %v363 = vpop.permute.xlu0 %362
    %v364 = vsel %vm211, %v206, 0
    %v366 = vsel %vm211, %v363, 0
    %368 = vmatprep.subr.mxu0 0.0
    %369 = vmatpush1.xpose.msra.mxu0 %v366
    %370 = vmatprep.subr.mxu0 0.0
    %371 = vmatpush1.xpose.msra.mxu0 0.0
    %372 = vmatprep.subr.mxu0 0.0
    %373 = vmatpush1.xpose.msra.mxu0 0.0
    %374 = vmatprep.subr.mxu0 0.0
    %375 = vmatpush1.xpose.msra.mxu0 0.0
    %376 = vmatprep.subr.mxu0 0.0
    %377 = vmatpush1.xpose.msra.mxu0 0.0
    %378 = vmatprep.subr.mxu0 0.0
    %379 = vmatpush1.xpose.msra.mxu0 0.0
    %380 = vmatprep.subr.mxu0 0.0
    %381 = vmatpush1.xpose.msra.mxu0 0.0
    %382 = vmatprep.subr.mxu0 0.0
    %383 = vmatpush1.xpose.msra.mxu0 0.0
    %384 = vmatprep.subr.mxu0 0.0
    %385 = vmatpush1.xpose.msra.mxu0 0.0
    %386 = vmatprep.subr.mxu0 0.0
    %387 = vmatpush1.xpose.msra.mxu0 0.0
    %388 = vmatprep.subr.mxu0 0.0
    %389 = vmatpush1.xpose.msra.mxu0 0.0
    %390 = vmatprep.subr.mxu0 0.0
    %391 = vmatpush1.xpose.msra.mxu0 0.0
    %392 = vmatprep.subr.mxu0 0.0
    %393 = vmatpush1.xpose.msra.mxu0 0.0
    %394 = vmatprep.subr.mxu0 0.0
    %395 = vmatpush1.xpose.msra.mxu0 0.0
    %396 = vmatprep.subr.mxu0 0.0
    %397 = vmatpush1.xpose.msra.mxu0 0.0
    %398 = vmatprep.subr.mxu0 0.0
    %399 = vmatpush1.xpose.msra.mxu0 0.0
    %400 = vmatprep.subr.mxu0 0.0
    %401 = vmatpush1.xpose.msra.mxu0 0.0
    %402 = vmatprep.subr.mxu0 0.0
    %403 = vmatpush1.xpose.msra.mxu0 0.0
    %404 = vmatprep.subr.mxu0 0.0
    %405 = vmatpush1.xpose.msra.mxu0 0.0
    %406 = vmatprep.subr.mxu0 0.0
    %407 = vmatpush1.xpose.msra.mxu0 0.0
    %408 = vmatprep.subr.mxu0 0.0
    %409 = vmatpush1.xpose.msra.mxu0 0.0
    %410 = vmatprep.subr.mxu0 0.0
    %411 = vmatpush1.xpose.msra.mxu0 0.0
    %412 = vmatprep.subr.mxu0 0.0
    %413 = vmatpush1.xpose.msra.mxu0 0.0
    %414 = vmatprep.subr.mxu0 0.0
    %415 = vmatpush1.xpose.msra.mxu0 0.0
    %416 = vmatprep.subr.mxu0 0.0
    %417 = vmatpush1.xpose.msra.mxu0 0.0
    %418 = vmatprep.subr.mxu0 0.0
    %419 = vmatpush1.xpose.msra.mxu0 0.0
    %420 = vmatprep.subr.mxu0 0.0
    %421 = vmatpush1.xpose.msra.mxu0 0.0
    %422 = vmatprep.subr.mxu0 0.0
    %423 = vmatpush1.xpose.msra.mxu0 0.0
    %424 = vmatprep.subr.mxu0 0.0
    %425 = vmatpush1.xpose.msra.mxu0 0.0
    %426 = vmatprep.subr.mxu0 0.0
    %427 = vmatpush1.xpose.msra.mxu0 0.0
    %428 = vmatprep.subr.mxu0 0.0
    %429 = vmatpush1.xpose.msra.mxu0 0.0
    %430 = vmatprep.subr.mxu0 0.0
    %431 = vmatpush1.xpose.msra.mxu0 0.0
    %432 = vmatprep.mubr.f32.mxu0 0.0
    %433 = vmatmul.mubr.f32.gmra.mrb[0].mxu0 %v364
    %v434 = vpop.f32.mrb[0].mxu0
    %v435 = vadd.f32 %v106, %v434
    %v436 = vpop.f32.mrb[0].mxu0
    %437 = vdwg.mxu0
    %438 = vrot.lane.b32.xlu0 %v208, 96
    %v439 = vpop.permute.xlu0 %438
    %v440 = vsel %vm211, %v208, 0
    %v442 = vsel %vm211, %v439, 0
    %444 = vmatprep.subr.mxu0 0.0
    %445 = vmatpush1.xpose.msra.mxu0 %v442
    %446 = vmatprep.subr.mxu0 0.0
    %447 = vmatpush1.xpose.msra.mxu0 0.0
    %448 = vmatprep.subr.mxu0 0.0
    %449 = vmatpush1.xpose.msra.mxu0 0.0
    %450 = vmatprep.subr.mxu0 0.0
    %451 = vmatpush1.xpose.msra.mxu0 0.0
    %452 = vmatprep.subr.mxu0 0.0
    %453 = vmatpush1.xpose.msra.mxu0 0.0
    %454 = vmatprep.subr.mxu0 0.0
    %455 = vmatpush1.xpose.msra.mxu0 0.0
    %456 = vmatprep.subr.mxu0 0.0
    %457 = vmatpush1.xpose.msra.mxu0 0.0
    %458 = vmatprep.subr.mxu0 0.0
    %459 = vmatpush1.xpose.msra.mxu0 0.0
    %460 = vmatprep.subr.mxu0 0.0
    %461 = vmatpush1.xpose.msra.mxu0 0.0
    %462 = vmatprep.subr.mxu0 0.0
    %463 = vmatpush1.xpose.msra.mxu0 0.0
    %464 = vmatprep.subr.mxu0 0.0
    %465 = vmatpush1.xpose.msra.mxu0 0.0
    %466 = vmatprep.subr.mxu0 0.0
    %467 = vmatpush1.xpose.msra.mxu0 0.0
    %468 = vmatprep.subr.mxu0 0.0
    %469 = vmatpush1.xpose.msra.mxu0 0.0
    %470 = vmatprep.subr.mxu0 0.0
    %471 = vmatpush1.xpose.msra.mxu0 0.0
    %472 = vmatprep.subr.mxu0 0.0
    %473 = vmatpush1.xpose.msra.mxu0 0.0
    %474 = vmatprep.subr.mxu0 0.0
    %475 = vmatpush1.xpose.msra.mxu0 0.0
    %476 = vmatprep.subr.mxu0 0.0
    %477 = vmatpush1.xpose.msra.mxu0 0.0
    %478 = vmatprep.subr.mxu0 0.0
    %479 = vmatpush1.xpose.msra.mxu0 0.0
    %480 = vmatprep.subr.mxu0 0.0
    %481 = vmatpush1.xpose.msra.mxu0 0.0
    %482 = vmatprep.subr.mxu0 0.0
    %483 = vmatpush1.xpose.msra.mxu0 0.0
    %484 = vmatprep.subr.mxu0 0.0
    %485 = vmatpush1.xpose.msra.mxu0 0.0
    %486 = vmatprep.subr.mxu0 0.0
    %487 = vmatpush1.xpose.msra.mxu0 0.0
    %488 = vmatprep.subr.mxu0 0.0
    %489 = vmatpush1.xpose.msra.mxu0 0.0
    %490 = vmatprep.subr.mxu0 0.0
    %491 = vmatpush1.xpose.msra.mxu0 0.0
    %492 = vmatprep.subr.mxu0 0.0
    %493 = vmatpush1.xpose.msra.mxu0 0.0
    %494 = vmatprep.subr.mxu0 0.0
    %495 = vmatpush1.xpose.msra.mxu0 0.0
    %496 = vmatprep.subr.mxu0 0.0
    %497 = vmatpush1.xpose.msra.mxu0 0.0
    %498 = vmatprep.subr.mxu0 0.0
    %499 = vmatpush1.xpose.msra.mxu0 0.0
    %500 = vmatprep.subr.mxu0 0.0
    %501 = vmatpush1.xpose.msra.mxu0 0.0
    %502 = vmatprep.subr.mxu0 0.0
    %503 = vmatpush1.xpose.msra.mxu0 0.0
    %504 = vmatprep.subr.mxu0 0.0
    %505 = vmatpush1.xpose.msra.mxu0 0.0
    %506 = vmatprep.subr.mxu0 0.0
    %507 = vmatpush1.xpose.msra.mxu0 0.0
    %508 = vmatprep.mubr.f32.mxu0 0.0
    %509 = vmatmul.mubr.f32.gmra.mrb[0].mxu0 %v440
    %v510 = vpop.f32.mrb[0].mxu0
    %v511 = vadd.f32 %v110, %v510
    %v512 = vpop.f32.mrb[0].mxu0
    %513 = vdwg.mxu0
    %vm514 = vcmask 64512
    %v515 = vsel %vm514, %v283, -inf
    %516 = vmax.xlane.f32.xlu0 %v515
    %v517 = vpop.xlane.xlu0 %516
    %v518 = vsel %vm514, %v359, -inf
    %519 = vmax.xlane.f32.xlu0 %v518
    %v520 = vpop.xlane.xlu0 %519
    %v521 = vsel %vm514, %v435, -inf
    %522 = vmax.xlane.f32.xlu0 %v521
    %v523 = vpop.xlane.xlu0 %522
    %v524 = vsel %vm514, %v511, -inf
    %525 = vmax.xlane.f32.xlu0 %v524
    %v526 = vpop.xlane.xlu0 %525
    %v527 = vsub.f32 %v283, %v517
    %v528 = vsub.f32 %v359, %v520
    %v529 = vsub.f32 %v435, %v523
    %v530 = vsub.f32 %v511, %v526
    %v531 = vmul.f32 %v527, 1.442695
    %v532 = vpow.pop %v531
    %v533 = vmul.f32 %v528, 1.442695
    %v534 = vpow.pop %v533
    %v535 = vmul.f32 %v529, 1.442695
    %v536 = vpow.pop %v535
    %v537 = vmul.f32 %v530, 1.442695
    %v538 = vpow.pop %v537
    %v539 = vsel %vm514, %v532, 0.0
    %540 = vadd.xlane.f32.xlu0 %v539
    %v541 = vpop.xlane.xlu0 %540
    %v542 = vsel %vm514, %v534, 0.0
    %543 = vadd.xlane.f32.xlu0 %v542
    %v544 = vpop.xlane.xlu0 %543
    %v545 = vsel %vm514, %v536, 0.0
    %546 = vadd.xlane.f32.xlu0 %v545
    %v547 = vpop.xlane.xlu0 %546
    %v548 = vsel %vm514, %v538, 0.0
    %549 = vadd.xlane.f32.xlu0 %v548
    %v550 = vpop.xlane.xlu0 %549
    %v551 = vrcp.pop %v541
    %v552 = vrcp.pop %v544
    %v553 = vrcp.pop %v547
    %v554 = vrcp.pop %v550
    %v555 = vmul.f32 %v532, %v551
    %v556 = vmul.f32 %v534, %v552
    %v557 = vmul.f32 %v536, %v553
    %v558 = vmul.f32 %v538, %v554
    %559 = vrot.lane.b32.xlu0 %v195, 64
    %v560 = vpop.permute.xlu0 %559
    %v563 = vsel %vm514, %v555, 0
    %565 = vmatprep.subr.mxu0 0.0
    %566 = vmatpush1.msra.mxu0 %v560
    %567 = vmatprep.subr.mxu0 0.0
    %568 = vmatpush1.msra.mxu0 0.0
    %569 = vmatprep.subr.mxu0 0.0
    %570 = vmatpush1.msra.mxu0 0.0
    %571 = vmatprep.subr.mxu0 0.0
    %572 = vmatpush1.msra.mxu0 0.0
    %573 = vmatprep.subr.mxu0 0.0
    %574 = vmatpush1.msra.mxu0 0.0
    %575 = vmatprep.subr.mxu0 0.0
    %576 = vmatpush1.msra.mxu0 0.0
    %577 = vmatprep.subr.mxu0 0.0
    %578 = vmatpush1.msra.mxu0 0.0
    %579 = vmatprep.subr.mxu0 0.0
    %580 = vmatpush1.msra.mxu0 0.0
    %581 = vmatprep.subr.mxu0 0.0
    %582 = vmatpush1.msra.mxu0 0.0
    %583 = vmatprep.subr.mxu0 0.0
    %584 = vmatpush1.msra.mxu0 0.0
    %585 = vmatprep.subr.mxu0 0.0
    %586 = vmatpush1.msra.mxu0 0.0
    %587 = vmatprep.subr.mxu0 0.0
    %588 = vmatpush1.msra.mxu0 0.0
    %589 = vmatprep.subr.mxu0 0.0
    %590 = vmatpush1.msra.mxu0 0.0
    %591 = vmatprep.subr.mxu0 0.0
    %592 = vmatpush1.msra.mxu0 0.0
    %593 = vmatprep.subr.mxu0 0.0
    %594 = vmatpush1.msra.mxu0 0.0
    %595 = vmatprep.subr.mxu0 0.0
    %596 = vmatpush1.msra.mxu0 0.0
    %597 = vmatprep.subr.mxu0 0.0
    %598 = vmatpush1.msra.mxu0 0.0
    %599 = vmatprep.subr.mxu0 0.0
    %600 = vmatpush1.msra.mxu0 0.0
    %601 = vmatprep.subr.mxu0 0.0
    %602 = vmatpush1.msra.mxu0 0.0
    %603 = vmatprep.subr.mxu0 0.0
    %604 = vmatpush1.msra.mxu0 0.0
    %605 = vmatprep.subr.mxu0 0.0
    %606 = vmatpush1.msra.mxu0 0.0
    %607 = vmatprep.subr.mxu0 0.0
    %608 = vmatpush1.msra.mxu0 0.0
    %609 = vmatprep.subr.mxu0 0.0
    %610 = vmatpush1.msra.mxu0 0.0
    %611 = vmatprep.subr.mxu0 0.0
    %612 = vmatpush1.msra.mxu0 0.0
    %613 = vmatprep.subr.mxu0 0.0
    %614 = vmatpush1.msra.mxu0 0.0
    %615 = vmatprep.subr.mxu0 0.0
    %616 = vmatpush1.msra.mxu0 0.0
    %617 = vmatprep.subr.mxu0 0.0
    %618 = vmatpush1.msra.mxu0 0.0
    %619 = vmatprep.subr.mxu0 0.0
    %620 = vmatpush1.msra.mxu0 0.0
    %621 = vmatprep.subr.mxu0 0.0
    %622 = vmatpush1.msra.mxu0 0.0
    %623 = vmatprep.subr.mxu0 0.0
    %624 = vmatpush1.msra.mxu0 0.0
    %625 = vmatprep.subr.mxu0 0.0
    %626 = vmatpush1.msra.mxu0 0.0
    %627 = vmatprep.subr.mxu0 0.0
    %628 = vmatpush1.msra.mxu0 0.0
    %629 = vmatprep.mubr.f32.mxu0 0.0
    %630 = vmatmul.mubr.f32.gmra.mrb[0].mxu0 %v563
    %v631 = vpop.f32.mrb[0].mxu0
    %v632 = vadd.f32 0.0, %v631
    %v633 = vpop.f32.mrb[0].mxu0
    %634 = vdwg.mxu0
    %635 = vrot.lane.b32.xlu0 %v200, 64
    %v636 = vpop.permute.xlu0 %635
    %v639 = vsel %vm514, %v556, 0
    %641 = vmatprep.subr.mxu0 0.0
    %642 = vmatpush1.msra.mxu0 %v636
    %643 = vmatprep.subr.mxu0 0.0
    %644 = vmatpush1.msra.mxu0 0.0
    %645 = vmatprep.subr.mxu0 0.0
    %646 = vmatpush1.msra.mxu0 0.0
    %647 = vmatprep.subr.mxu0 0.0
    %648 = vmatpush1.msra.mxu0 0.0
    %649 = vmatprep.subr.mxu0 0.0
    %650 = vmatpush1.msra.mxu0 0.0
    %651 = vmatprep.subr.mxu0 0.0
    %652 = vmatpush1.msra.mxu0 0.0
    %653 = vmatprep.subr.mxu0 0.0
    %654 = vmatpush1.msra.mxu0 0.0
    %655 = vmatprep.subr.mxu0 0.0
    %656 = vmatpush1.msra.mxu0 0.0
    %657 = vmatprep.subr.mxu0 0.0
    %658 = vmatpush1.msra.mxu0 0.0
    %659 = vmatprep.subr.mxu0 0.0
    %660 = vmatpush1.msra.mxu0 0.0
    %661 = vmatprep.subr.mxu0 0.0
    %662 = vmatpush1.msra.mxu0 0.0
    %663 = vmatprep.subr.mxu0 0.0
    %664 = vmatpush1.msra.mxu0 0.0
    %665 = vmatprep.subr.mxu0 0.0
    %666 = vmatpush1.msra.mxu0 0.0
    %667 = vmatprep.subr.mxu0 0.0
    %668 = vmatpush1.msra.mxu0 0.0
    %669 = vmatprep.subr.mxu0 0.0
    %670 = vmatpush1.msra.mxu0 0.0
    %671 = vmatprep.subr.mxu0 0.0
    %672 = vmatpush1.msra.mxu0 0.0
    %673 = vmatprep.subr.mxu0 0.0
    %674 = vmatpush1.msra.mxu0 0.0
    %675 = vmatprep.subr.mxu0 0.0
    %676 = vmatpush1.msra.mxu0 0.0
    %677 = vmatprep.subr.mxu0 0.0
    %678 = vmatpush1.msra.mxu0 0.0
    %679 = vmatprep.subr.mxu0 0.0
    %680 = vmatpush1.msra.mxu0 0.0
    %681 = vmatprep.subr.mxu0 0.0
    %682 = vmatpush1.msra.mxu0 0.0
    %683 = vmatprep.subr.mxu0 0.0
    %684 = vmatpush1.msra.mxu0 0.0
    %685 = vmatprep.subr.mxu0 0.0
    %686 = vmatpush1.msra.mxu0 0.0
    %687 = vmatprep.subr.mxu0 0.0
    %688 = vmatpush1.msra.mxu0 0.0
    %689 = vmatprep.subr.mxu0 0.0
    %690 = vmatpush1.msra.mxu0 0.0
    %691 = vmatprep.subr.mxu0 0.0
    %692 = vmatpush1.msra.mxu0 0.0
    %693 = vmatprep.subr.mxu0 0.0
    %694 = vmatpush1.msra.mxu0 0.0
    %695 = vmatprep.subr.mxu0 0.0
    %696 = vmatpush1.msra.mxu0 0.0
    %697 = vmatprep.subr.mxu0 0.0
    %698 = vmatpush1.msra.mxu0 0.0
    %699 = vmatprep.subr.mxu0 0.0
    %700 = vmatpush1.msra.mxu0 0.0
    %701 = vmatprep.subr.mxu0 0.0
    %702 = vmatpush1.msra.mxu0 0.0
    %703 = vmatprep.subr.mxu0 0.0
    %704 = vmatpush1.msra.mxu0 0.0
    %705 = vmatprep.mubr.f32.mxu0 0.0
    %706 = vmatmul.mubr.f32.gmra.mrb[0].mxu0 %v639
    %v707 = vpop.f32.mrb[0].mxu0
    %v708 = vadd.f32 0.0, %v707
    %v709 = vpop.f32.mrb[0].mxu0
    %710 = vdwg.mxu0
    %711 = vrot.lane.b32.xlu0 %v206, 64
    %v712 = vpop.permute.xlu0 %711
    %v715 = vsel %vm514, %v557, 0
    %717 = vmatprep.subr.mxu0 0.0
    %718 = vmatpush1.msra.mxu0 %v712
    %719 = vmatprep.subr.mxu0 0.0
    %720 = vmatpush1.msra.mxu0 0.0
    %721 = vmatprep.subr.mxu0 0.0
    %722 = vmatpush1.msra.mxu0 0.0
    %723 = vmatprep.subr.mxu0 0.0
    %724 = vmatpush1.msra.mxu0 0.0
    %725 = vmatprep.subr.mxu0 0.0
    %726 = vmatpush1.msra.mxu0 0.0
    %727 = vmatprep.subr.mxu0 0.0
    %728 = vmatpush1.msra.mxu0 0.0
    %729 = vmatprep.subr.mxu0 0.0
    %730 = vmatpush1.msra.mxu0 0.0
    %731 = vmatprep.subr.mxu0 0.0
    %732 = vmatpush1.msra.mxu0 0.0
    %733 = vmatprep.subr.mxu0 0.0
    %734 = vmatpush1.msra.mxu0 0.0
    %735 = vmatprep.subr.mxu0 0.0
    %736 = vmatpush1.msra.mxu0 0.0
    %737 = vmatprep.subr.mxu0 0.0
    %738 = vmatpush1.msra.mxu0 0.0
    %739 = vmatprep.subr.mxu0 0.0
    %740 = vmatpush1.msra.mxu0 0.0
    %741 = vmatprep.subr.mxu0 0.0
    %742 = vmatpush1.msra.mxu0 0.0
    %743 = vmatprep.subr.mxu0 0.0
    %744 = vmatpush1.msra.mxu0 0.0
    %745 = vmatprep.subr.mxu0 0.0
    %746 = vmatpush1.msra.mxu0 0.0
    %747 = vmatprep.subr.mxu0 0.0
    %748 = vmatpush1.msra.mxu0 0.0
    %749 = vmatprep.subr.mxu0 0.0
    %750 = vmatpush1.msra.mxu0 0.0
    %751 = vmatprep.subr.mxu0 0.0
    %752 = vmatpush1.msra.mxu0 0.0
    %753 = vmatprep.subr.mxu0 0.0
    %754 = vmatpush1.msra.mxu0 0.0
    %755 = vmatprep.subr.mxu0 0.0
    %756 = vmatpush1.msra.mxu0 0.0
    %757 = vmatprep.subr.mxu0 0.0
    %758 = vmatpush1.msra.mxu0 0.0
    %759 = vmatprep.subr.mxu0 0.0
    %760 = vmatpush1.msra.mxu0 0.0
    %761 = vmatprep.subr.mxu0 0.0
    %762 = vmatpush1.msra.mxu0 0.0
    %763 = vmatprep.subr.mxu0 0.0
    %764 = vmatpush1.msra.mxu0 0.0
    %765 = vmatprep.subr.mxu0 0.0
    %766 = vmatpush1.msra.mxu0 0.0
    %767 = vmatprep.subr.mxu0 0.0
    %768 = vmatpush1.msra.mxu0 0.0
    %769 = vmatprep.subr.mxu0 0.0
    %770 = vmatpush1.msra.mxu0 0.0
    %771 = vmatprep.subr.mxu0 0.0
    %772 = vmatpush1.msra.mxu0 0.0
    %773 = vmatprep.subr.mxu0 0.0
    %774 = vmatpush1.msra.mxu0 0.0
    %775 = vmatprep.subr.mxu0 0.0
    %776 = vmatpush1.msra.mxu0 0.0
    %777 = vmatprep.subr.mxu0 0.0
    %778 = vmatpush1.msra.mxu0 0.0
    %779 = vmatprep.subr.mxu0 0.0
    %780 = vmatpush1.msra.mxu0 0.0
    %781 = vmatprep.mubr.f32.mxu0 0.0
    %782 = vmatmul.mubr.f32.gmra.mrb[0].mxu0 %v715
    %v783 = vpop.f32.mrb[0].mxu0
    %v784 = vadd.f32 0.0, %v783
    %v785 = vpop.f32.mrb[0].mxu0
    %786 = vdwg.mxu0
    %787 = vrot.lane.b32.xlu0 %v208, 64
    %v788 = vpop.permute.xlu0 %787
    %v791 = vsel %vm514, %v558, 0
    %793 = vmatprep.subr.mxu0 0.0
    %794 = vmatpush1.msra.mxu0 %v788
    %795 = vmatprep.subr.mxu0 0.0
    %796 = vmatpush1.msra.mxu0 0.0
    %797 = vmatprep.subr.mxu0 0.0
    %798 = vmatpush1.msra.mxu0 0.0
    %799 = vmatprep.subr.mxu0 0.0
    %800 = vmatpush1.msra.mxu0 0.0
    %801 = vmatprep.subr.mxu0 0.0
    %802 = vmatpush1.msra.mxu0 0.0
    %803 = vmatprep.subr.mxu0 0.0
    %804 = vmatpush1.msra.mxu0 0.0
    %805 = vmatprep.subr.mxu0 0.0
    %806 = vmatpush1.msra.mxu0 0.0
    %807 = vmatprep.subr.mxu0 0.0
    %808 = vmatpush1.msra.mxu0 0.0
    %809 = vmatprep.subr.mxu0 0.0
    %810 = vmatpush1.msra.mxu0 0.0
    %811 = vmatprep.subr.mxu0 0.0
    %812 = vmatpush1.msra.mxu0 0.0
    %813 = vmatprep.subr.mxu0 0.0
    %814 = vmatpush1.msra.mxu0 0.0
    %815 = vmatprep.subr.mxu0 0.0
    %816 = vmatpush1.msra.mxu0 0.0
    %817 = vmatprep.subr.mxu0 0.0
    %818 = vmatpush1.msra.mxu0 0.0
    %819 = vmatprep.subr.mxu0 0.0
    %820 = vmatpush1.msra.mxu0 0.0
    %821 = vmatprep.subr.mxu0 0.0
    %822 = vmatpush1.msra.mxu0 0.0
    %823 = vmatprep.subr.mxu0 0.0
    %824 = vmatpush1.msra.mxu0 0.0
    %825 = vmatprep.subr.mxu0 0.0
    %826 = vmatpush1.msra.mxu0 0.0
    %827 = vmatprep.subr.mxu0 0.0
    %828 = vmatpush1.msra.mxu0 0.0
    %829 = vmatprep.subr.mxu0 0.0
    %830 = vmatpush1.msra.mxu0 0.0
    %831 = vmatprep.subr.mxu0 0.0
    %832 = vmatpush1.msra.mxu0 0.0
    %833 = vmatprep.subr.mxu0 0.0
    %834 = vmatpush1.msra.mxu0 0.0
    %835 = vmatprep.subr.mxu0 0.0
    %836 = vmatpush1.msra.mxu0 0.0
    %837 = vmatprep.subr.mxu0 0.0
    %838 = vmatpush1.msra.mxu0 0.0
    %839 = vmatprep.subr.mxu0 0.0
    %840 = vmatpush1.msra.mxu0 0.0
    %841 = vmatprep.subr.mxu0 0.0
    %842 = vmatpush1.msra.mxu0 0.0
    %843 = vmatprep.subr.mxu0 0.0
    %844 = vmatpush1.msra.mxu0 0.0
    %845 = vmatprep.subr.mxu0 0.0
    %846 = vmatpush1.msra.mxu0 0.0
    %847 = vmatprep.subr.mxu0 0.0
    %848 = vmatpush1.msra.mxu0 0.0
    %849 = vmatprep.subr.mxu0 0.0
    %850 = vmatpush1.msra.mxu0 0.0
    %851 = vmatprep.subr.mxu0 0.0
    %852 = vmatpush1.msra.mxu0 0.0
    %853 = vmatprep.subr.mxu0 0.0
    %854 = vmatpush1.msra.mxu0 0.0
    %855 = vmatprep.subr.mxu0 0.0
    %856 = vmatpush1.msra.mxu0 0.0
    %857 = vmatprep.mubr.f32.mxu0 0.0
    %858 = vmatmul.mubr.f32.gmra.mrb[0].mxu0 %v791
    %v859 = vpop.f32.mrb[0].mxu0
    %v860 = vadd.f32 0.0, %v859
    %v861 = vpop.f32.mrb[0].mxu0
    %862 = vdwg.mxu0
    %v863 = vld [vmem:[%s5] sm:$0xff]
    %v864 = vld [vmem:[%s5 + $0x8] sm:$0xff]
    %v865 = vld [vmem:[%s5 + $0x10] sm:$0xff]
    %v866 = vld [vmem:[%s5 + $0x18] sm:$0xff]
    %v868 = vsel %vm211, %v632, 0
    %v871 = vsel %vm211, %v708, 0
    %873 = vmatprep.subr.mxu0 0.0
    %874 = vmatpush1.msra.mxu0 %v863
    %875 = vmatprep.subr.mxu0 0.0
    %876 = vmatpush1.msra.mxu0 %v864
    %877 = vmatprep.subr.mxu0 0.0
    %878 = vmatpush1.msra.mxu0 0.0
    %879 = vmatprep.subr.mxu0 0.0
    %880 = vmatpush1.msra.mxu0 0.0
    %881 = vmatprep.subr.mxu0 0.0
    %882 = vmatpush1.msra.mxu0 0.0
    %883 = vmatprep.subr.mxu0 0.0
    %884 = vmatpush1.msra.mxu0 0.0
    %885 = vmatprep.subr.mxu0 0.0
    %886 = vmatpush1.msra.mxu0 0.0
    %887 = vmatprep.subr.mxu0 0.0
    %888 = vmatpush1.msra.mxu0 0.0
    %889 = vmatprep.subr.mxu0 0.0
    %890 = vmatpush1.msra.mxu0 0.0
    %891 = vmatprep.subr.mxu0 0.0
    %892 = vmatpush1.msra.mxu0 0.0
    %893 = vmatprep.subr.mxu0 0.0
    %894 = vmatpush1.msra.mxu0 0.0
    %895 = vmatprep.subr.mxu0 0.0
    %896 = vmatpush1.msra.mxu0 0.0
    %897 = vmatprep.subr.mxu0 0.0
    %898 = vmatpush1.msra.mxu0 0.0
    %899 = vmatprep.subr.mxu0 0.0
    %900 = vmatpush1.msra.mxu0 0.0
    %901 = vmatprep.subr.mxu0 0.0
    %902 = vmatpush1.msra.mxu0 0.0
    %903 = vmatprep.subr.mxu0 0.0
    %904 = vmatpush1.msra.mxu0 0.0
    %905 = vmatprep.subr.mxu0 0.0
    %906 = vmatpush1.msra.mxu0 0.0
    %907 = vmatprep.subr.mxu0 0.0
    %908 = vmatpush1.msra.mxu0 0.0
    %909 = vmatprep.subr.mxu0 0.0
    %910 = vmatpush1.msra.mxu0 0.0
    %911 = vmatprep.subr.mxu0 0.0
    %912 = vmatpush1.msra.mxu0 0.0
    %913 = vmatprep.subr.mxu0 0.0
    %914 = vmatpush1.msra.mxu0 0.0
    %915 = vmatprep.subr.mxu0 0.0
    %916 = vmatpush1.msra.mxu0 0.0
    %917 = vmatprep.subr.mxu0 0.0
    %918 = vmatpush1.msra.mxu0 0.0
    %919 = vmatprep.subr.mxu0 0.0
    %920 = vmatpush1.msra.mxu0 0.0
    %921 = vmatprep.subr.mxu0 0.0
    %922 = vmatpush1.msra.mxu0 0.0
    %923 = vmatprep.subr.mxu0 0.0
    %924 = vmatpush1.msra.mxu0 0.0
    %925 = vmatprep.subr.mxu0 0.0
    %926 = vmatpush1.msra.mxu0 0.0
    %927 = vmatprep.subr.mxu0 0.0
    %928 = vmatpush1.msra.mxu0 0.0
    %929 = vmatprep.subr.mxu0 0.0
    %930 = vmatpush1.msra.mxu0 0.0
    %931 = vmatprep.subr.mxu0 0.0
    %932 = vmatpush1.msra.mxu0 0.0
    %933 = vmatprep.subr.mxu0 0.0
    %934 = vmatpush1.msra.mxu0 0.0
    %935 = vmatprep.subr.mxu0 0.0
    %936 = vmatpush1.msra.mxu0 0.0
    %937 = vmatprep.mubr.f32.mxu0 0.0
    %938 = vmatmul.mubr.f32.gmra.mrb[0].mxu0 %v868
    %v939 = vpop.f32.mrb[0].mxu0
    %v940 = vadd.f32 0.0, %v939
    %v941 = vpop.f32.mrb[0].mxu0
    %942 = vmatprep.mubr.f32.mxu0 0.0
    %943 = vmatmul.mubr.f32.gmra.mrb[0].mxu0 %v871
    %v944 = vpop.f32.mrb[0].mxu0
    %v945 = vadd.f32 0.0, %v944
    %v946 = vpop.f32.mrb[0].mxu0
    %947 = vdwg.mxu0
    %v949 = vsel %vm211, %v784, 0
    %v952 = vsel %vm211, %v860, 0
    %954 = vmatprep.subr.mxu0 0.0
    %955 = vmatpush1.msra.mxu0 %v865
    %956 = vmatprep.subr.mxu0 0.0
    %957 = vmatpush1.msra.mxu0 %v866
    %958 = vmatprep.subr.mxu0 0.0
    %959 = vmatpush1.msra.mxu0 0.0
    %960 = vmatprep.subr.mxu0 0.0
    %961 = vmatpush1.msra.mxu0 0.0
    %962 = vmatprep.subr.mxu0 0.0
    %963 = vmatpush1.msra.mxu0 0.0
    %964 = vmatprep.subr.mxu0 0.0
    %965 = vmatpush1.msra.mxu0 0.0
    %966 = vmatprep.subr.mxu0 0.0
    %967 = vmatpush1.msra.mxu0 0.0
    %968 = vmatprep.subr.mxu0 0.0
    %969 = vmatpush1.msra.mxu0 0.0
    %970 = vmatprep.subr.mxu0 0.0
    %971 = vmatpush1.msra.mxu0 0.0
    %972 = vmatprep.subr.mxu0 0.0
    %973 = vmatpush1.msra.mxu0 0.0
    %974 = vmatprep.subr.mxu0 0.0
    %975 = vmatpush1.msra.mxu0 0.0
    %976 = vmatprep.subr.mxu0 0.0
    %977 = vmatpush1.msra.mxu0 0.0
    %978 = vmatprep.subr.mxu0 0.0
    %979 = vmatpush1.msra.mxu0 0.0
    %980 = vmatprep.subr.mxu0 0.0
    %981 = vmatpush1.msra.mxu0 0.0
    %982 = vmatprep.subr.mxu0 0.0
    %983 = vmatpush1.msra.mxu0 0.0
    %984 = vmatprep.subr.mxu0 0.0
    %985 = vmatpush1.msra.mxu0 0.0
    %986 = vmatprep.subr.mxu0 0.0
    %987 = vmatpush1.msra.mxu0 0.0
    %988 = vmatprep.subr.mxu0 0.0
    %989 = vmatpush1.msra.mxu0 0.0
    %990 = vmatprep.subr.mxu0 0.0
    %991 = vmatpush1.msra.mxu0 0.0
    %992 = vmatprep.subr.mxu0 0.0
    %993 = vmatpush1.msra.mxu0 0.0
    %994 = vmatprep.subr.mxu0 0.0
    %995 = vmatpush1.msra.mxu0 0.0
    %996 = vmatprep.subr.mxu0 0.0
    %997 = vmatpush1.msra.mxu0 0.0
    %998 = vmatprep.subr.mxu0 0.0
    %999 = vmatpush1.msra.mxu0 0.0
    %1000 = vmatprep.subr.mxu0 0.0
    %1001 = vmatpush1.msra.mxu0 0.0
    %1002 = vmatprep.subr.mxu0 0.0
    %1003 = vmatpush1.msra.mxu0 0.0
    %1004 = vmatprep.subr.mxu0 0.0
    %1005 = vmatpush1.msra.mxu0 0.0
    %1006 = vmatprep.subr.mxu0 0.0
    %1007 = vmatpush1.msra.mxu0 0.0
    %1008 = vmatprep.subr.mxu0 0.0
    %1009 = vmatpush1.msra.mxu0 0.0
    %1010 = vmatprep.subr.mxu0 0.0
    %1011 = vmatpush1.msra.mxu0 0.0
    %1012 = vmatprep.subr.mxu0 0.0
    %1013 = vmatpush1.msra.mxu0 0.0
    %1014 = vmatprep.subr.mxu0 0.0
    %1015 = vmatpush1.msra.mxu0 0.0
    %1016 = vmatprep.subr.mxu0 0.0
    %1017 = vmatpush1.msra.mxu0 0.0
    %1018 = vmatprep.mubr.f32.mxu0 0.0
    %1019 = vmatmul.mubr.f32.gmra.mrb[0].mxu0 %v949
    %v1020 = vpop.f32.mrb[0].mxu0
    %v1021 = vadd.f32 0.0, %v1020
    %v1022 = vpop.f32.mrb[0].mxu0
    %1023 = vmatprep.mubr.f32.mxu0 0.0
    %1024 = vmatmul.mubr.f32.gmra.mrb[0].mxu0 %v952
    %v1025 = vpop.f32.mrb[0].mxu0
    %v1026 = vadd.f32 0.0, %v1025
    %v1027 = vpop.f32.mrb[0].mxu0
    %1028 = vdwg.mxu0
    %v1029 = vsel %vm39, %v940, 0.0
    %v1030 = vsel %vm39, %v1021, 0.0
    %v1031 = vadd.f32 %v1029, %v1030
    %v1032 = vsel %vm39, %v945, 0.0
    %v1033 = vsel %vm39, %v1026, 0.0
    %v1034 = vadd.f32 %v1032, %v1033
    %v1035 = vlaneseq
    %v1036 = vshrl.u32 %v1035, 7
    %v1037 = vsub.s32 1, %v1036
    %v1038 = vrot.slane %v113, %v1037
    %v1039 = vadd.f32 %v1031, %v1038
    %v1040 = vadd.f32 %v1034, %v1038
    %v1041 = vadd.f32 %v1039, %v77
    %v1042 = vadd.f32 %v1040, %v78
    %v1043 = vsel %vm39, %v1041, 0.0
    %1044 = vadd.xlane.f32.xlu0 %v1043
    %v1045 = vpop.xlane.xlu0 %1044
    %v1046 = vsel %vm39, %v1042, 0.0
    %1047 = vadd.xlane.f32.xlu0 %v1046
    %v1048 = vpop.xlane.xlu0 %1047
    %v1049 = vmul.f32 %v1045, %v46
    %v1050 = vmul.f32 %v1048, %v46
    %v1051 = vsub.f32 %v1041, %v1049
    %v1052 = vsub.f32 %v1042, %v1050
    %v1053 = vmul.f32 %v1051, %v1051
    %v1054 = vmul.f32 %v1052, %v1052
    %v1055 = vsel %vm39, %v1053, 0.0
    %1056 = vadd.xlane.f32.xlu0 %v1055
    %v1057 = vpop.xlane.xlu0 %1056
    %v1058 = vsel %vm39, %v1054, 0.0
    %1059 = vadd.xlane.f32.xlu0 %v1058
    %v1060 = vpop.xlane.xlu0 %1059
    %v1061 = vmul.f32 %v1057, %v46
    %v1062 = vmul.f32 %v1060, %v46
    %v1063 = vadd.f32 %v1061, 1e-12
    %v1064 = vadd.f32 %v1062, 1e-12
    %v1065 = vrsqrt.pop %v1063
    %v1066 = vrsqrt.pop %v1064
    %v1067 = vmul.f32 %v1051, %v1065
    %v1068 = vmul.f32 %v1052, %v1066
    %v1069 = vlaneseq
    %v1070 = vshrl.u32 %v1069, 7
    %v1071 = vsub.s32 2, %v1070
    %v1072 = vrot.slane %v113, %v1071
    %v1073 = vmul.f32 %v1067, %v1072
    %v1074 = vmul.f32 %v1068, %v1072
    %v1075 = vlaneseq
    %v1076 = vshrl.u32 %v1075, 7
    %v1077 = vsub.s32 3, %v1076
    %v1078 = vrot.slane %v113, %v1077
    %v1079 = vadd.f32 %v1073, %v1078
    %v1080 = vadd.f32 %v1074, %v1078
    %v1081 = vld [vmem:[%s6] sm:$0xff]
    %v1082 = vld [vmem:[%s6 + $0x8] sm:$0xff]
    %v1083 = vld [vmem:[%s6 + $0x10] sm:$0xff]
    %v1084 = vld [vmem:[%s6 + $0x18] sm:$0xff]
    %v1085 = vlaneseq
    %v1086 = vshrl.u32 %v1085, 7
    %v1087 = vsub.s32 4, %v1086
    %v1088 = vrot.slane %v113, %v1087
    %v1090 = vsel %vm39, %v1079, 0
    %v1093 = vsel %vm39, %v1080, 0
    %1095 = vmatprep.subr.mxu0 0.0
    %1096 = vmatpush1.msra.mxu0 %v1081
    %1097 = vmatprep.subr.mxu0 0.0
    %1098 = vmatpush1.msra.mxu0 %v1082
    %1099 = vmatprep.subr.mxu0 0.0
    %1100 = vmatpush1.msra.mxu0 %v1083
    %1101 = vmatprep.subr.mxu0 0.0
    %1102 = vmatpush1.msra.mxu0 %v1084
    %1103 = vmatprep.subr.mxu0 0.0
    %1104 = vmatpush1.msra.mxu0 0.0
    %1105 = vmatprep.subr.mxu0 0.0
    %1106 = vmatpush1.msra.mxu0 0.0
    %1107 = vmatprep.subr.mxu0 0.0
    %1108 = vmatpush1.msra.mxu0 0.0
    %1109 = vmatprep.subr.mxu0 0.0
    %1110 = vmatpush1.msra.mxu0 0.0
    %1111 = vmatprep.subr.mxu0 0.0
    %1112 = vmatpush1.msra.mxu0 0.0
    %1113 = vmatprep.subr.mxu0 0.0
    %1114 = vmatpush1.msra.mxu0 0.0
    %1115 = vmatprep.subr.mxu0 0.0
    %1116 = vmatpush1.msra.mxu0 0.0
    %1117 = vmatprep.subr.mxu0 0.0
    %1118 = vmatpush1.msra.mxu0 0.0
    %1119 = vmatprep.subr.mxu0 0.0
    %1120 = vmatpush1.msra.mxu0 0.0
    %1121 = vmatprep.subr.mxu0 0.0
    %1122 = vmatpush1.msra.mxu0 0.0
    %1123 = vmatprep.subr.mxu0 0.0
    %1124 = vmatpush1.msra.mxu0 0.0
    %1125 = vmatprep.subr.mxu0 0.0
    %1126 = vmatpush1.msra.mxu0 0.0
    %1127 = vmatprep.subr.mxu0 0.0
    %1128 = vmatpush1.msra.mxu0 0.0
    %1129 = vmatprep.subr.mxu0 0.0
    %1130 = vmatpush1.msra.mxu0 0.0
    %1131 = vmatprep.subr.mxu0 0.0
    %1132 = vmatpush1.msra.mxu0 0.0
    %1133 = vmatprep.subr.mxu0 0.0
    %1134 = vmatpush1.msra.mxu0 0.0
    %1135 = vmatprep.subr.mxu0 0.0
    %1136 = vmatpush1.msra.mxu0 0.0
    %1137 = vmatprep.subr.mxu0 0.0
    %1138 = vmatpush1.msra.mxu0 0.0
    %1139 = vmatprep.subr.mxu0 0.0
    %1140 = vmatpush1.msra.mxu0 0.0
    %1141 = vmatprep.subr.mxu0 0.0
    %1142 = vmatpush1.msra.mxu0 0.0
    %1143 = vmatprep.subr.mxu0 0.0
    %1144 = vmatpush1.msra.mxu0 0.0
    %1145 = vmatprep.subr.mxu0 0.0
    %1146 = vmatpush1.msra.mxu0 0.0
    %1147 = vmatprep.subr.mxu0 0.0
    %1148 = vmatpush1.msra.mxu0 0.0
    %1149 = vmatprep.subr.mxu0 0.0
    %1150 = vmatpush1.msra.mxu0 0.0
    %1151 = vmatprep.subr.mxu0 0.0
    %1152 = vmatpush1.msra.mxu0 0.0
    %1153 = vmatprep.subr.mxu0 0.0
    %1154 = vmatpush1.msra.mxu0 0.0
    %1155 = vmatprep.subr.mxu0 0.0
    %1156 = vmatpush1.msra.mxu0 0.0
    %1157 = vmatprep.subr.mxu0 0.0
    %1158 = vmatpush1.msra.mxu0 0.0
    %1159 = vmatprep.mubr.f32.mxu0 0.0
    %1160 = vmatmul.mubr.f32.gmra.mrb[0].mxu0 %v1090
    %v1161 = vpop.f32.mrb[0].mxu0
    %v1162 = vadd.f32 %v1088, %v1161
    %v1163 = vpop.f32.mrb[0].mxu0
    %1164 = vmatprep.mubr.f32.mxu0 0.0
    %1165 = vmatmul.mubr.f32.gmra.mrb[0].mxu0 %v1093
    %v1166 = vpop.f32.mrb[0].mxu0
    %v1167 = vadd.f32 %v1088, %v1166
    %v1168 = vpop.f32.mrb[0].mxu0
    %1169 = vdwg.mxu0
    %v1170 = vmul.f32 %v1162, %v1162
    %v1171 = vmul.f32 %v1167, %v1167
    %v1172 = vmul.f32 %v1162, %v1170
    %v1173 = vmul.f32 %v1167, %v1171
    %v1174 = vmul.f32 %v1172, 0.044715
    %v1175 = vmul.f32 %v1173, 0.044715
    %v1176 = vadd.f32 %v1162, %v1174
    %v1177 = vadd.f32 %v1167, %v1175
    %v1178 = vmul.f32 %v1176, 0.7978846
    %v1179 = vmul.f32 %v1177, 0.7978846
    %v1180 = vtanh.pop %v1178
    %v1181 = vtanh.pop %v1179
    %v1182 = vadd.f32 %v1180, 1.0
    %v1183 = vadd.f32 %v1181, 1.0
    %v1184 = vmul.f32 %v1182, 0.5
    %v1185 = vmul.f32 %v1183, 0.5
    %v1186 = vmul.f32 %v1162, %v1184
    %v1187 = vmul.f32 %v1167, %v1185
    %v1188 = vld [vmem:[%s7] sm:$0xff]
    %v1189 = vld [vmem:[%s7 + $0x8] sm:$0xff]
    %v1190 = vld [vmem:[%s7 + $0x10] sm:$0xff]
    %v1191 = vld [vmem:[%s7 + $0x18] sm:$0xff]
    %v1192 = vld [vmem:[%s7 + $0x20] sm:$0xff]
    %v1193 = vld [vmem:[%s7 + $0x28] sm:$0xff]
    %v1194 = vld [vmem:[%s7 + $0x30] sm:$0xff]
    %v1195 = vld [vmem:[%s7 + $0x38] sm:$0xff]
    %v1196 = vlaneseq
    %v1197 = vshrl.u32 %v1196, 7
    %v1198 = vsub.s32 5, %v1197
    %v1199 = vrot.slane %v113, %v1198
    %vm1200 = vcmask 523264
    %v1202 = vsel %vm1200, %v1186, 0
    %v1205 = vsel %vm1200, %v1187, 0
    %1207 = vmatprep.subr.mxu0 0.0
    %1208 = vmatpush1.msra.mxu0 %v1188
    %1209 = vmatprep.subr.mxu0 0.0
    %1210 = vmatpush1.msra.mxu0 %v1189
    %1211 = vmatprep.subr.mxu0 0.0
    %1212 = vmatpush1.msra.mxu0 %v1190
    %1213 = vmatprep.subr.mxu0 0.0
    %1214 = vmatpush1.msra.mxu0 %v1191
    %1215 = vmatprep.subr.mxu0 0.0
    %1216 = vmatpush1.msra.mxu0 %v1192
    %1217 = vmatprep.subr.mxu0 0.0
    %1218 = vmatpush1.msra.mxu0 %v1193
    %1219 = vmatprep.subr.mxu0 0.0
    %1220 = vmatpush1.msra.mxu0 %v1194
    %1221 = vmatprep.subr.mxu0 0.0
    %1222 = vmatpush1.msra.mxu0 %v1195
    %1223 = vmatprep.subr.mxu0 0.0
    %1224 = vmatpush1.msra.mxu0 0.0
    %1225 = vmatprep.subr.mxu0 0.0
    %1226 = vmatpush1.msra.mxu0 0.0
    %1227 = vmatprep.subr.mxu0 0.0
    %1228 = vmatpush1.msra.mxu0 0.0
    %1229 = vmatprep.subr.mxu0 0.0
    %1230 = vmatpush1.msra.mxu0 0.0
    %1231 = vmatprep.subr.mxu0 0.0
    %1232 = vmatpush1.msra.mxu0 0.0
    %1233 = vmatprep.subr.mxu0 0.0
    %1234 = vmatpush1.msra.mxu0 0.0
    %1235 = vmatprep.subr.mxu0 0.0
    %1236 = vmatpush1.msra.mxu0 0.0
    %1237 = vmatprep.subr.mxu0 0.0
    %1238 = vmatpush1.msra.mxu0 0.0
    %1239 = vmatprep.subr.mxu0 0.0
    %1240 = vmatpush1.msra.mxu0 0.0
    %1241 = vmatprep.subr.mxu0 0.0
    %1242 = vmatpush1.msra.mxu0 0.0
    %1243 = vmatprep.subr.mxu0 0.0
    %1244 = vmatpush1.msra.mxu0 0.0
    %1245 = vmatprep.subr.mxu0 0.0
    %1246 = vmatpush1.msra.mxu0 0.0
    %1247 = vmatprep.subr.mxu0 0.0
    %1248 = vmatpush1.msra.mxu0 0.0
    %1249 = vmatprep.subr.mxu0 0.0
    %1250 = vmatpush1.msra.mxu0 0.0
    %1251 = vmatprep.subr.mxu0 0.0
    %1252 = vmatpush1.msra.mxu0 0.0
    %1253 = vmatprep.subr.mxu0 0.0
    %1254 = vmatpush1.msra.mxu0 0.0
    %1255 = vmatprep.subr.mxu0 0.0
    %1256 = vmatpush1.msra.mxu0 0.0
    %1257 = vmatprep.subr.mxu0 0.0
    %1258 = vmatpush1.msra.mxu0 0.0
    %1259 = vmatprep.subr.mxu0 0.0
    %1260 = vmatpush1.msra.mxu0 0.0
    %1261 = vmatprep.subr.mxu0 0.0
    %1262 = vmatpush1.msra.mxu0 0.0
    %1263 = vmatprep.subr.mxu0 0.0
    %1264 = vmatpush1.msra.mxu0 0.0
    %1265 = vmatprep.subr.mxu0 0.0
    %1266 = vmatpush1.msra.mxu0 0.0
    %1267 = vmatprep.subr.mxu0 0.0
    %1268 = vmatpush1.msra.mxu0 0.0
    %1269 = vmatprep.subr.mxu0 0.0
    %1270 = vmatpush1.msra.mxu0 0.0
    %1271 = vmatprep.mubr.f32.mxu0 0.0
    %1272 = vmatmul.mubr.f32.gmra.mrb[0].mxu0 %v1202
    %v1273 = vpop.f32.mrb[0].mxu0
    %v1274 = vadd.f32 %v1199, %v1273
    %v1275 = vpop.f32.mrb[0].mxu0
    %1276 = vmatprep.mubr.f32.mxu0 0.0
    %1277 = vmatmul.mubr.f32.gmra.mrb[0].mxu0 %v1205
    %v1278 = vpop.f32.mrb[0].mxu0
    %v1279 = vadd.f32 %v1199, %v1278
    %v1280 = vpop.f32.mrb[0].mxu0
    %1281 = vdwg.mxu0
    %v1282 = vadd.f32 %v1274, %v1079
    %v1283 = vadd.f32 %v1279, %v1080
    %v1284 = vsel %vm39, %v1282, 0.0
    %1285 = vadd.xlane.f32.xlu0 %v1284
    %v1286 = vpop.xlane.xlu0 %1285
    %v1287 = vsel %vm39, %v1283, 0.0
    %1288 = vadd.xlane.f32.xlu0 %v1287
    %v1289 = vpop.xlane.xlu0 %1288
    %v1290 = vmul.f32 %v1286, %v46
    %v1291 = vmul.f32 %v1289, %v46
    %v1292 = vsub.f32 %v1282, %v1290
    %v1293 = vsub.f32 %v1283, %v1291
    %v1294 = vmul.f32 %v1292, %v1292
    %v1295 = vmul.f32 %v1293, %v1293
    %v1296 = vsel %vm39, %v1294, 0.0
    %1297 = vadd.xlane.f32.xlu0 %v1296
    %v1298 = vpop.xlane.xlu0 %1297
    %v1299 = vsel %vm39, %v1295, 0.0
    %1300 = vadd.xlane.f32.xlu0 %v1299
    %v1301 = vpop.xlane.xlu0 %1300
    %v1302 = vmul.f32 %v1298, %v46
    %v1303 = vmul.f32 %v1301, %v46
    %v1304 = vadd.f32 %v1302, 1e-12
    %v1305 = vadd.f32 %v1303, 1e-12
    %v1306 = vrsqrt.pop %v1304
    %v1307 = vrsqrt.pop %v1305
    %v1308 = vmul.f32 %v1292, %v1306
    %v1309 = vmul.f32 %v1293, %v1307
    %v1310 = vlaneseq
    %v1311 = vshrl.u32 %v1310, 7
    %v1312 = vsub.s32 6, %v1311
    %v1313 = vrot.slane %v113, %v1312
    %v1314 = vmul.f32 %v1308, %v1313
    %v1315 = vmul.f32 %v1309, %v1313
    %v1316 = vlaneseq
    %v1317 = vshrl.u32 %v1316, 7
    %v1318 = vsub.s32 7, %v1317
    %v1319 = vrot.slane %v113, %v1318
    %v1320 = vadd.f32 %v1314, %v1319
    %v1321 = vadd.f32 %v1315, %v1319
    %s1322 = scalar_lea.vmem %s2, 8
    %v1323 = vld [vmem:[%s1322] sm:$0xff]
    %s1324 = scalar_lea.vmem %s4, 32
    %v1325 = vld [vmem:[%s1324] sm:$0xff]
    %v1326 = vld [vmem:[%s1324 + $0x8] sm:$0xff]
    %v1327 = vld [vmem:[%s1324 + $0x10] sm:$0xff]
    %v1328 = vld [vmem:[%s1324 + $0x18] sm:$0xff]
    %v1329 = vlaneseq
    %v1330 = vshrl.u32 %v1329, 7
    %v1331 = vsub.s32 0, %v1330
    %v1332 = vrot.slane %v1323, %v1331
    %v1334 = vsel %vm39, %v1320, 0
    %v1337 = vsel %vm39, %v1321, 0
    %1339 = vmatprep.subr.mxu0 0.0
    %1340 = vmatpush1.msra.mxu0 %v1325
    %1341 = vmatprep.subr.mxu0 0.0
    %1342 = vmatpush1.msra.mxu0 %v1326
    %1343 = vmatprep.subr.mxu0 0.0
    %1344 = vmatpush1.msra.mxu0 %v1327
    %1345 = vmatprep.subr.mxu0 0.0
    %1346 = vmatpush1.msra.mxu0 %v1328
    %1347 = vmatprep.subr.mxu0 0.0
    %1348 = vmatpush1.msra.mxu0 0.0
    %1349 = vmatprep.subr.mxu0 0.0
    %1350 = vmatpush1.msra.mxu0 0.0
    %1351 = vmatprep.subr.mxu0 0.0
    %1352 = vmatpush1.msra.mxu0 0.0
    %1353 = vmatprep.subr.mxu0 0.0
    %1354 = vmatpush1.msra.mxu0 0.0
    %1355 = vmatprep.subr.mxu0 0.0
    %1356 = vmatpush1.msra.mxu0 0.0
    %1357 = vmatprep.subr.mxu0 0.0
    %1358 = vmatpush1.msra.mxu0 0.0
    %1359 = vmatprep.subr.mxu0 0.0
    %1360 = vmatpush1.msra.mxu0 0.0
    %1361 = vmatprep.subr.mxu0 0.0
    %1362 = vmatpush1.msra.mxu0 0.0
    %1363 = vmatprep.subr.mxu0 0.0
    %1364 = vmatpush1.msra.mxu0 0.0
    %1365 = vmatprep.subr.mxu0 0.0
    %1366 = vmatpush1.msra.mxu0 0.0
    %1367 = vmatprep.subr.mxu0 0.0
    %1368 = vmatpush1.msra.mxu0 0.0
    %1369 = vmatprep.subr.mxu0 0.0
    %1370 = vmatpush1.msra.mxu0 0.0
    %1371 = vmatprep.subr.mxu0 0.0
    %1372 = vmatpush1.msra.mxu0 0.0
    %1373 = vmatprep.subr.mxu0 0.0
    %1374 = vmatpush1.msra.mxu0 0.0
    %1375 = vmatprep.subr.mxu0 0.0
    %1376 = vmatpush1.msra.mxu0 0.0
    %1377 = vmatprep.subr.mxu0 0.0
    %1378 = vmatpush1.msra.mxu0 0.0
    %1379 = vmatprep.subr.mxu0 0.0
    %1380 = vmatpush1.msra.mxu0 0.0
    %1381 = vmatprep.subr.mxu0 0.0
    %1382 = vmatpush1.msra.mxu0 0.0
    %1383 = vmatprep.subr.mxu0 0.0
    %1384 = vmatpush1.msra.mxu0 0.0
    %1385 = vmatprep.subr.mxu0 0.0
    %1386 = vmatpush1.msra.mxu0 0.0
    %1387 = vmatprep.subr.mxu0 0.0
    %1388 = vmatpush1.msra.mxu0 0.0
    %1389 = vmatprep.subr.mxu0 0.0
    %1390 = vmatpush1.msra.mxu0 0.0
    %1391 = vmatprep.subr.mxu0 0.0
    %1392 = vmatpush1.msra.mxu0 0.0
    %1393 = vmatprep.subr.mxu0 0.0
    %1394 = vmatpush1.msra.mxu0 0.0
    %1395 = vmatprep.subr.mxu0 0.0
    %1396 = vmatpush1.msra.mxu0 0.0
    %1397 = vmatprep.subr.mxu0 0.0
    %1398 = vmatpush1.msra.mxu0 0.0
    %1399 = vmatprep.subr.mxu0 0.0
    %1400 = vmatpush1.msra.mxu0 0.0
    %1401 = vmatprep.subr.mxu0 0.0
    %1402 = vmatpush1.msra.mxu0 0.0
    %1403 = vmatprep.mubr.f32.mxu0 0.0
    %1404 = vmatmul.mubr.f32.gmra.mrb[0].mxu0 %v1334
    %v1405 = vpop.f32.mrb[0].mxu0
    %v1406 = vadd.f32 %v1332, %v1405
    %v1407 = vpop.f32.mrb[0].mxu0
    %1408 = vmatprep.mubr.f32.mxu0 0.0
    %1409 = vmatmul.mubr.f32.gmra.mrb[0].mxu0 %v1337
    %v1410 = vpop.f32.mrb[0].mxu0
    %v1411 = vadd.f32 %v1332, %v1410
    %v1412 = vpop.f32.mrb[0].mxu0
    %1413 = vdwg.mxu0
    %1416 = vrot.lane.b32.xlu0 %v1406, 112
    %v1417 = vpop.permute.xlu0 %1416
    %1418 = vrot.lane.b32.xlu0 %v1411, 112
    %v1419 = vpop.permute.xlu0 %1418
    %1420 = vrot.lane.b32.xlu0 %v1406, 96
    %v1421 = vpop.permute.xlu0 %1420
    %v1422 = vsel %vm211, %v1406, 0
    %v1424 = vsel %vm211, %v1421, 0
    %1426 = vmatprep.subr.mxu0 0.0
    %1427 = vmatpush1.xpose.msra.mxu0 %v1424
    %1428 = vmatprep.subr.mxu0 0.0
    %1429 = vmatpush1.xpose.msra.mxu0 0.0
    %1430 = vmatprep.subr.mxu0 0.0
    %1431 = vmatpush1.xpose.msra.mxu0 0.0
    %1432 = vmatprep.subr.mxu0 0.0
    %1433 = vmatpush1.xpose.msra.mxu0 0.0
    %1434 = vmatprep.subr.mxu0 0.0
    %1435 = vmatpush1.xpose.msra.mxu0 0.0
    %1436 = vmatprep.subr.mxu0 0.0
    %1437 = vmatpush1.xpose.msra.mxu0 0.0
    %1438 = vmatprep.subr.mxu0 0.0
    %1439 = vmatpush1.xpose.msra.mxu0 0.0
    %1440 = vmatprep.subr.mxu0 0.0
    %1441 = vmatpush1.xpose.msra.mxu0 0.0
    %1442 = vmatprep.subr.mxu0 0.0
    %1443 = vmatpush1.xpose.msra.mxu0 0.0
    %1444 = vmatprep.subr.mxu0 0.0
    %1445 = vmatpush1.xpose.msra.mxu0 0.0
    %1446 = vmatprep.subr.mxu0 0.0
    %1447 = vmatpush1.xpose.msra.mxu0 0.0
    %1448 = vmatprep.subr.mxu0 0.0
    %1449 = vmatpush1.xpose.msra.mxu0 0.0
    %1450 = vmatprep.subr.mxu0 0.0
    %1451 = vmatpush1.xpose.msra.mxu0 0.0
    %1452 = vmatprep.subr.mxu0 0.0
    %1453 = vmatpush1.xpose.msra.mxu0 0.0
    %1454 = vmatprep.subr.mxu0 0.0
    %1455 = vmatpush1.xpose.msra.mxu0 0.0
    %1456 = vmatprep.subr.mxu0 0.0
    %1457 = vmatpush1.xpose.msra.mxu0 0.0
    %1458 = vmatprep.subr.mxu0 0.0
    %1459 = vmatpush1.xpose.msra.mxu0 0.0
    %1460 = vmatprep.subr.mxu0 0.0
    %1461 = vmatpush1.xpose.msra.mxu0 0.0
    %1462 = vmatprep.subr.mxu0 0.0
    %1463 = vmatpush1.xpose.msra.mxu0 0.0
    %1464 = vmatprep.subr.mxu0 0.0
    %1465 = vmatpush1.xpose.msra.mxu0 0.0
    %1466 = vmatprep.subr.mxu0 0.0
    %1467 = vmatpush1.xpose.msra.mxu0 0.0
    %1468 = vmatprep.subr.mxu0 0.0
    %1469 = vmatpush1.xpose.msra.mxu0 0.0
    %1470 = vmatprep.subr.mxu0 0.0
    %1471 = vmatpush1.xpose.msra.mxu0 0.0
    %1472 = vmatprep.subr.mxu0 0.0
    %1473 = vmatpush1.xpose.msra.mxu0 0.0
    %1474 = vmatprep.subr.mxu0 0.0
    %1475 = vmatpush1.xpose.msra.mxu0 0.0
    %1476 = vmatprep.subr.mxu0 0.0
    %1477 = vmatpush1.xpose.msra.mxu0 0.0
    %1478 = vmatprep.subr.mxu0 0.0
    %1479 = vmatpush1.xpose.msra.mxu0 0.0
    %1480 = vmatprep.subr.mxu0 0.0
    %1481 = vmatpush1.xpose.msra.mxu0 0.0
    %1482 = vmatprep.subr.mxu0 0.0
    %1483 = vmatpush1.xpose.msra.mxu0 0.0
    %1484 = vmatprep.subr.mxu0 0.0
    %1485 = vmatpush1.xpose.msra.mxu0 0.0
    %1486 = vmatprep.subr.mxu0 0.0
    %1487 = vmatpush1.xpose.msra.mxu0 0.0
    %1488 = vmatprep.subr.mxu0 0.0
    %1489 = vmatpush1.xpose.msra.mxu0 0.0
    %1490 = vmatprep.mubr.f32.mxu0 0.0
    %1491 = vmatmul.mubr.f32.gmra.mrb[0].mxu0 %v1422
    %v1492 = vpop.f32.mrb[0].mxu0
    %v1493 = vadd.f32 %v106, %v1492
    %v1494 = vpop.f32.mrb[0].mxu0
    %1495 = vdwg.mxu0
    %1496 = vrot.lane.b32.xlu0 %v1411, 96
    %v1497 = vpop.permute.xlu0 %1496
    %v1498 = vsel %vm211, %v1411, 0
    %v1500 = vsel %vm211, %v1497, 0
    %1502 = vmatprep.subr.mxu0 0.0
    %1503 = vmatpush1.xpose.msra.mxu0 %v1500
    %1504 = vmatprep.subr.mxu0 0.0
    %1505 = vmatpush1.xpose.msra.mxu0 0.0
    %1506 = vmatprep.subr.mxu0 0.0
    %1507 = vmatpush1.xpose.msra.mxu0 0.0
    %1508 = vmatprep.subr.mxu0 0.0
    %1509 = vmatpush1.xpose.msra.mxu0 0.0
    %1510 = vmatprep.subr.mxu0 0.0
    %1511 = vmatpush1.xpose.msra.mxu0 0.0
    %1512 = vmatprep.subr.mxu0 0.0
    %1513 = vmatpush1.xpose.msra.mxu0 0.0
    %1514 = vmatprep.subr.mxu0 0.0
    %1515 = vmatpush1.xpose.msra.mxu0 0.0
    %1516 = vmatprep.subr.mxu0 0.0
    %1517 = vmatpush1.xpose.msra.mxu0 0.0
    %1518 = vmatprep.subr.mxu0 0.0
    %1519 = vmatpush1.xpose.msra.mxu0 0.0
    %1520 = vmatprep.subr.mxu0 0.0
    %1521 = vmatpush1.xpose.msra.mxu0 0.0
    %1522 = vmatprep.subr.mxu0 0.0
    %1523 = vmatpush1.xpose.msra.mxu0 0.0
    %1524 = vmatprep.subr.mxu0 0.0
    %1525 = vmatpush1.xpose.msra.mxu0 0.0
    %1526 = vmatprep.subr.mxu0 0.0
    %1527 = vmatpush1.xpose.msra.mxu0 0.0
    %1528 = vmatprep.subr.mxu0 0.0
    %1529 = vmatpush1.xpose.msra.mxu0 0.0
    %1530 = vmatprep.subr.mxu0 0.0
    %1531 = vmatpush1.xpose.msra.mxu0 0.0
    %1532 = vmatprep.subr.mxu0 0.0
    %1533 = vmatpush1.xpose.msra.mxu0 0.0
    %1534 = vmatprep.subr.mxu0 0.0
    %1535 = vmatpush1.xpose.msra.mxu0 0.0
    %1536 = vmatprep.subr.mxu0 0.0
    %1537 = vmatpush1.xpose.msra.mxu0 0.0
    %1538 = vmatprep.subr.mxu0 0.0
    %1539 = vmatpush1.xpose.msra.mxu0 0.0
    %1540 = vmatprep.subr.mxu0 0.0
    %1541 = vmatpush1.xpose.msra.mxu0 0.0
    %1542 = vmatprep.subr.mxu0 0.0
    %1543 = vmatpush1.xpose.msra.mxu0 0.0
    %1544 = vmatprep.subr.mxu0 0.0
    %1545 = vmatpush1.xpose.msra.mxu0 0.0
    %1546 = vmatprep.subr.mxu0 0.0
    %1547 = vmatpush1.xpose.msra.mxu0 0.0
    %1548 = vmatprep.subr.mxu0 0.0
    %1549 = vmatpush1.xpose.msra.mxu0 0.0
    %1550 = vmatprep.subr.mxu0 0.0
    %1551 = vmatpush1.xpose.msra.mxu0 0.0
    %1552 = vmatprep.subr.mxu0 0.0
    %1553 = vmatpush1.xpose.msra.mxu0 0.0
    %1554 = vmatprep.subr.mxu0 0.0
    %1555 = vmatpush1.xpose.msra.mxu0 0.0
    %1556 = vmatprep.subr.mxu0 0.0
    %1557 = vmatpush1.xpose.msra.mxu0 0.0
    %1558 = vmatprep.subr.mxu0 0.0
    %1559 = vmatpush1.xpose.msra.mxu0 0.0
    %1560 = vmatprep.subr.mxu0 0.0
    %1561 = vmatpush1.xpose.msra.mxu0 0.0
    %1562 = vmatprep.subr.mxu0 0.0
    %1563 = vmatpush1.xpose.msra.mxu0 0.0
    %1564 = vmatprep.subr.mxu0 0.0
    %1565 = vmatpush1.xpose.msra.mxu0 0.0
    %1566 = vmatprep.mubr.f32.mxu0 0.0
    %1567 = vmatmul.mubr.f32.gmra.mrb[0].mxu0 %v1498
    %v1568 = vpop.f32.mrb[0].mxu0
    %v1569 = vadd.f32 %v110, %v1568
    %v1570 = vpop.f32.mrb[0].mxu0
    %1571 = vdwg.mxu0
    %1572 = vrot.lane.b32.xlu0 %v1417, 96
    %v1573 = vpop.permute.xlu0 %1572
    %v1574 = vsel %vm211, %v1417, 0
    %v1576 = vsel %vm211, %v1573, 0
    %1578 = vmatprep.subr.mxu0 0.0
    %1579 = vmatpush1.xpose.msra.mxu0 %v1576
    %1580 = vmatprep.subr.mxu0 0.0
    %1581 = vmatpush1.xpose.msra.mxu0 0.0
    %1582 = vmatprep.subr.mxu0 0.0
    %1583 = vmatpush1.xpose.msra.mxu0 0.0
    %1584 = vmatprep.subr.mxu0 0.0
    %1585 = vmatpush1.xpose.msra.mxu0 0.0
    %1586 = vmatprep.subr.mxu0 0.0
    %1587 = vmatpush1.xpose.msra.mxu0 0.0
    %1588 = vmatprep.subr.mxu0 0.0
    %1589 = vmatpush1.xpose.msra.mxu0 0.0
    %1590 = vmatprep.subr.mxu0 0.0
    %1591 = vmatpush1.xpose.msra.mxu0 0.0
    %1592 = vmatprep.subr.mxu0 0.0
    %1593 = vmatpush1.xpose.msra.mxu0 0.0
    %1594 = vmatprep.subr.mxu0 0.0
    %1595 = vmatpush1.xpose.msra.mxu0 0.0
    %1596 = vmatprep.subr.mxu0 0.0
    %1597 = vmatpush1.xpose.msra.mxu0 0.0
    %1598 = vmatprep.subr.mxu0 0.0
    %1599 = vmatpush1.xpose.msra.mxu0 0.0
    %1600 = vmatprep.subr.mxu0 0.0
    %1601 = vmatpush1.xpose.msra.mxu0 0.0
    %1602 = vmatprep.subr.mxu0 0.0
    %1603 = vmatpush1.xpose.msra.mxu0 0.0
    %1604 = vmatprep.subr.mxu0 0.0
    %1605 = vmatpush1.xpose.msra.mxu0 0.0
    %1606 = vmatprep.subr.mxu0 0.0
    %1607 = vmatpush1.xpose.msra.mxu0 0.0
    %1608 = vmatprep.subr.mxu0 0.0
    %1609 = vmatpush1.xpose.msra.mxu0 0.0
    %1610 = vmatprep.subr.mxu0 0.0
    %1611 = vmatpush1.xpose.msra.mxu0 0.0
    %1612 = vmatprep.subr.mxu0 0.0
    %1613 = vmatpush1.xpose.msra.mxu0 0.0
    %1614 = vmatprep.subr.mxu0 0.0
    %1615 = vmatpush1.xpose.msra.mxu0 0.0
    %1616 = vmatprep.subr.mxu0 0.0
    %1617 = vmatpush1.xpose.msra.mxu0 0.0
    %1618 = vmatprep.subr.mxu0 0.0
    %1619 = vmatpush1.xpose.msra.mxu0 0.0
    %1620 = vmatprep.subr.mxu0 0.0
    %1621 = vmatpush1.xpose.msra.mxu0 0.0
    %1622 = vmatprep.subr.mxu0 0.0
    %1623 = vmatpush1.xpose.msra.mxu0 0.0
    %1624 = vmatprep.subr.mxu0 0.0
    %1625 = vmatpush1.xpose.msra.mxu0 0.0
    %1626 = vmatprep.subr.mxu0 0.0
    %1627 = vmatpush1.xpose.msra.mxu0 0.0
    %1628 = vmatprep.subr.mxu0 0.0
    %1629 = vmatpush1.xpose.msra.mxu0 0.0
    %1630 = vmatprep.subr.mxu0 0.0
    %1631 = vmatpush1.xpose.msra.mxu0 0.0
    %1632 = vmatprep.subr.mxu0 0.0
    %1633 = vmatpush1.xpose.msra.mxu0 0.0
    %1634 = vmatprep.subr.mxu0 0.0
    %1635 = vmatpush1.xpose.msra.mxu0 0.0
    %1636 = vmatprep.subr.mxu0 0.0
    %1637 = vmatpush1.xpose.msra.mxu0 0.0
    %1638 = vmatprep.subr.mxu0 0.0
    %1639 = vmatpush1.xpose.msra.mxu0 0.0
    %1640 = vmatprep.subr.mxu0 0.0
    %1641 = vmatpush1.xpose.msra.mxu0 0.0
    %1642 = vmatprep.mubr.f32.mxu0 0.0
    %1643 = vmatmul.mubr.f32.gmra.mrb[0].mxu0 %v1574
    %v1644 = vpop.f32.mrb[0].mxu0
    %v1645 = vadd.f32 %v106, %v1644
    %v1646 = vpop.f32.mrb[0].mxu0
    %1647 = vdwg.mxu0
    %1648 = vrot.lane.b32.xlu0 %v1419, 96
    %v1649 = vpop.permute.xlu0 %1648
    %v1650 = vsel %vm211, %v1419, 0
    %v1652 = vsel %vm211, %v1649, 0
    %1654 = vmatprep.subr.mxu0 0.0
    %1655 = vmatpush1.xpose.msra.mxu0 %v1652
    %1656 = vmatprep.subr.mxu0 0.0
    %1657 = vmatpush1.xpose.msra.mxu0 0.0
    %1658 = vmatprep.subr.mxu0 0.0
    %1659 = vmatpush1.xpose.msra.mxu0 0.0
    %1660 = vmatprep.subr.mxu0 0.0
    %1661 = vmatpush1.xpose.msra.mxu0 0.0
    %1662 = vmatprep.subr.mxu0 0.0
    %1663 = vmatpush1.xpose.msra.mxu0 0.0
    %1664 = vmatprep.subr.mxu0 0.0
    %1665 = vmatpush1.xpose.msra.mxu0 0.0
    %1666 = vmatprep.subr.mxu0 0.0
    %1667 = vmatpush1.xpose.msra.mxu0 0.0
    %1668 = vmatprep.subr.mxu0 0.0
    %1669 = vmatpush1.xpose.msra.mxu0 0.0
    %1670 = vmatprep.subr.mxu0 0.0
    %1671 = vmatpush1.xpose.msra.mxu0 0.0
    %1672 = vmatprep.subr.mxu0 0.0
    %1673 = vmatpush1.xpose.msra.mxu0 0.0
    %1674 = vmatprep.subr.mxu0 0.0
    %1675 = vmatpush1.xpose.msra.mxu0 0.0
    %1676 = vmatprep.subr.mxu0 0.0
    %1677 = vmatpush1.xpose.msra.mxu0 0.0
    %1678 = vmatprep.subr.mxu0 0.0
    %1679 = vmatpush1.xpose.msra.mxu0 0.0
    %1680 = vmatprep.subr.mxu0 0.0
    %1681 = vmatpush1.xpose.msra.mxu0 0.0
    %1682 = vmatprep.subr.mxu0 0.0
    %1683 = vmatpush1.xpose.msra.mxu0 0.0
    %1684 = vmatprep.subr.mxu0 0.0
    %1685 = vmatpush1.xpose.msra.mxu0 0.0
    %1686 = vmatprep.subr.mxu0 0.0
    %1687 = vmatpush1.xpose.msra.mxu0 0.0
    %1688 = vmatprep.subr.mxu0 0.0
    %1689 = vmatpush1.xpose.msra.mxu0 0.0
    %1690 = vmatprep.subr.mxu0 0.0
    %1691 = vmatpush1.xpose.msra.mxu0 0.0
    %1692 = vmatprep.subr.mxu0 0.0
    %1693 = vmatpush1.xpose.msra.mxu0 0.0
    %1694 = vmatprep.subr.mxu0 0.0
    %1695 = vmatpush1.xpose.msra.mxu0 0.0
    %1696 = vmatprep.subr.mxu0 0.0
    %1697 = vmatpush1.xpose.msra.mxu0 0.0
    %1698 = vmatprep.subr.mxu0 0.0
    %1699 = vmatpush1.xpose.msra.mxu0 0.0
    %1700 = vmatprep.subr.mxu0 0.0
    %1701 = vmatpush1.xpose.msra.mxu0 0.0
    %1702 = vmatprep.subr.mxu0 0.0
    %1703 = vmatpush1.xpose.msra.mxu0 0.0
    %1704 = vmatprep.subr.mxu0 0.0
    %1705 = vmatpush1.xpose.msra.mxu0 0.0
    %1706 = vmatprep.subr.mxu0 0.0
    %1707 = vmatpush1.xpose.msra.mxu0 0.0
    %1708 = vmatprep.subr.mxu0 0.0
    %1709 = vmatpush1.xpose.msra.mxu0 0.0
    %1710 = vmatprep.subr.mxu0 0.0
    %1711 = vmatpush1.xpose.msra.mxu0 0.0
    %1712 = vmatprep.subr.mxu0 0.0
    %1713 = vmatpush1.xpose.msra.mxu0 0.0
    %1714 = vmatprep.subr.mxu0 0.0
    %1715 = vmatpush1.xpose.msra.mxu0 0.0
    %1716 = vmatprep.subr.mxu0 0.0
    %1717 = vmatpush1.xpose.msra.mxu0 0.0
    %1718 = vmatprep.mubr.f32.mxu0 0.0
    %1719 = vmatmul.mubr.f32.gmra.mrb[0].mxu0 %v1650
    %v1720 = vpop.f32.mrb[0].mxu0
    %v1721 = vadd.f32 %v110, %v1720
    %v1722 = vpop.f32.mrb[0].mxu0
    %1723 = vdwg.mxu0
    %v1724 = vsel %vm514, %v1493, -inf
    %1725 = vmax.xlane.f32.xlu0 %v1724
    %v1726 = vpop.xlane.xlu0 %1725
    %v1727 = vsel %vm514, %v1569, -inf
    %1728 = vmax.xlane.f32.xlu0 %v1727
    %v1729 = vpop.xlane.xlu0 %1728
    %v1730 = vsel %vm514, %v1645, -inf
    %1731 = vmax.xlane.f32.xlu0 %v1730
    %v1732 = vpop.xlane.xlu0 %1731
    %v1733 = vsel %vm514, %v1721, -inf
    %1734 = vmax.xlane.f32.xlu0 %v1733
    %v1735 = vpop.xlane.xlu0 %1734
    %v1736 = vsub.f32 %v1493, %v1726
    %v1737 = vsub.f32 %v1569, %v1729
    %v1738 = vsub.f32 %v1645, %v1732
    %v1739 = vsub.f32 %v1721, %v1735
    %v1740 = vmul.f32 %v1736, 1.442695
    %v1741 = vpow.pop %v1740
    %v1742 = vmul.f32 %v1737, 1.442695
    %v1743 = vpow.pop %v1742
    %v1744 = vmul.f32 %v1738, 1.442695
    %v1745 = vpow.pop %v1744
    %v1746 = vmul.f32 %v1739, 1.442695
    %v1747 = vpow.pop %v1746
    %v1748 = vsel %vm514, %v1741, 0.0
    %1749 = vadd.xlane.f32.xlu0 %v1748
    %v1750 = vpop.xlane.xlu0 %1749
    %v1751 = vsel %vm514, %v1743, 0.0
    %1752 = vadd.xlane.f32.xlu0 %v1751
    %v1753 = vpop.xlane.xlu0 %1752
    %v1754 = vsel %vm514, %v1745, 0.0
    %1755 = vadd.xlane.f32.xlu0 %v1754
    %v1756 = vpop.xlane.xlu0 %1755
    %v1757 = vsel %vm514, %v1747, 0.0
    %1758 = vadd.xlane.f32.xlu0 %v1757
    %v1759 = vpop.xlane.xlu0 %1758
    %v1760 = vrcp.pop %v1750
    %v1761 = vrcp.pop %v1753
    %v1762 = vrcp.pop %v1756
    %v1763 = vrcp.pop %v1759
    %v1764 = vmul.f32 %v1741, %v1760
    %v1765 = vmul.f32 %v1743, %v1761
    %v1766 = vmul.f32 %v1745, %v1762
    %v1767 = vmul.f32 %v1747, %v1763
    %1768 = vrot.lane.b32.xlu0 %v1406, 64
    %v1769 = vpop.permute.xlu0 %1768
    %v1772 = vsel %vm514, %v1764, 0
    %1774 = vmatprep.subr.mxu0 0.0
    %1775 = vmatpush1.msra.mxu0 %v1769
    %1776 = vmatprep.subr.mxu0 0.0
    %1777 = vmatpush1.msra.mxu0 0.0
    %1778 = vmatprep.subr.mxu0 0.0
    %1779 = vmatpush1.msra.mxu0 0.0
    %1780 = vmatprep.subr.mxu0 0.0
    %1781 = vmatpush1.msra.mxu0 0.0
    %1782 = vmatprep.subr.mxu0 0.0
    %1783 = vmatpush1.msra.mxu0 0.0
    %1784 = vmatprep.subr.mxu0 0.0
    %1785 = vmatpush1.msra.mxu0 0.0
    %1786 = vmatprep.subr.mxu0 0.0
    %1787 = vmatpush1.msra.mxu0 0.0
    %1788 = vmatprep.subr.mxu0 0.0
    %1789 = vmatpush1.msra.mxu0 0.0
    %1790 = vmatprep.subr.mxu0 0.0
    %1791 = vmatpush1.msra.mxu0 0.0
    %1792 = vmatprep.subr.mxu0 0.0
    %1793 = vmatpush1.msra.mxu0 0.0
    %1794 = vmatprep.subr.mxu0 0.0
    %1795 = vmatpush1.msra.mxu0 0.0
    %1796 = vmatprep.subr.mxu0 0.0
    %1797 = vmatpush1.msra.mxu0 0.0
    %1798 = vmatprep.subr.mxu0 0.0
    %1799 = vmatpush1.msra.mxu0 0.0
    %1800 = vmatprep.subr.mxu0 0.0
    %1801 = vmatpush1.msra.mxu0 0.0
    %1802 = vmatprep.subr.mxu0 0.0
    %1803 = vmatpush1.msra.mxu0 0.0
    %1804 = vmatprep.subr.mxu0 0.0
    %1805 = vmatpush1.msra.mxu0 0.0
    %1806 = vmatprep.subr.mxu0 0.0
    %1807 = vmatpush1.msra.mxu0 0.0
    %1808 = vmatprep.subr.mxu0 0.0
    %1809 = vmatpush1.msra.mxu0 0.0
    %1810 = vmatprep.subr.mxu0 0.0
    %1811 = vmatpush1.msra.mxu0 0.0
    %1812 = vmatprep.subr.mxu0 0.0
    %1813 = vmatpush1.msra.mxu0 0.0
    %1814 = vmatprep.subr.mxu0 0.0
    %1815 = vmatpush1.msra.mxu0 0.0
    %1816 = vmatprep.subr.mxu0 0.0
    %1817 = vmatpush1.msra.mxu0 0.0
    %1818 = vmatprep.subr.mxu0 0.0
    %1819 = vmatpush1.msra.mxu0 0.0
    %1820 = vmatprep.subr.mxu0 0.0
    %1821 = vmatpush1.msra.mxu0 0.0
    %1822 = vmatprep.subr.mxu0 0.0
    %1823 = vmatpush1.msra.mxu0 0.0
    %1824 = vmatprep.subr.mxu0 0.0
    %1825 = vmatpush1.msra.mxu0 0.0
    %1826 = vmatprep.subr.mxu0 0.0
    %1827 = vmatpush1.msra.mxu0 0.0
    %1828 = vmatprep.subr.mxu0 0.0
    %1829 = vmatpush1.msra.mxu0 0.0
    %1830 = vmatprep.subr.mxu0 0.0
    %1831 = vmatpush1.msra.mxu0 0.0
    %1832 = vmatprep.subr.mxu0 0.0
    %1833 = vmatpush1.msra.mxu0 0.0
    %1834 = vmatprep.subr.mxu0 0.0
    %1835 = vmatpush1.msra.mxu0 0.0
    %1836 = vmatprep.subr.mxu0 0.0
    %1837 = vmatpush1.msra.mxu0 0.0
    %1838 = vmatprep.mubr.f32.mxu0 0.0
    %1839 = vmatmul.mubr.f32.gmra.mrb[0].mxu0 %v1772
    %v1840 = vpop.f32.mrb[0].mxu0
    %v1841 = vadd.f32 0.0, %v1840
    %v1842 = vpop.f32.mrb[0].mxu0
    %1843 = vdwg.mxu0
    %1844 = vrot.lane.b32.xlu0 %v1411, 64
    %v1845 = vpop.permute.xlu0 %1844
    %v1848 = vsel %vm514, %v1765, 0
    %1850 = vmatprep.subr.mxu0 0.0
    %1851 = vmatpush1.msra.mxu0 %v1845
    %1852 = vmatprep.subr.mxu0 0.0
    %1853 = vmatpush1.msra.mxu0 0.0
    %1854 = vmatprep.subr.mxu0 0.0
    %1855 = vmatpush1.msra.mxu0 0.0
    %1856 = vmatprep.subr.mxu0 0.0
    %1857 = vmatpush1.msra.mxu0 0.0
    %1858 = vmatprep.subr.mxu0 0.0
    %1859 = vmatpush1.msra.mxu0 0.0
    %1860 = vmatprep.subr.mxu0 0.0
    %1861 = vmatpush1.msra.mxu0 0.0
    %1862 = vmatprep.subr.mxu0 0.0
    %1863 = vmatpush1.msra.mxu0 0.0
    %1864 = vmatprep.subr.mxu0 0.0
    %1865 = vmatpush1.msra.mxu0 0.0
    %1866 = vmatprep.subr.mxu0 0.0
    %1867 = vmatpush1.msra.mxu0 0.0
    %1868 = vmatprep.subr.mxu0 0.0
    %1869 = vmatpush1.msra.mxu0 0.0
    %1870 = vmatprep.subr.mxu0 0.0
    %1871 = vmatpush1.msra.mxu0 0.0
    %1872 = vmatprep.subr.mxu0 0.0
    %1873 = vmatpush1.msra.mxu0 0.0
    %1874 = vmatprep.subr.mxu0 0.0
    %1875 = vmatpush1.msra.mxu0 0.0
    %1876 = vmatprep.subr.mxu0 0.0
    %1877 = vmatpush1.msra.mxu0 0.0
    %1878 = vmatprep.subr.mxu0 0.0
    %1879 = vmatpush1.msra.mxu0 0.0
    %1880 = vmatprep.subr.mxu0 0.0
    %1881 = vmatpush1.msra.mxu0 0.0
    %1882 = vmatprep.subr.mxu0 0.0
    %1883 = vmatpush1.msra.mxu0 0.0
    %1884 = vmatprep.subr.mxu0 0.0
    %1885 = vmatpush1.msra.mxu0 0.0
    %1886 = vmatprep.subr.mxu0 0.0
    %1887 = vmatpush1.msra.mxu0 0.0
    %1888 = vmatprep.subr.mxu0 0.0
    %1889 = vmatpush1.msra.mxu0 0.0
    %1890 = vmatprep.subr.mxu0 0.0
    %1891 = vmatpush1.msra.mxu0 0.0
    %1892 = vmatprep.subr.mxu0 0.0
    %1893 = vmatpush1.msra.mxu0 0.0
    %1894 = vmatprep.subr.mxu0 0.0
    %1895 = vmatpush1.msra.mxu0 0.0
    %1896 = vmatprep.subr.mxu0 0.0
    %1897 = vmatpush1.msra.mxu0 0.0
    %1898 = vmatprep.subr.mxu0 0.0
    %1899 = vmatpush1.msra.mxu0 0.0
    %1900 = vmatprep.subr.mxu0 0.0
    %1901 = vmatpush1.msra.mxu0 0.0
    %1902 = vmatprep.subr.mxu0 0.0
    %1903 = vmatpush1.msra.mxu0 0.0
    %1904 = vmatprep.subr.mxu0 0.0
    %1905 = vmatpush1.msra.mxu0 0.0
    %1906 = vmatprep.subr.mxu0 0.0
    %1907 = vmatpush1.msra.mxu0 0.0
    %1908 = vmatprep.subr.mxu0 0.0
    %1909 = vmatpush1.msra.mxu0 0.0
    %1910 = vmatprep.subr.mxu0 0.0
    %1911 = vmatpush1.msra.mxu0 0.0
    %1912 = vmatprep.subr.mxu0 0.0
    %1913 = vmatpush1.msra.mxu0 0.0
    %1914 = vmatprep.mubr.f32.mxu0 0.0
    %1915 = vmatmul.mubr.f32.gmra.mrb[0].mxu0 %v1848
    %v1916 = vpop.f32.mrb[0].mxu0
    %v1917 = vadd.f32 0.0, %v1916
    %v1918 = vpop.f32.mrb[0].mxu0
    %1919 = vdwg.mxu0
    %1920 = vrot.lane.b32.xlu0 %v1417, 64
    %v1921 = vpop.permute.xlu0 %1920
    %v1924 = vsel %vm514, %v1766, 0
    %1926 = vmatprep.subr.mxu0 0.0
    %1927 = vmatpush1.msra.mxu0 %v1921
    %1928 = vmatprep.subr.mxu0 0.0
    %1929 = vmatpush1.msra.mxu0 0.0
    %1930 = vmatprep.subr.mxu0 0.0
    %1931 = vmatpush1.msra.mxu0 0.0
    %1932 = vmatprep.subr.mxu0 0.0
    %1933 = vmatpush1.msra.mxu0 0.0
    %1934 = vmatprep.subr.mxu0 0.0
    %1935 = vmatpush1.msra.mxu0 0.0
    %1936 = vmatprep.subr.mxu0 0.0
    %1937 = vmatpush1.msra.mxu0 0.0
    %1938 = vmatprep.subr.mxu0 0.0
    %1939 = vmatpush1.msra.mxu0 0.0
    %1940 = vmatprep.subr.mxu0 0.0
    %1941 = vmatpush1.msra.mxu0 0.0
    %1942 = vmatprep.subr.mxu0 0.0
    %1943 = vmatpush1.msra.mxu0 0.0
    %1944 = vmatprep.subr.mxu0 0.0
    %1945 = vmatpush1.msra.mxu0 0.0
    %1946 = vmatprep.subr.mxu0 0.0
    %1947 = vmatpush1.msra.mxu0 0.0
    %1948 = vmatprep.subr.mxu0 0.0
    %1949 = vmatpush1.msra.mxu0 0.0
    %1950 = vmatprep.subr.mxu0 0.0
    %1951 = vmatpush1.msra.mxu0 0.0
    %1952 = vmatprep.subr.mxu0 0.0
    %1953 = vmatpush1.msra.mxu0 0.0
    %1954 = vmatprep.subr.mxu0 0.0
    %1955 = vmatpush1.msra.mxu0 0.0
    %1956 = vmatprep.subr.mxu0 0.0
    %1957 = vmatpush1.msra.mxu0 0.0
    %1958 = vmatprep.subr.mxu0 0.0
    %1959 = vmatpush1.msra.mxu0 0.0
    %1960 = vmatprep.subr.mxu0 0.0
    %1961 = vmatpush1.msra.mxu0 0.0
    %1962 = vmatprep.subr.mxu0 0.0
    %1963 = vmatpush1.msra.mxu0 0.0
    %1964 = vmatprep.subr.mxu0 0.0
    %1965 = vmatpush1.msra.mxu0 0.0
    %1966 = vmatprep.subr.mxu0 0.0
    %1967 = vmatpush1.msra.mxu0 0.0
    %1968 = vmatprep.subr.mxu0 0.0
    %1969 = vmatpush1.msra.mxu0 0.0
    %1970 = vmatprep.subr.mxu0 0.0
    %1971 = vmatpush1.msra.mxu0 0.0
    %1972 = vmatprep.subr.mxu0 0.0
    %1973 = vmatpush1.msra.mxu0 0.0
    %1974 = vmatprep.subr.mxu0 0.0
    %1975 = vmatpush1.msra.mxu0 0.0
    %1976 = vmatprep.subr.mxu0 0.0
    %1977 = vmatpush1.msra.mxu0 0.0
    %1978 = vmatprep.subr.mxu0 0.0
    %1979 = vmatpush1.msra.mxu0 0.0
    %1980 = vmatprep.subr.mxu0 0.0
    %1981 = vmatpush1.msra.mxu0 0.0
    %1982 = vmatprep.subr.mxu0 0.0
    %1983 = vmatpush1.msra.mxu0 0.0
    %1984 = vmatprep.subr.mxu0 0.0
    %1985 = vmatpush1.msra.mxu0 0.0
    %1986 = vmatprep.subr.mxu0 0.0
    %1987 = vmatpush1.msra.mxu0 0.0
    %1988 = vmatprep.subr.mxu0 0.0
    %1989 = vmatpush1.msra.mxu0 0.0
    %1990 = vmatprep.mubr.f32.mxu0 0.0
    %1991 = vmatmul.mubr.f32.gmra.mrb[0].mxu0 %v1924
    %v1992 = vpop.f32.mrb[0].mxu0
    %v1993 = vadd.f32 0.0, %v1992
    %v1994 = vpop.f32.mrb[0].mxu0
    %1995 = vdwg.mxu0
    %1996 = vrot.lane.b32.xlu0 %v1419, 64
    %v1997 = vpop.permute.xlu0 %1996
    %v2000 = vsel %vm514, %v1767, 0
    %2002 = vmatprep.subr.mxu0 0.0
    %2003 = vmatpush1.msra.mxu0 %v1997
    %2004 = vmatprep.subr.mxu0 0.0
    %2005 = vmatpush1.msra.mxu0 0.0
    %2006 = vmatprep.subr.mxu0 0.0
    %2007 = vmatpush1.msra.mxu0 0.0
    %2008 = vmatprep.subr.mxu0 0.0
    %2009 = vmatpush1.msra.mxu0 0.0
    %2010 = vmatprep.subr.mxu0 0.0
    %2011 = vmatpush1.msra.mxu0 0.0
    %2012 = vmatprep.subr.mxu0 0.0
    %2013 = vmatpush1.msra.mxu0 0.0
    %2014 = vmatprep.subr.mxu0 0.0
    %2015 = vmatpush1.msra.mxu0 0.0
    %2016 = vmatprep.subr.mxu0 0.0
    %2017 = vmatpush1.msra.mxu0 0.0
    %2018 = vmatprep.subr.mxu0 0.0
    %2019 = vmatpush1.msra.mxu0 0.0
    %2020 = vmatprep.subr.mxu0 0.0
    %2021 = vmatpush1.msra.mxu0 0.0
    %2022 = vmatprep.subr.mxu0 0.0
    %2023 = vmatpush1.msra.mxu0 0.0
    %2024 = vmatprep.subr.mxu0 0.0
    %2025 = vmatpush1.msra.mxu0 0.0
    %2026 = vmatprep.subr.mxu0 0.0
    %2027 = vmatpush1.msra.mxu0 0.0
    %2028 = vmatprep.subr.mxu0 0.0
    %2029 = vmatpush1.msra.mxu0 0.0
    %2030 = vmatprep.subr.mxu0 0.0
    %2031 = vmatpush1.msra.mxu0 0.0
    %2032 = vmatprep.subr.mxu0 0.0
    %2033 = vmatpush1.msra.mxu0 0.0
    %2034 = vmatprep.subr.mxu0 0.0
    %2035 = vmatpush1.msra.mxu0 0.0
    %2036 = vmatprep.subr.mxu0 0.0
    %2037 = vmatpush1.msra.mxu0 0.0
    %2038 = vmatprep.subr.mxu0 0.0
    %2039 = vmatpush1.msra.mxu0 0.0
    %2040 = vmatprep.subr.mxu0 0.0
    %2041 = vmatpush1.msra.mxu0 0.0
    %2042 = vmatprep.subr.mxu0 0.0
    %2043 = vmatpush1.msra.mxu0 0.0
    %2044 = vmatprep.subr.mxu0 0.0
    %2045 = vmatpush1.msra.mxu0 0.0
    %2046 = vmatprep.subr.mxu0 0.0
    %2047 = vmatpush1.msra.mxu0 0.0
    %2048 = vmatprep.subr.mxu0 0.0
    %2049 = vmatpush1.msra.mxu0 0.0
    %2050 = vmatprep.subr.mxu0 0.0
    %2051 = vmatpush1.msra.mxu0 0.0
    %2052 = vmatprep.subr.mxu0 0.0
    %2053 = vmatpush1.msra.mxu0 0.0
    %2054 = vmatprep.subr.mxu0 0.0
    %2055 = vmatpush1.msra.mxu0 0.0
    %2056 = vmatprep.subr.mxu0 0.0
    %2057 = vmatpush1.msra.mxu0 0.0
    %2058 = vmatprep.subr.mxu0 0.0
    %2059 = vmatpush1.msra.mxu0 0.0
    %2060 = vmatprep.subr.mxu0 0.0
    %2061 = vmatpush1.msra.mxu0 0.0
    %2062 = vmatprep.subr.mxu0 0.0
    %2063 = vmatpush1.msra.mxu0 0.0
    %2064 = vmatprep.subr.mxu0 0.0
    %2065 = vmatpush1.msra.mxu0 0.0
    %2066 = vmatprep.mubr.f32.mxu0 0.0
    %2067 = vmatmul.mubr.f32.gmra.mrb[0].mxu0 %v2000
    %v2068 = vpop.f32.mrb[0].mxu0
    %v2069 = vadd.f32 0.0, %v2068
    %v2070 = vpop.f32.mrb[0].mxu0
    %2071 = vdwg.mxu0
    %s2072 = scalar_lea.vmem %s5, 32
    %v2073 = vld [vmem:[%s2072] sm:$0xff]
    %v2074 = vld [vmem:[%s2072 + $0x8] sm:$0xff]
    %v2075 = vld [vmem:[%s2072 + $0x10] sm:$0xff]
    %v2076 = vld [vmem:[%s2072 + $0x18] sm:$0xff]
    %v2078 = vsel %vm211, %v1841, 0
    %v2081 = vsel %vm211, %v1917, 0
    %2083 = vmatprep.subr.mxu0 0.0
    %2084 = vmatpush1.msra.mxu0 %v2073
    %2085 = vmatprep.subr.mxu0 0.0
    %2086 = vmatpush1.msra.mxu0 %v2074
    %2087 = vmatprep.subr.mxu0 0.0
    %2088 = vmatpush1.msra.mxu0 0.0
    %2089 = vmatprep.subr.mxu0 0.0
    %2090 = vmatpush1.msra.mxu0 0.0
    %2091 = vmatprep.subr.mxu0 0.0
    %2092 = vmatpush1.msra.mxu0 0.0
    %2093 = vmatprep.subr.mxu0 0.0
    %2094 = vmatpush1.msra.mxu0 0.0
    %2095 = vmatprep.subr.mxu0 0.0
    %2096 = vmatpush1.msra.mxu0 0.0
    %2097 = vmatprep.subr.mxu0 0.0
    %2098 = vmatpush1.msra.mxu0 0.0
    %2099 = vmatprep.subr.mxu0 0.0
    %2100 = vmatpush1.msra.mxu0 0.0
    %2101 = vmatprep.subr.mxu0 0.0
    %2102 = vmatpush1.msra.mxu0 0.0
    %2103 = vmatprep.subr.mxu0 0.0
    %2104 = vmatpush1.msra.mxu0 0.0
    %2105 = vmatprep.subr.mxu0 0.0
    %2106 = vmatpush1.msra.mxu0 0.0
    %2107 = vmatprep.subr.mxu0 0.0
    %2108 = vmatpush1.msra.mxu0 0.0
    %2109 = vmatprep.subr.mxu0 0.0
    %2110 = vmatpush1.msra.mxu0 0.0
    %2111 = vmatprep.subr.mxu0 0.0
    %2112 = vmatpush1.msra.mxu0 0.0
    %2113 = vmatprep.subr.mxu0 0.0
    %2114 = vmatpush1.msra.mxu0 0.0
    %2115 = vmatprep.subr.mxu0 0.0
    %2116 = vmatpush1.msra.mxu0 0.0
    %2117 = vmatprep.subr.mxu0 0.0
    %2118 = vmatpush1.msra.mxu0 0.0
    %2119 = vmatprep.subr.mxu0 0.0
    %2120 = vmatpush1.msra.mxu0 0.0
    %2121 = vmatprep.subr.mxu0 0.0
    %2122 = vmatpush1.msra.mxu0 0.0
    %2123 = vmatprep.subr.mxu0 0.0
    %2124 = vmatpush1.msra.mxu0 0.0
    %2125 = vmatprep.subr.mxu0 0.0
    %2126 = vmatpush1.msra.mxu0 0.0
    %2127 = vmatprep.subr.mxu0 0.0
    %2128 = vmatpush1.msra.mxu0 0.0
    %2129 = vmatprep.subr.mxu0 0.0
    %2130 = vmatpush1.msra.mxu0 0.0
    %2131 = vmatprep.subr.mxu0 0.0
    %2132 = vmatpush1.msra.mxu0 0.0
    %2133 = vmatprep.subr.mxu0 0.0
    %2134 = vmatpush1.msra.mxu0 0.0
    %2135 = vmatprep.subr.mxu0 0.0
    %2136 = vmatpush1.msra.mxu0 0.0
    %2137 = vmatprep.subr.mxu0 0.0
    %2138 = vmatpush1.msra.mxu0 0.0
    %2139 = vmatprep.subr.mxu0 0.0
    %2140 = vmatpush1.msra.mxu0 0.0
    %2141 = vmatprep.subr.mxu0 0.0
    %2142 = vmatpush1.msra.mxu0 0.0
    %2143 = vmatprep.subr.mxu0 0.0
    %2144 = vmatpush1.msra.mxu0 0.0
    %2145 = vmatprep.subr.mxu0 0.0
    %2146 = vmatpush1.msra.mxu0 0.0
    %2147 = vmatprep.mubr.f32.mxu0 0.0
    %2148 = vmatmul.mubr.f32.gmra.mrb[0].mxu0 %v2078
    %v2149 = vpop.f32.mrb[0].mxu0
    %v2150 = vadd.f32 0.0, %v2149
    %v2151 = vpop.f32.mrb[0].mxu0
    %2152 = vmatprep.mubr.f32.mxu0 0.0
    %2153 = vmatmul.mubr.f32.gmra.mrb[0].mxu0 %v2081
    %v2154 = vpop.f32.mrb[0].mxu0
    %v2155 = vadd.f32 0.0, %v2154
    %v2156 = vpop.f32.mrb[0].mxu0
    %2157 = vdwg.mxu0
    %v2159 = vsel %vm211, %v1993, 0
    %v2162 = vsel %vm211, %v2069, 0
    %2164 = vmatprep.subr.mxu0 0.0
    %2165 = vmatpush1.msra.mxu0 %v2075
    %2166 = vmatprep.subr.mxu0 0.0
    %2167 = vmatpush1.msra.mxu0 %v2076
    %2168 = vmatprep.subr.mxu0 0.0
    %2169 = vmatpush1.msra.mxu0 0.0
    %2170 = vmatprep.subr.mxu0 0.0
    %2171 = vmatpush1.msra.mxu0 0.0
    %2172 = vmatprep.subr.mxu0 0.0
    %2173 = vmatpush1.msra.mxu0 0.0
    %2174 = vmatprep.subr.mxu0 0.0
    %2175 = vmatpush1.msra.mxu0 0.0
    %2176 = vmatprep.subr.mxu0 0.0
    %2177 = vmatpush1.msra.mxu0 0.0
    %2178 = vmatprep.subr.mxu0 0.0
    %2179 = vmatpush1.msra.mxu0 0.0
    %2180 = vmatprep.subr.mxu0 0.0
    %2181 = vmatpush1.msra.mxu0 0.0
    %2182 = vmatprep.subr.mxu0 0.0
    %2183 = vmatpush1.msra.mxu0 0.0
    %2184 = vmatprep.subr.mxu0 0.0
    %2185 = vmatpush1.msra.mxu0 0.0
    %2186 = vmatprep.subr.mxu0 0.0
    %2187 = vmatpush1.msra.mxu0 0.0
    %2188 = vmatprep.subr.mxu0 0.0
    %2189 = vmatpush1.msra.mxu0 0.0
    %2190 = vmatprep.subr.mxu0 0.0
    %2191 = vmatpush1.msra.mxu0 0.0
    %2192 = vmatprep.subr.mxu0 0.0
    %2193 = vmatpush1.msra.mxu0 0.0
    %2194 = vmatprep.subr.mxu0 0.0
    %2195 = vmatpush1.msra.mxu0 0.0
    %2196 = vmatprep.subr.mxu0 0.0
    %2197 = vmatpush1.msra.mxu0 0.0
    %2198 = vmatprep.subr.mxu0 0.0
    %2199 = vmatpush1.msra.mxu0 0.0
    %2200 = vmatprep.subr.mxu0 0.0
    %2201 = vmatpush1.msra.mxu0 0.0
    %2202 = vmatprep.subr.mxu0 0.0
    %2203 = vmatpush1.msra.mxu0 0.0
    %2204 = vmatprep.subr.mxu0 0.0
    %2205 = vmatpush1.msra.mxu0 0.0
    %2206 = vmatprep.subr.mxu0 0.0
    %2207 = vmatpush1.msra.mxu0 0.0
    %2208 = vmatprep.subr.mxu0 0.0
    %2209 = vmatpush1.msra.mxu0 0.0
    %2210 = vmatprep.subr.mxu0 0.0
    %2211 = vmatpush1.msra.mxu0 0.0
    %2212 = vmatprep.subr.mxu0 0.0
    %2213 = vmatpush1.msra.mxu0 0.0
    %2214 = vmatprep.subr.mxu0 0.0
    %2215 = vmatpush1.msra.mxu0 0.0
    %2216 = vmatprep.subr.mxu0 0.0
    %2217 = vmatpush1.msra.mxu0 0.0
    %2218 = vmatprep.subr.mxu0 0.0
    %2219 = vmatpush1.msra.mxu0 0.0
    %2220 = vmatprep.subr.mxu0 0.0
    %2221 = vmatpush1.msra.mxu0 0.0
    %2222 = vmatprep.subr.mxu0 0.0
    %2223 = vmatpush1.msra.mxu0 0.0
    %2224 = vmatprep.subr.mxu0 0.0
    %2225 = vmatpush1.msra.mxu0 0.0
    %2226 = vmatprep.subr.mxu0 0.0
    %2227 = vmatpush1.msra.mxu0 0.0
    %2228 = vmatprep.mubr.f32.mxu0 0.0
    %2229 = vmatmul.mubr.f32.gmra.mrb[0].mxu0 %v2159
    %v2230 = vpop.f32.mrb[0].mxu0
    %v2231 = vadd.f32 0.0, %v2230
    %v2232 = vpop.f32.mrb[0].mxu0
    %2233 = vmatprep.mubr.f32.mxu0 0.0
    %2234 = vmatmul.mubr.f32.gmra.mrb[0].mxu0 %v2162
    %v2235 = vpop.f32.mrb[0].mxu0
    %v2236 = vadd.f32 0.0, %v2235
    %v2237 = vpop.f32.mrb[0].mxu0
    %2238 = vdwg.mxu0
    %v2239 = vsel %vm39, %v2150, 0.0
    %v2240 = vsel %vm39, %v2231, 0.0
    %v2241 = vadd.f32 %v2239, %v2240
    %v2242 = vsel %vm39, %v2155, 0.0
    %v2243 = vsel %vm39, %v2236, 0.0
    %v2244 = vadd.f32 %v2242, %v2243
    %v2245 = vlaneseq
    %v2246 = vshrl.u32 %v2245, 7
    %v2247 = vsub.s32 1, %v2246
    %v2248 = vrot.slane %v1323, %v2247
    %v2249 = vadd.f32 %v2241, %v2248
    %v2250 = vadd.f32 %v2244, %v2248
    %v2251 = vadd.f32 %v2249, %v1320
    %v2252 = vadd.f32 %v2250, %v1321
    %v2253 = vsel %vm39, %v2251, 0.0
    %2254 = vadd.xlane.f32.xlu0 %v2253
    %v2255 = vpop.xlane.xlu0 %2254
    %v2256 = vsel %vm39, %v2252, 0.0
    %2257 = vadd.xlane.f32.xlu0 %v2256
    %v2258 = vpop.xlane.xlu0 %2257
    %v2259 = vmul.f32 %v2255, %v46
    %v2260 = vmul.f32 %v2258, %v46
    %v2261 = vsub.f32 %v2251, %v2259
    %v2262 = vsub.f32 %v2252, %v2260
    %v2263 = vmul.f32 %v2261, %v2261
    %v2264 = vmul.f32 %v2262, %v2262
    %v2265 = vsel %vm39, %v2263, 0.0
    %2266 = vadd.xlane.f32.xlu0 %v2265
    %v2267 = vpop.xlane.xlu0 %2266
    %v2268 = vsel %vm39, %v2264, 0.0
    %2269 = vadd.xlane.f32.xlu0 %v2268
    %v2270 = vpop.xlane.xlu0 %2269
    %v2271 = vmul.f32 %v2267, %v46
    %v2272 = vmul.f32 %v2270, %v46
    %v2273 = vadd.f32 %v2271, 1e-12
    %v2274 = vadd.f32 %v2272, 1e-12
    %v2275 = vrsqrt.pop %v2273
    %v2276 = vrsqrt.pop %v2274
    %v2277 = vmul.f32 %v2261, %v2275
    %v2278 = vmul.f32 %v2262, %v2276
    %v2279 = vlaneseq
    %v2280 = vshrl.u32 %v2279, 7
    %v2281 = vsub.s32 2, %v2280
    %v2282 = vrot.slane %v1323, %v2281
    %v2283 = vmul.f32 %v2277, %v2282
    %v2284 = vmul.f32 %v2278, %v2282
    %v2285 = vlaneseq
    %v2286 = vshrl.u32 %v2285, 7
    %v2287 = vsub.s32 3, %v2286
    %v2288 = vrot.slane %v1323, %v2287
    %v2289 = vadd.f32 %v2283, %v2288
    %v2290 = vadd.f32 %v2284, %v2288
    %s2291 = scalar_lea.vmem %s6, 32
    %v2292 = vld [vmem:[%s2291] sm:$0xff]
    %v2293 = vld [vmem:[%s2291 + $0x8] sm:$0xff]
    %v2294 = vld [vmem:[%s2291 + $0x10] sm:$0xff]
    %v2295 = vld [vmem:[%s2291 + $0x18] sm:$0xff]
    %v2296 = vlaneseq
    %v2297 = vshrl.u32 %v2296, 7
    %v2298 = vsub.s32 4, %v2297
    %v2299 = vrot.slane %v1323, %v2298
    %v2301 = vsel %vm39, %v2289, 0
    %v2304 = vsel %vm39, %v2290, 0
    %2306 = vmatprep.subr.mxu0 0.0
    %2307 = vmatpush1.msra.mxu0 %v2292
    %2308 = vmatprep.subr.mxu0 0.0
    %2309 = vmatpush1.msra.mxu0 %v2293
    %2310 = vmatprep.subr.mxu0 0.0
    %2311 = vmatpush1.msra.mxu0 %v2294
    %2312 = vmatprep.subr.mxu0 0.0
    %2313 = vmatpush1.msra.mxu0 %v2295
    %2314 = vmatprep.subr.mxu0 0.0
    %2315 = vmatpush1.msra.mxu0 0.0
    %2316 = vmatprep.subr.mxu0 0.0
    %2317 = vmatpush1.msra.mxu0 0.0
    %2318 = vmatprep.subr.mxu0 0.0
    %2319 = vmatpush1.msra.mxu0 0.0
    %2320 = vmatprep.subr.mxu0 0.0
    %2321 = vmatpush1.msra.mxu0 0.0
    %2322 = vmatprep.subr.mxu0 0.0
    %2323 = vmatpush1.msra.mxu0 0.0
    %2324 = vmatprep.subr.mxu0 0.0
    %2325 = vmatpush1.msra.mxu0 0.0
    %2326 = vmatprep.subr.mxu0 0.0
    %2327 = vmatpush1.msra.mxu0 0.0
    %2328 = vmatprep.subr.mxu0 0.0
    %2329 = vmatpush1.msra.mxu0 0.0
    %2330 = vmatprep.subr.mxu0 0.0
    %2331 = vmatpush1.msra.mxu0 0.0
    %2332 = vmatprep.subr.mxu0 0.0
    %2333 = vmatpush1.msra.mxu0 0.0
    %2334 = vmatprep.subr.mxu0 0.0
    %2335 = vmatpush1.msra.mxu0 0.0
    %2336 = vmatprep.subr.mxu0 0.0
    %2337 = vmatpush1.msra.mxu0 0.0
    %2338 = vmatprep.subr.mxu0 0.0
    %2339 = vmatpush1.msra.mxu0 0.0
    %2340 = vmatprep.subr.mxu0 0.0
    %2341 = vmatpush1.msra.mxu0 0.0
    %2342 = vmatprep.subr.mxu0 0.0
    %2343 = vmatpush1.msra.mxu0 0.0
    %2344 = vmatprep.subr.mxu0 0.0
    %2345 = vmatpush1.msra.mxu0 0.0
    %2346 = vmatprep.subr.mxu0 0.0
    %2347 = vmatpush1.msra.mxu0 0.0
    %2348 = vmatprep.subr.mxu0 0.0
    %2349 = vmatpush1.msra.mxu0 0.0
    %2350 = vmatprep.subr.mxu0 0.0
    %2351 = vmatpush1.msra.mxu0 0.0
    %2352 = vmatprep.subr.mxu0 0.0
    %2353 = vmatpush1.msra.mxu0 0.0
    %2354 = vmatprep.subr.mxu0 0.0
    %2355 = vmatpush1.msra.mxu0 0.0
    %2356 = vmatprep.subr.mxu0 0.0
    %2357 = vmatpush1.msra.mxu0 0.0
    %2358 = vmatprep.subr.mxu0 0.0
    %2359 = vmatpush1.msra.mxu0 0.0
    %2360 = vmatprep.subr.mxu0 0.0
    %2361 = vmatpush1.msra.mxu0 0.0
    %2362 = vmatprep.subr.mxu0 0.0
    %2363 = vmatpush1.msra.mxu0 0.0
    %2364 = vmatprep.subr.mxu0 0.0
    %2365 = vmatpush1.msra.mxu0 0.0
    %2366 = vmatprep.subr.mxu0 0.0
    %2367 = vmatpush1.msra.mxu0 0.0
    %2368 = vmatprep.subr.mxu0 0.0
    %2369 = vmatpush1.msra.mxu0 0.0
    %2370 = vmatprep.mubr.f32.mxu0 0.0
    %2371 = vmatmul.mubr.f32.gmra.mrb[0].mxu0 %v2301
    %v2372 = vpop.f32.mrb[0].mxu0
    %v2373 = vadd.f32 %v2299, %v2372
    %v2374 = vpop.f32.mrb[0].mxu0
    %2375 = vmatprep.mubr.f32.mxu0 0.0
    %2376 = vmatmul.mubr.f32.gmra.mrb[0].mxu0 %v2304
    %v2377 = vpop.f32.mrb[0].mxu0
    %v2378 = vadd.f32 %v2299, %v2377
    %v2379 = vpop.f32.mrb[0].mxu0
    %2380 = vdwg.mxu0
    %v2381 = vmul.f32 %v2373, %v2373
    %v2382 = vmul.f32 %v2378, %v2378
    %v2383 = vmul.f32 %v2373, %v2381
    %v2384 = vmul.f32 %v2378, %v2382
    %v2385 = vmul.f32 %v2383, 0.044715
    %v2386 = vmul.f32 %v2384, 0.044715
    %v2387 = vadd.f32 %v2373, %v2385
    %v2388 = vadd.f32 %v2378, %v2386
    %v2389 = vmul.f32 %v2387, 0.7978846
    %v2390 = vmul.f32 %v2388, 0.7978846
    %v2391 = vtanh.pop %v2389
    %v2392 = vtanh.pop %v2390
    %v2393 = vadd.f32 %v2391, 1.0
    %v2394 = vadd.f32 %v2392, 1.0
    %v2395 = vmul.f32 %v2393, 0.5
    %v2396 = vmul.f32 %v2394, 0.5
    %v2397 = vmul.f32 %v2373, %v2395
    %v2398 = vmul.f32 %v2378, %v2396
    %s2399 = scalar_lea.vmem %s7, 64
    %v2400 = vld [vmem:[%s2399] sm:$0xff]
    %v2401 = vld [vmem:[%s2399 + $0x8] sm:$0xff]
    %v2402 = vld [vmem:[%s2399 + $0x10] sm:$0xff]
    %v2403 = vld [vmem:[%s2399 + $0x18] sm:$0xff]
    %v2404 = vld [vmem:[%s2399 + $0x20] sm:$0xff]
    %v2405 = vld [vmem:[%s2399 + $0x28] sm:$0xff]
    %v2406 = vld [vmem:[%s2399 + $0x30] sm:$0xff]
    %v2407 = vld [vmem:[%s2399 + $0x38] sm:$0xff]
    %v2408 = vlaneseq
    %v2409 = vshrl.u32 %v2408, 7
    %v2410 = vsub.s32 5, %v2409
    %v2411 = vrot.slane %v1323, %v2410
    %v2413 = vsel %vm1200, %v2397, 0
    %v2416 = vsel %vm1200, %v2398, 0
    %2418 = vmatprep.subr.mxu0 0.0
    %2419 = vmatpush1.msra.mxu0 %v2400
    %2420 = vmatprep.subr.mxu0 0.0
    %2421 = vmatpush1.msra.mxu0 %v2401
    %2422 = vmatprep.subr.mxu0 0.0
    %2423 = vmatpush1.msra.mxu0 %v2402
    %2424 = vmatprep.subr.mxu0 0.0
    %2425 = vmatpush1.msra.mxu0 %v2403
    %2426 = vmatprep.subr.mxu0 0.0
    %2427 = vmatpush1.msra.mxu0 %v2404
    %2428 = vmatprep.subr.mxu0 0.0
    %2429 = vmatpush1.msra.mxu0 %v2405
    %2430 = vmatprep.subr.mxu0 0.0
    %2431 = vmatpush1.msra.mxu0 %v2406
    %2432 = vmatprep.subr.mxu0 0.0
    %2433 = vmatpush1.msra.mxu0 %v2407
    %2434 = vmatprep.subr.mxu0 0.0
    %2435 = vmatpush1.msra.mxu0 0.0
    %2436 = vmatprep.subr.mxu0 0.0
    %2437 = vmatpush1.msra.mxu0 0.0
    %2438 = vmatprep.subr.mxu0 0.0
    %2439 = vmatpush1.msra.mxu0 0.0
    %2440 = vmatprep.subr.mxu0 0.0
    %2441 = vmatpush1.msra.mxu0 0.0
    %2442 = vmatprep.subr.mxu0 0.0
    %2443 = vmatpush1.msra.mxu0 0.0
    %2444 = vmatprep.subr.mxu0 0.0
    %2445 = vmatpush1.msra.mxu0 0.0
    %2446 = vmatprep.subr.mxu0 0.0
    %2447 = vmatpush1.msra.mxu0 0.0
    %2448 = vmatprep.subr.mxu0 0.0
    %2449 = vmatpush1.msra.mxu0 0.0
    %2450 = vmatprep.subr.mxu0 0.0
    %2451 = vmatpush1.msra.mxu0 0.0
    %2452 = vmatprep.subr.mxu0 0.0
    %2453 = vmatpush1.msra.mxu0 0.0
    %2454 = vmatprep.subr.mxu0 0.0
    %2455 = vmatpush1.msra.mxu0 0.0
    %2456 = vmatprep.subr.mxu0 0.0
    %2457 = vmatpush1.msra.mxu0 0.0
    %2458 = vmatprep.subr.mxu0 0.0
    %2459 = vmatpush1.msra.mxu0 0.0
    %2460 = vmatprep.subr.mxu0 0.0
    %2461 = vmatpush1.msra.mxu0 0.0
    %2462 = vmatprep.subr.mxu0 0.0
    %2463 = vmatpush1.msra.mxu0 0.0
    %2464 = vmatprep.subr.mxu0 0.0
    %2465 = vmatpush1.msra.mxu0 0.0
    %2466 = vmatprep.subr.mxu0 0.0
    %2467 = vmatpush1.msra.mxu0 0.0
    %2468 = vmatprep.subr.mxu0 0.0
    %2469 = vmatpush1.msra.mxu0 0.0
    %2470 = vmatprep.subr.mxu0 0.0
    %2471 = vmatpush1.msra.mxu0 0.0
    %2472 = vmatprep.subr.mxu0 0.0
    %2473 = vmatpush1.msra.mxu0 0.0
    %2474 = vmatprep.subr.mxu0 0.0
    %2475 = vmatpush1.msra.mxu0 0.0
    %2476 = vmatprep.subr.mxu0 0.0
    %2477 = vmatpush1.msra.mxu0 0.0
    %2478 = vmatprep.subr.mxu0 0.0
    %2479 = vmatpush1.msra.mxu0 0.0
    %2480 = vmatprep.subr.mxu0 0.0
    %2481 = vmatpush1.msra.mxu0 0.0
    %2482 = vmatprep.mubr.f32.mxu0 0.0
    %2483 = vmatmul.mubr.f32.gmra.mrb[0].mxu0 %v2413
    %v2484 = vpop.f32.mrb[0].mxu0
    %v2485 = vadd.f32 %v2411, %v2484
    %v2486 = vpop.f32.mrb[0].mxu0
    %2487 = vmatprep.mubr.f32.mxu0 0.0
    %2488 = vmatmul.mubr.f32.gmra.mrb[0].mxu0 %v2416
    %v2489 = vpop.f32.mrb[0].mxu0
    %v2490 = vadd.f32 %v2411, %v2489
    %v2491 = vpop.f32.mrb[0].mxu0
    %2492 = vdwg.mxu0
    %v2493 = vadd.f32 %v2485, %v2289
    %v2494 = vadd.f32 %v2490, %v2290
    %v2495 = vsel %vm39, %v2493, 0.0
    %2496 = vadd.xlane.f32.xlu0 %v2495
    %v2497 = vpop.xlane.xlu0 %2496
    %v2498 = vsel %vm39, %v2494, 0.0
    %2499 = vadd.xlane.f32.xlu0 %v2498
    %v2500 = vpop.xlane.xlu0 %2499
    %v2501 = vmul.f32 %v2497, %v46
    %v2502 = vmul.f32 %v2500, %v46
    %v2503 = vsub.f32 %v2493, %v2501
    %v2504 = vsub.f32 %v2494, %v2502
    %v2505 = vmul.f32 %v2503, %v2503
    %v2506 = vmul.f32 %v2504, %v2504
    %v2507 = vsel %vm39, %v2505, 0.0
    %2508 = vadd.xlane.f32.xlu0 %v2507
    %v2509 = vpop.xlane.xlu0 %2508
    %v2510 = vsel %vm39, %v2506, 0.0
    %2511 = vadd.xlane.f32.xlu0 %v2510
    %v2512 = vpop.xlane.xlu0 %2511
    %v2513 = vmul.f32 %v2509, %v46
    %v2514 = vmul.f32 %v2512, %v46
    %v2515 = vadd.f32 %v2513, 1e-12
    %v2516 = vadd.f32 %v2514, 1e-12
    %v2517 = vrsqrt.pop %v2515
    %v2518 = vrsqrt.pop %v2516
    %v2519 = vmul.f32 %v2503, %v2517
    %v2520 = vmul.f32 %v2504, %v2518
    %v2521 = vlaneseq
    %v2522 = vshrl.u32 %v2521, 7
    %v2523 = vsub.s32 6, %v2522
    %v2524 = vrot.slane %v1323, %v2523
    %v2525 = vmul.f32 %v2519, %v2524
    %v2526 = vmul.f32 %v2520, %v2524
    %v2527 = vlaneseq
    %v2528 = vshrl.u32 %v2527, 7
    %v2529 = vsub.s32 7, %v2528
    %v2530 = vrot.slane %v1323, %v2529
    %v2531 = vadd.f32 %v2525, %v2530
    %v2532 = vadd.f32 %v2526, %v2530
    %v2533 = vld [vmem:[%s8] sm:$0xff]
    %v2534 = vld [vmem:[%s8 + $0x8] sm:$0xff]
    %v2535 = vld [vmem:[%s8 + $0x10] sm:$0xff]
    %v2536 = vld [vmem:[%s8 + $0x18] sm:$0xff]
    %v2537 = vlaneseq
    %v2538 = vshrl.u32 %v2537, 7
    %v2539 = vsub.s32 2, %v2538
    %v2540 = vrot.slane %v36, %v2539
    %v2543 = vrot.slane %v2532, 7
    %vm2544 = vcmask 1041409
    %v2545 = vsel %vm2544, %v2543, %v2531
    %v2546 = vsel %vm39, %v2545, 0
    %2548 = vmatprep.subr.mxu0 0.0
    %2549 = vmatpush1.msra.mxu0 %v2533
    %2550 = vmatprep.subr.mxu0 0.0
    %2551 = vmatpush1.msra.mxu0 %v2534
    %2552 = vmatprep.subr.mxu0 0.0
    %2553 = vmatpush1.msra.mxu0 %v2535
    %2554 = vmatprep.subr.mxu0 0.0
    %2555 = vmatpush1.msra.mxu0 %v2536
    %2556 = vmatprep.subr.mxu0 0.0
    %2557 = vmatpush1.msra.mxu0 0.0
    %2558 = vmatprep.subr.mxu0 0.0
    %2559 = vmatpush1.msra.mxu0 0.0
    %2560 = vmatprep.subr.mxu0 0.0
    %2561 = vmatpush1.msra.mxu0 0.0
    %2562 = vmatprep.subr.mxu0 0.0
    %2563 = vmatpush1.msra.mxu0 0.0
    %2564 = vmatprep.subr.mxu0 0.0
    %2565 = vmatpush1.msra.mxu0 0.0
    %2566 = vmatprep.subr.mxu0 0.0
    %2567 = vmatpush1.msra.mxu0 0.0
    %2568 = vmatprep.subr.mxu0 0.0
    %2569 = vmatpush1.msra.mxu0 0.0
    %2570 = vmatprep.subr.mxu0 0.0
    %2571 = vmatpush1.msra.mxu0 0.0
    %2572 = vmatprep.subr.mxu0 0.0
    %2573 = vmatpush1.msra.mxu0 0.0
    %2574 = vmatprep.subr.mxu0 0.0
    %2575 = vmatpush1.msra.mxu0 0.0
    %2576 = vmatprep.subr.mxu0 0.0
    %2577 = vmatpush1.msra.mxu0 0.0
    %2578 = vmatprep.subr.mxu0 0.0
    %2579 = vmatpush1.msra.mxu0 0.0
    %2580 = vmatprep.subr.mxu0 0.0
    %2581 = vmatpush1.msra.mxu0 0.0
    %2582 = vmatprep.subr.mxu0 0.0
    %2583 = vmatpush1.msra.mxu0 0.0
    %2584 = vmatprep.subr.mxu0 0.0
    %2585 = vmatpush1.msra.mxu0 0.0
    %2586 = vmatprep.subr.mxu0 0.0
    %2587 = vmatpush1.msra.mxu0 0.0
    %2588 = vmatprep.subr.mxu0 0.0
    %2589 = vmatpush1.msra.mxu0 0.0
    %2590 = vmatprep.subr.mxu0 0.0
    %2591 = vmatpush1.msra.mxu0 0.0
    %2592 = vmatprep.subr.mxu0 0.0
    %2593 = vmatpush1.msra.mxu0 0.0
    %2594 = vmatprep.subr.mxu0 0.0
    %2595 = vmatpush1.msra.mxu0 0.0
    %2596 = vmatprep.subr.mxu0 0.0
    %2597 = vmatpush1.msra.mxu0 0.0
    %2598 = vmatprep.subr.mxu0 0.0
    %2599 = vmatpush1.msra.mxu0 0.0
    %2600 = vmatprep.subr.mxu0 0.0
    %2601 = vmatpush1.msra.mxu0 0.0
    %2602 = vmatprep.subr.mxu0 0.0
    %2603 = vmatpush1.msra.mxu0 0.0
    %2604 = vmatprep.subr.mxu0 0.0
    %2605 = vmatpush1.msra.mxu0 0.0
    %2606 = vmatprep.subr.mxu0 0.0
    %2607 = vmatpush1.msra.mxu0 0.0
    %2608 = vmatprep.subr.mxu0 0.0
    %2609 = vmatpush1.msra.mxu0 0.0
    %2610 = vmatprep.subr.mxu0 0.0
    %2611 = vmatpush1.msra.mxu0 0.0
    %2612 = vmatprep.mubr.f32.mxu0 0.0
    %2613 = vmatmul.mubr.f32.gmra.mrb[0].mxu0 %v2546
    %v2614 = vpop.f32.mrb[0].mxu0
    %v2615 = vadd.f32 %v2540, %v2614
    %v2616 = vpop.f32.mrb[0].mxu0
    %2617 = vdwg.mxu0
    %v2618 = vtanh.pop %v2615
    %v2619 = vld [vmem:[%s9] sm:$0xff]
    %v2620 = vld [vmem:[%s9 + $0x8] sm:$0xff]
    %v2621 = vld [vmem:[%s9 + $0x10] sm:$0xff]
    %v2622 = vld [vmem:[%s9 + $0x18] sm:$0xff]
    %v2623 = vlaneseq
    %v2624 = vshrl.u32 %v2623, 7
    %v2625 = vsub.s32 3, %v2624
    %v2626 = vrot.slane %v36, %v2625
    %v2628 = vsel %vm39, %v2618, 0
    %2630 = vmatprep.subr.mxu0 0.0
    %2631 = vmatpush1.msra.mxu0 %v2619
    %2632 = vmatprep.subr.mxu0 0.0
    %2633 = vmatpush1.msra.mxu0 %v2620
    %2634 = vmatprep.subr.mxu0 0.0
    %2635 = vmatpush1.msra.mxu0 %v2621
    %2636 = vmatprep.subr.mxu0 0.0
    %2637 = vmatpush1.msra.mxu0 %v2622
    %2638 = vmatprep.subr.mxu0 0.0
    %2639 = vmatpush1.msra.mxu0 0.0
    %2640 = vmatprep.subr.mxu0 0.0
    %2641 = vmatpush1.msra.mxu0 0.0
    %2642 = vmatprep.subr.mxu0 0.0
    %2643 = vmatpush1.msra.mxu0 0.0
    %2644 = vmatprep.subr.mxu0 0.0
    %2645 = vmatpush1.msra.mxu0 0.0
    %2646 = vmatprep.subr.mxu0 0.0
    %2647 = vmatpush1.msra.mxu0 0.0
    %2648 = vmatprep.subr.mxu0 0.0
    %2649 = vmatpush1.msra.mxu0 0.0
    %2650 = vmatprep.subr.mxu0 0.0
    %2651 = vmatpush1.msra.mxu0 0.0
    %2652 = vmatprep.subr.mxu0 0.0
    %2653 = vmatpush1.msra.mxu0 0.0
    %2654 = vmatprep.subr.mxu0 0.0
    %2655 = vmatpush1.msra.mxu0 0.0
    %2656 = vmatprep.subr.mxu0 0.0
    %2657 = vmatpush1.msra.mxu0 0.0
    %2658 = vmatprep.subr.mxu0 0.0
    %2659 = vmatpush1.msra.mxu0 0.0
    %2660 = vmatprep.subr.mxu0 0.0
    %2661 = vmatpush1.msra.mxu0 0.0
    %2662 = vmatprep.subr.mxu0 0.0
    %2663 = vmatpush1.msra.mxu0 0.0
    %2664 = vmatprep.subr.mxu0 0.0
    %2665 = vmatpush1.msra.mxu0 0.0
    %2666 = vmatprep.subr.mxu0 0.0
    %2667 = vmatpush1.msra.mxu0 0.0
    %2668 = vmatprep.subr.mxu0 0.0
    %2669 = vmatpush1.msra.mxu0 0.0
    %2670 = vmatprep.subr.mxu0 0.0
    %2671 = vmatpush1.msra.mxu0 0.0
    %2672 = vmatprep.subr.mxu0 0.0
    %2673 = vmatpush1.msra.mxu0 0.0
    %2674 = vmatprep.subr.mxu0 0.0
    %2675 = vmatpush1.msra.mxu0 0.0
    %2676 = vmatprep.subr.mxu0 0.0
    %2677 = vmatpush1.msra.mxu0 0.0
    %2678 = vmatprep.subr.mxu0 0.0
    %2679 = vmatpush1.msra.mxu0 0.0
    %2680 = vmatprep.subr.mxu0 0.0
    %2681 = vmatpush1.msra.mxu0 0.0
    %2682 = vmatprep.subr.mxu0 0.0
    %2683 = vmatpush1.msra.mxu0 0.0
    %2684 = vmatprep.subr.mxu0 0.0
    %2685 = vmatpush1.msra.mxu0 0.0
    %2686 = vmatprep.subr.mxu0 0.0
    %2687 = vmatpush1.msra.mxu0 0.0
    %2688 = vmatprep.subr.mxu0 0.0
    %2689 = vmatpush1.msra.mxu0 0.0
    %2690 = vmatprep.subr.mxu0 0.0
    %2691 = vmatpush1.msra.mxu0 0.0
    %2692 = vmatprep.subr.mxu0 0.0
    %2693 = vmatpush1.msra.mxu0 0.0
    %2694 = vmatprep.mubr.f32.mxu0 0.0
    %2695 = vmatmul.mubr.f32.gmra.mrb[0].mxu0 %v2628
    %v2696 = vpop.f32.mrb[0].mxu0
    %v2697 = vadd.f32 %v2626, %v2696
    %v2698 = vpop.f32.mrb[0].mxu0
    %2699 = vdwg.mxu0
    %2700 = vst [vmem:[#allocation2] sm:$0x3] %v2697
    // Predicated region
    $region42: #{model_forward.1} parent=1 // pred_check
      _
    $region43: #{model_forward.1} parent=1 // pred_check_branch
      %2702 = sbr.rel (0) target = $region45
    $region44: #{model_forward.1} parent=1 // pred_region
      %s2704 = ssub.s32 32, 32
      %2705 = vsyncadd [#allocation3], %s2704
      %s2707 = sshll.u32 [#allocation2], 4
      %s2708 = int_to_ptr.vmem [resolvable:$true] %s2707
      %2710 = dma.vmem_to_hbm [thread:$0]  %s2708, 32, %s10, [#allocation3]
    $region45: #{model_forward.1} parent=1 // pred_fallthru
      _
    // Predicated region
    $region46: #{model_forward.1} parent=1 // pred_check
      _
    $region47: #{model_forward.1} parent=1 // pred_check_branch
      %2712 = sbr.rel (0) target = $region49
    $region48: #{model_forward.1} parent=1 // pred_region
      %2713 = dma.done [#allocation3], 32
    $region49: #{model_forward.1} parent=1 // pred_fallthru
      _
    %2714 = vsyncpa [#allocation3], 1

</llo_original>
